<compile_context>
chip_gen: v7x
topology: tpu7x:2x2x1
jax: 0.10.0
libtpu: 0.0.40
codegen_flags: <defaults>
</compile_context>

<pallas_src>
import functools

import jax
import jax.numpy as jnp
from jax.experimental import pallas as pl
from jax.experimental.pallas import tpu as pltpu


def _round_up(a, m):
    return (a + m - 1) // m * m


def _pad2(a, rows, cols):
    return jnp.pad(a, ((0, rows - a.shape[0]), (0, cols - a.shape[1])))


def _default_vmem_limit():
    # ~80% of physical VMEM: ~102 MiB on v5e/v6e (128 MiB), ~51 MiB on v7x (64 MiB).
    try:
        cap = pltpu.get_tpu_info().vmem_capacity_bytes
    except Exception:
        cap = 64 * 1024 * 1024
    return int(cap * 0.8)


def _default_batch_tile():
    # v6e: 2x256x256 MXU + 128 MiB VMEM -> TB=256 fills MXU rows and halves grid
    # steps. v5e / v7x: TB=128 (v7x has only 64 MiB per TC; its 2 TCs shard the
    # parallel batch axis, so smaller tiles also keep both cores fed).
    try:
        kind = jax.devices()[0].device_kind.lower()
    except Exception:
        return 128
    return 256 if "v6" in kind else 128


# ----------------------------------------------------------------------------
# Pallas kernel: one batch tile (TB rows) of the full ScDCC forward.
# ----------------------------------------------------------------------------
def scdcc_forward_kernel(
    x_ref, noise_ref,
    we1_ref, be1_ref, we2_ref, be2_ref,            # encoder: Linear+ReLU x2
    wmu_ref, bmu_ref,                              # _enc_mu (padded to ZPAD cols)
    wd1_ref, bd1_ref, wd2_ref, bd2_ref,            # decoder: Linear+ReLU x2
    wheads_ref, bheads_ref,                        # fused [mean|disp|pi] head
    mut_ref, musq_ref,                             # mu^T (ZPAD,KPAD), ||mu||^2 (1,KPAD)
    z0_ref, q_ref, mean_ref, disp_ref, pi_ref,     # outputs
    *, sigma, alpha, tb, dpad,
):
    def linear(inp, w_ref, b_ref):
        # MXU matmul (operands in the weight dtype: bf16 or f32) with f32
        # accumulation, plus a broadcast (1, out) f32 bias.
        w = w_ref[...]
        return jnp.dot(inp.astype(w.dtype), w,
                       preferred_element_type=jnp.float32) + b_ref[...]

    x = x_ref[...]
    xn = x + noise_ref[...] * sigma

    # ---- fused encoder: layer 1 as two (TB, D) matmuls (no (2TB, D) concat
    # copy); concatenate at the narrow (2TB, H1) level instead. Rows [0:tb]
    # carry the noisy path, rows [tb:2tb] the clean path. ----
    h1n = jnp.maximum(linear(xn, we1_ref, be1_ref), 0.0)
    h1c = jnp.maximum(linear(x, we1_ref, be1_ref), 0.0)
    h = jnp.concatenate([h1n, h1c], axis=0)                           # (2*TB, H1P)
    h = jnp.maximum(linear(h, we2_ref, be2_ref), 0.0)
    z_all = linear(h, wmu_ref, bmu_ref)                               # (2*TB, ZPAD)
    z = z_all[:tb]          # noisy latent -> decoder
    z0 = z_all[tb:]         # clean latent -> q (padded cols are exactly zero)

    # ---- decoder (noisy latent) ----
    hd = jnp.maximum(linear(z, wd1_ref, bd1_ref), 0.0)
    hd = jnp.maximum(linear(hd, wd2_ref, bd2_ref), 0.0)

    # ---- fused ZINB heads: one (TB, 3*DPAD) matmul, lane-aligned slices ----
    heads = linear(hd, wheads_ref, bheads_ref)                        # (TB, 3*DPAD)
    # MeanAct: clamp(exp(x), 1e-5, 1e6)
    mean_ref[...] = jnp.clip(jnp.exp(heads[:, :dpad]), 1e-5, 1e6)
    # DispAct: clamp(softplus(x), 1e-4, 1e4)   <-- the DispAct module
    disp_ref[...] = jnp.clip(jax.nn.softplus(heads[:, dpad:2 * dpad]), 1e-4, 1e4)
    # Sigmoid
    pi_ref[...] = jax.nn.sigmoid(heads[:, 2 * dpad:])

    # ---- clean latent output + soft assignment q (Student's t kernel), f32 ----
    z0_ref[...] = z0
    z_sq = jnp.sum(z0 * z0, axis=1, keepdims=True)                    # (TB, 1)
    cross = jnp.dot(z0, mut_ref[...], preferred_element_type=jnp.float32)  # (TB, KPAD)
    # Padded cluster columns of musq hold 1e30, so their q underflows to ~0 —
    # no iota/where lane mask needed before the row normalization.
    dist = jnp.maximum(z_sq + musq_ref[...] - 2.0 * cross, 0.0)       # clamp round-off
    q = pl.reciprocal(1.0 + dist * (1.0 / alpha), approx=True)
    if alpha != 1.0:                  # static: exponent is exactly 1 when alpha == 1
        q = q ** ((alpha + 1.0) / 2.0)
    q_ref[...] = q * pl.reciprocal(jnp.sum(q, axis=1, keepdims=True), approx=True)


# ----------------------------------------------------------------------------
# Wrapper: pads / packs parameters, builds the batch grid, calls the kernel.
# ----------------------------------------------------------------------------
def scdcc_forward(x, noise, params, mu, *, sigma=1.0, alpha=1.0,
                  batch_tile=None, use_bf16=True, vmem_limit_bytes=None):
    B, D = x.shape
    H1 = params["w_e1"].shape[1]
    H2 = params["w_e2"].shape[1]
    Z = params["w_mu"].shape[1]
    HD1 = params["w_d1"].shape[1]
    HD2 = params["w_d2"].shape[1]
    K = mu.shape[0]

    DPAD = _round_up(D, 128)
    H1P = _round_up(H1, 128)
    H2P = _round_up(H2, 128)
    ZPAD = _round_up(Z, 128)
    HD1P = _round_up(HD1, 128)
    HD2P = _round_up(HD2, 128)
    KPAD = _round_up(K, 128)

    if batch_tile is None:
        batch_tile = _default_batch_tile()
    TB = batch_tile if B >= batch_tile else _round_up(B, 8)
    Bp = _round_up(B, TB)
    grid = (Bp // TB,)

    # Batch + lane padding of the two streamed inputs (zeros are exact through
    # the zero-padded weight rows / ReLU).
    x_p = jnp.pad(x, ((0, Bp - B), (0, DPAD - D)))
    noise_p = jnp.pad(noise, ((0, Bp - B), (0, DPAD - D)))

    # Matmul operand dtype (bf16 on the MXU per the perf review); activations,
    # biases, and the z0 -> q path stay f32.
    wdt = jnp.bfloat16 if use_bf16 else jnp.float32

    we1 = _pad2(params["w_e1"], DPAD, H1P).astype(wdt)
    be1 = _pad2(params["b_e1"], 1, H1P)
    we2 = _pad2(params["w_e2"], H1P, H2P).astype(wdt)
    be2 = _pad2(params["b_e2"], 1, H2P)
    wmu = _pad2(params["w_mu"], H2P, ZPAD).astype(wdt)
    bmu = _pad2(params["b_mu"], 1, ZPAD)
    wd1 = _pad2(params["w_d1"], ZPAD, HD1P).astype(wdt)
    bd1 = _pad2(params["b_d1"], 1, HD1P)
    wd2 = _pad2(params["w_d2"], HD1P, HD2P).astype(wdt)
    bd2 = _pad2(params["b_d2"], 1, HD2P)

    # Fused ZINB heads, lane-aligned layout: [mean | pad | disp | pad | pi | pad].
    wheads = jnp.concatenate(
        [_pad2(params["w_mean"], HD2P, DPAD),
         _pad2(params["w_disp"], HD2P, DPAD),
         _pad2(params["w_pi"], HD2P, DPAD)], axis=1).astype(wdt)
    bheads = jnp.concatenate(
        [_pad2(params["b_mean"], 1, DPAD),
         _pad2(params["b_disp"], 1, DPAD),
         _pad2(params["b_pi"], 1, DPAD)], axis=1)

    # Pre-transposed, lane-padded cluster centers (f32) + squared norms; padded
    # cluster columns get a huge squared norm so their q underflows to ~0.
    mu_t = _pad2(mu.T, ZPAD, KPAD).astype(jnp.float32)
    mu_sq = jnp.pad(jnp.sum(mu * mu, axis=1, keepdims=True).T.astype(jnp.float32),
                    ((0, 0), (0, KPAD - K)), constant_values=1e30)

    inputs = (
        x_p, noise_p,
        we1, be1, we2, be2,
        wmu, bmu,
        wd1, bd1, wd2, bd2,
        wheads, bheads,
        mu_t, mu_sq,
    )

    if vmem_limit_bytes is None:
        vmem_limit_bytes = _default_vmem_limit()

    # Advisory cost estimate for XLA's scheduler.
    flops = 2 * Bp * (2 * (DPAD * H1P + H1P * H2P + H2P * ZPAD)
                      + ZPAD * HD1P + HD1P * HD2P + HD2P * 3 * DPAD
                      + ZPAD * KPAD)
    transc = Bp * (3 * DPAD + 2 * KPAD)
    bytes_acc = (sum(int(a.size) * a.dtype.itemsize for a in inputs)
                 + 4 * Bp * (ZPAD + KPAD + 3 * DPAD))
    cost = pl.CostEstimate(flops=int(flops), transcendentals=int(transc),
                           bytes_accessed=int(bytes_acc))

    out_shape = (
        jax.ShapeDtypeStruct((Bp, ZPAD), jnp.float32),   # z0 (lane-padded)
        jax.ShapeDtypeStruct((Bp, KPAD), jnp.float32),   # q  (lane-padded)
        jax.ShapeDtypeStruct((Bp, DPAD), jnp.float32),   # _mean
        jax.ShapeDtypeStruct((Bp, DPAD), jnp.float32),   # _disp
        jax.ShapeDtypeStruct((Bp, DPAD), jnp.float32),   # _pi
    )

    kernel = functools.partial(
        scdcc_forward_kernel, sigma=sigma, alpha=alpha, tb=TB, dpad=DPAD)

    def build(single_buffer_weights):
        def batch_spec(width):
            return pl.BlockSpec((TB, width), lambda i: (i, 0))

        def resident(a):
            # Constant block index across the grid -> single-buffer to halve the
            # resident-weight VMEM footprint (important on v7x's 64 MiB per TC).
            if single_buffer_weights:
                return pl.BlockSpec(a.shape, lambda i: (0, 0),
                                    pipeline_mode=pl.Buffered(1))
            return pl.BlockSpec(a.shape, lambda i: (0, 0))

        in_specs = ([batch_spec(DPAD), batch_spec(DPAD)]
                    + [resident(a) for a in inputs[2:]])
        out_specs = (
            pl.BlockSpec((TB, ZPAD), lambda i: (i, 0)),
            pl.BlockSpec((TB, KPAD), lambda i: (i, 0)),
            batch_spec(DPAD), batch_spec(DPAD), batch_spec(DPAD),
        )
        return pl.pallas_call(
            kernel,
            out_shape=out_shape,
            grid=grid,
            in_specs=in_specs,
            out_specs=out_specs,
            compiler_params=pltpu.CompilerParams(
                dimension_semantics=("parallel",),
                vmem_limit_bytes=int(vmem_limit_bytes)),
            cost_estimate=cost,
        )

    try:
        z0_p, q_p, mean_p, disp_p, pi_p = build(True)(*inputs)
    except Exception:
        # Fallback for JAX versions where pipeline_mode=pl.Buffered(1) is not
        # supported on top-level pallas_call BlockSpecs.
        z0_p, q_p, mean_p, disp_p, pi_p = build(False)(*inputs)

    # Strip batch / lane padding.
    return (z0_p[:B, :Z], q_p[:B, :K],
            mean_p[:B, :D], disp_p[:B, :D], pi_p[:B, :D])


# ----------------------------------------------------------------------------
# Pure-JAX reference (mirrors the PyTorch forward) for a correctness check.
# ----------------------------------------------------------------------------
def scdcc_forward_ref(x, noise, p, mu, *, sigma=1.0, alpha=1.0):
    def lin(a, w, b):
        return a @ w + b

    xn = x + noise * sigma
    h = jax.nn.relu(lin(xn, p["w_e1"], p["b_e1"]))
    h = jax.nn.relu(lin(h, p["w_e2"], p["b_e2"]))
    z = lin(h, p["w_mu"], p["b_mu"])
    h = jax.nn.relu(lin(z, p["w_d1"], p["b_d1"]))
    h = jax.nn.relu(lin(h, p["w_d2"], p["b_d2"]))
    mean = jnp.clip(jnp.exp(lin(h, p["w_mean"], p["b_mean"])), 1e-5, 1e6)
    disp = jnp.clip(jax.nn.softplus(lin(h, p["w_disp"], p["b_disp"])), 1e-4, 1e4)
    pi = jax.nn.sigmoid(lin(h, p["w_pi"], p["b_pi"]))

    h0 = jax.nn.relu(lin(x, p["w_e1"], p["b_e1"]))
    h0 = jax.nn.relu(lin(h0, p["w_e2"], p["b_e2"]))
    z0 = lin(h0, p["w_mu"], p["b_mu"])

    dist = jnp.sum((z0[:, None, :] - mu[None, :, :]) ** 2, axis=2)
    q = 1.0 / (1.0 + dist / alpha)
    q = q ** ((alpha + 1.0) / 2.0)
    q = q / jnp.sum(q, axis=1, keepdims=True)
    return z0, q, mean, disp, pi


def _init_linear(key, fan_in, fan_out):
    # Deterministic synthetic init (PyTorch-style uniform bound 1/sqrt(fan_in));
    # weight returned pre-transposed as (in, out).
    kw, kb = jax.random.split(key)
    bound = 1.0 / (fan_in ** 0.5)
    w = jax.random.uniform(kw, (fan_in, fan_out), jnp.float32, -bound, bound)
    b = jax.random.uniform(kb, (1, fan_out), jnp.float32, -bound, bound)
    return w, b


if __name__ == "__main__":
    # Small, module-consistent shapes.
    batch = 8
    input_dim = 32
    encode_layers = [64, 32]
    z_dim = 16
    decode_layers = [32, 64]
    n_clusters = 4
    sigma = 1.0
    alpha = 1.0

    key = jax.random.PRNGKey(0)
    keys = jax.random.split(key, 16)

    params = {}
    params["w_e1"], params["b_e1"] = _init_linear(keys[0], input_dim, encode_layers[0])
    params["w_e2"], params["b_e2"] = _init_linear(keys[1], encode_layers[0], encode_layers[1])
    params["w_mu"], params["b_mu"] = _init_linear(keys[2], encode_layers[1], z_dim)
    params["w_d1"], params["b_d1"] = _init_linear(keys[3], z_dim, decode_layers[0])
    params["w_d2"], params["b_d2"] = _init_linear(keys[4], decode_layers[0], decode_layers[1])
    params["w_mean"], params["b_mean"] = _init_linear(keys[5], decode_layers[1], input_dim)
    params["w_disp"], params["b_disp"] = _init_linear(keys[6], decode_layers[1], input_dim)
    params["w_pi"], params["b_pi"] = _init_linear(keys[7], decode_layers[1], input_dim)
    mu = jax.random.normal(keys[8], (n_clusters, z_dim), jnp.float32)

    x = jax.random.normal(keys[9], (batch, input_dim), jnp.float32)
    # torch.randn_like(x) * sigma -> deterministic Gaussian noise generated here
    # and kept as an explicit input so the check vs the reference is exact.
    # TODO(synk): optionally generate noise in-kernel with pltpu.prng_* once the
    # kernel is demonstrably HBM-bound; that changes the random stream vs the ref.
    noise = jax.random.normal(keys[10], (batch, input_dim), jnp.float32)

    refs = scdcc_forward_ref(x, noise, params, mu, sigma=sigma, alpha=alpha)

    # f32-MXU path: tight check (q slightly looser due to approx reciprocals).
    outs = jax.block_until_ready(
        scdcc_forward(x, noise, params, mu, sigma=sigma, alpha=alpha, use_bf16=False))
    tols = [(1e-4, 1e-4), (2e-2, 2e-3), (1e-4, 1e-4), (1e-4, 1e-4), (1e-4, 1e-4)]
    for o, r, (rt, at) in zip(outs, refs, tols):
        assert o.shape == r.shape and o.dtype == r.dtype
        assert jnp.allclose(o, r, rtol=rt, atol=at), "f32 mismatch vs reference"

    # bf16-MXU path (the perf-recommended mode): loose check vs the f32 reference.
    outs_bf16 = jax.block_until_ready(
        scdcc_forward(x, noise, params, mu, sigma=sigma, alpha=alpha, use_bf16=True))
    for o, r in zip(outs_bf16, refs):
        assert o.shape == r.shape
        assert jnp.allclose(o, r, rtol=1e-1, atol=5e-2), "bf16 mismatch vs reference"

    print("KERNEL_OK")
</pallas_src>

<mosaic_0001>
module attributes {stable_mosaic.version = 11 : i64} {
  func.func @scdcc_forward_kernel(%arg0: i32, %arg1: memref<8x128xf32, #tpu.memory_space<vmem>>, %arg2: memref<8x128xf32, #tpu.memory_space<vmem>>, %arg3: memref<128x128xf32, #tpu.memory_space<vmem>>, %arg4: memref<1x128xf32, #tpu.memory_space<vmem>>, %arg5: memref<128x128xf32, #tpu.memory_space<vmem>>, %arg6: memref<1x128xf32, #tpu.memory_space<vmem>>, %arg7: memref<128x128xf32, #tpu.memory_space<vmem>>, %arg8: memref<1x128xf32, #tpu.memory_space<vmem>>, %arg9: memref<128x128xf32, #tpu.memory_space<vmem>>, %arg10: memref<1x128xf32, #tpu.memory_space<vmem>>, %arg11: memref<128x128xf32, #tpu.memory_space<vmem>>, %arg12: memref<1x128xf32, #tpu.memory_space<vmem>>, %arg13: memref<128x384xf32, #tpu.memory_space<vmem>>, %arg14: memref<1x384xf32, #tpu.memory_space<vmem>>, %arg15: memref<128x128xf32, #tpu.memory_space<vmem>>, %arg16: memref<1x128xf32, #tpu.memory_space<vmem>>, %arg17: memref<8x128xf32, #tpu.memory_space<vmem>>, %arg18: memref<8x128xf32, #tpu.memory_space<vmem>>, %arg19: memref<8x128xf32, #tpu.memory_space<vmem>>, %arg20: memref<8x128xf32, #tpu.memory_space<vmem>>, %arg21: memref<8x128xf32, #tpu.memory_space<vmem>>) attributes {dimension_semantics = [#tpu.dimension_semantics<parallel>], iteration_bounds = array<i64: 1>, scalar_prefetch = 0 : i64, scratch_operands = 0 : i64, tpu.core_type = #tpu.core_type<tc>, window_params = [{transform_indices = @transform_0, window_bounds = array<i64: 8, 128>}, {transform_indices = @transform_1, window_bounds = array<i64: 8, 128>}, {pipeline_mode = #tpu.pipeline_mode<synchronous>, transform_indices = @transform_2, window_bounds = array<i64: 128, 128>}, {pipeline_mode = #tpu.pipeline_mode<synchronous>, transform_indices = @transform_3, window_bounds = array<i64: 1, 128>}, {pipeline_mode = #tpu.pipeline_mode<synchronous>, transform_indices = @transform_4, window_bounds = array<i64: 128, 128>}, {pipeline_mode = #tpu.pipeline_mode<synchronous>, transform_indices = @transform_5, window_bounds = array<i64: 1, 128>}, {pipeline_mode = #tpu.pipeline_mode<synchronous>, transform_indices = @transform_6, window_bounds = array<i64: 128, 128>}, {pipeline_mode = #tpu.pipeline_mode<synchronous>, transform_indices = @transform_7, window_bounds = array<i64: 1, 128>}, {pipeline_mode = #tpu.pipeline_mode<synchronous>, transform_indices = @transform_8, window_bounds = array<i64: 128, 128>}, {pipeline_mode = #tpu.pipeline_mode<synchronous>, transform_indices = @transform_9, window_bounds = array<i64: 1, 128>}, {pipeline_mode = #tpu.pipeline_mode<synchronous>, transform_indices = @transform_10, window_bounds = array<i64: 128, 128>}, {pipeline_mode = #tpu.pipeline_mode<synchronous>, transform_indices = @transform_11, window_bounds = array<i64: 1, 128>}, {pipeline_mode = #tpu.pipeline_mode<synchronous>, transform_indices = @transform_12, window_bounds = array<i64: 128, 384>}, {pipeline_mode = #tpu.pipeline_mode<synchronous>, transform_indices = @transform_13, window_bounds = array<i64: 1, 384>}, {pipeline_mode = #tpu.pipeline_mode<synchronous>, transform_indices = @transform_14, window_bounds = array<i64: 128, 128>}, {pipeline_mode = #tpu.pipeline_mode<synchronous>, transform_indices = @transform_15, window_bounds = array<i64: 1, 128>}, {transform_indices = @transform_16, window_bounds = array<i64: 8, 128>}, {transform_indices = @transform_17, window_bounds = array<i64: 8, 128>}, {transform_indices = @transform_18, window_bounds = array<i64: 8, 128>}, {transform_indices = @transform_19, window_bounds = array<i64: 8, 128>}, {transform_indices = @transform_20, window_bounds = array<i64: 8, 128>}]} {
    %c0 = arith.constant 0 : index
    %c0_0 = arith.constant 0 : index
    %0 = vector.load %arg1[%c0, %c0_0] : memref<8x128xf32, #tpu.memory_space<vmem>>, vector<8x128xf32>
    %c0_1 = arith.constant 0 : index
    %c0_2 = arith.constant 0 : index
    %1 = vector.load %arg2[%c0_1, %c0_2] : memref<8x128xf32, #tpu.memory_space<vmem>>, vector<8x128xf32>
    %cst = arith.constant 1.000000e+00 : f32
    %2 = vector.broadcast %cst : f32 to vector<8x128xf32>
    %3 = arith.mulf %1, %2 : vector<8x128xf32>
    %4 = arith.addf %0, %3 : vector<8x128xf32>
    %c0_3 = arith.constant 0 : index
    %c0_4 = arith.constant 0 : index
    %5 = vector.load %arg3[%c0_3, %c0_4] : memref<128x128xf32, #tpu.memory_space<vmem>>, vector<128x128xf32>
    %cst_5 = arith.constant dense<0.000000e+00> : vector<8x128xf32>
    %6 = tpu.matmul %4, %5, %cst_5 {dimension_numbers = #tpu.dot_dimension_numbers<[1], [0], [0], [1], [0, 0, 1, 1], [], []>} : vector<8x128xf32>, vector<128x128xf32>, vector<8x128xf32> -> vector<8x128xf32>
    %c0_6 = arith.constant 0 : index
    %c0_7 = arith.constant 0 : index
    %7 = vector.load %arg4[%c0_6, %c0_7] : memref<1x128xf32, #tpu.memory_space<vmem>>, vector<1x128xf32>
    %8 = vector.broadcast %7 : vector<1x128xf32> to vector<8x128xf32>
    %9 = arith.addf %6, %8 : vector<8x128xf32>
    %cst_8 = arith.constant 0.000000e+00 : f32
    %10 = vector.broadcast %cst_8 : f32 to vector<8x128xf32>
    %11 = arith.maximumf %9, %10 : vector<8x128xf32>
    %c0_9 = arith.constant 0 : index
    %c0_10 = arith.constant 0 : index
    %12 = vector.load %arg3[%c0_9, %c0_10] : memref<128x128xf32, #tpu.memory_space<vmem>>, vector<128x128xf32>
    %cst_11 = arith.constant dense<0.000000e+00> : vector<8x128xf32>
    %13 = tpu.matmul %0, %12, %cst_11 {dimension_numbers = #tpu.dot_dimension_numbers<[1], [0], [0], [1], [0, 0, 1, 1], [], []>} : vector<8x128xf32>, vector<128x128xf32>, vector<8x128xf32> -> vector<8x128xf32>
    %c0_12 = arith.constant 0 : index
    %c0_13 = arith.constant 0 : index
    %14 = vector.load %arg4[%c0_12, %c0_13] : memref<1x128xf32, #tpu.memory_space<vmem>>, vector<1x128xf32>
    %15 = vector.broadcast %14 : vector<1x128xf32> to vector<8x128xf32>
    %16 = arith.addf %13, %15 : vector<8x128xf32>
    %cst_14 = arith.constant 0.000000e+00 : f32
    %17 = vector.broadcast %cst_14 : f32 to vector<8x128xf32>
    %18 = arith.maximumf %16, %17 : vector<8x128xf32>
    %19 = tpu.concatenate %11, %18 in 0 : vector<8x128xf32>, vector<8x128xf32> -> vector<16x128xf32>
    %c0_15 = arith.constant 0 : index
    %c0_16 = arith.constant 0 : index
    %20 = vector.load %arg5[%c0_15, %c0_16] : memref<128x128xf32, #tpu.memory_space<vmem>>, vector<128x128xf32>
    %cst_17 = arith.constant dense<0.000000e+00> : vector<16x128xf32>
    %21 = tpu.matmul %19, %20, %cst_17 {dimension_numbers = #tpu.dot_dimension_numbers<[1], [0], [0], [1], [0, 0, 1, 1], [], []>} : vector<16x128xf32>, vector<128x128xf32>, vector<16x128xf32> -> vector<16x128xf32>
    %c0_18 = arith.constant 0 : index
    %c0_19 = arith.constant 0 : index
    %22 = vector.load %arg6[%c0_18, %c0_19] : memref<1x128xf32, #tpu.memory_space<vmem>>, vector<1x128xf32>
    %23 = vector.broadcast %22 : vector<1x128xf32> to vector<16x128xf32>
    %24 = arith.addf %21, %23 : vector<16x128xf32>
    %cst_20 = arith.constant 0.000000e+00 : f32
    %25 = vector.broadcast %cst_20 : f32 to vector<16x128xf32>
    %26 = arith.maximumf %24, %25 : vector<16x128xf32>
    %c0_21 = arith.constant 0 : index
    %c0_22 = arith.constant 0 : index
    %27 = vector.load %arg7[%c0_21, %c0_22] : memref<128x128xf32, #tpu.memory_space<vmem>>, vector<128x128xf32>
    %cst_23 = arith.constant dense<0.000000e+00> : vector<16x128xf32>
    %28 = tpu.matmul %26, %27, %cst_23 {dimension_numbers = #tpu.dot_dimension_numbers<[1], [0], [0], [1], [0, 0, 1, 1], [], []>} : vector<16x128xf32>, vector<128x128xf32>, vector<16x128xf32> -> vector<16x128xf32>
    %c0_24 = arith.constant 0 : index
    %c0_25 = arith.constant 0 : index
    %29 = vector.load %arg8[%c0_24, %c0_25] : memref<1x128xf32, #tpu.memory_space<vmem>>, vector<1x128xf32>
    %30 = vector.broadcast %29 : vector<1x128xf32> to vector<16x128xf32>
    %31 = arith.addf %28, %30 : vector<16x128xf32>
    %32 = vector.extract_strided_slice %31 {offsets = [0, 0], sizes = [8, 128], strides = [1, 1]} : vector<16x128xf32> to vector<8x128xf32>
    %33 = vector.extract_strided_slice %31 {offsets = [8, 0], sizes = [8, 128], strides = [1, 1]} : vector<16x128xf32> to vector<8x128xf32>
    %c0_26 = arith.constant 0 : index
    %c0_27 = arith.constant 0 : index
    %34 = vector.load %arg9[%c0_26, %c0_27] : memref<128x128xf32, #tpu.memory_space<vmem>>, vector<128x128xf32>
    %cst_28 = arith.constant dense<0.000000e+00> : vector<8x128xf32>
    %35 = tpu.matmul %32, %34, %cst_28 {dimension_numbers = #tpu.dot_dimension_numbers<[1], [0], [0], [1], [0, 0, 1, 1], [], []>} : vector<8x128xf32>, vector<128x128xf32>, vector<8x128xf32> -> vector<8x128xf32>
    %c0_29 = arith.constant 0 : index
    %c0_30 = arith.constant 0 : index
    %36 = vector.load %arg10[%c0_29, %c0_30] : memref<1x128xf32, #tpu.memory_space<vmem>>, vector<1x128xf32>
    %37 = vector.broadcast %36 : vector<1x128xf32> to vector<8x128xf32>
    %38 = arith.addf %35, %37 : vector<8x128xf32>
    %cst_31 = arith.constant 0.000000e+00 : f32
    %39 = vector.broadcast %cst_31 : f32 to vector<8x128xf32>
    %40 = arith.maximumf %38, %39 : vector<8x128xf32>
    %c0_32 = arith.constant 0 : index
    %c0_33 = arith.constant 0 : index
    %41 = vector.load %arg11[%c0_32, %c0_33] : memref<128x128xf32, #tpu.memory_space<vmem>>, vector<128x128xf32>
    %cst_34 = arith.constant dense<0.000000e+00> : vector<8x128xf32>
    %42 = tpu.matmul %40, %41, %cst_34 {dimension_numbers = #tpu.dot_dimension_numbers<[1], [0], [0], [1], [0, 0, 1, 1], [], []>} : vector<8x128xf32>, vector<128x128xf32>, vector<8x128xf32> -> vector<8x128xf32>
    %c0_35 = arith.constant 0 : index
    %c0_36 = arith.constant 0 : index
    %43 = vector.load %arg12[%c0_35, %c0_36] : memref<1x128xf32, #tpu.memory_space<vmem>>, vector<1x128xf32>
    %44 = vector.broadcast %43 : vector<1x128xf32> to vector<8x128xf32>
    %45 = arith.addf %42, %44 : vector<8x128xf32>
    %cst_37 = arith.constant 0.000000e+00 : f32
    %46 = vector.broadcast %cst_37 : f32 to vector<8x128xf32>
    %47 = arith.maximumf %45, %46 : vector<8x128xf32>
    %c0_38 = arith.constant 0 : index
    %c0_39 = arith.constant 0 : index
    %48 = vector.load %arg13[%c0_38, %c0_39] : memref<128x384xf32, #tpu.memory_space<vmem>>, vector<128x384xf32>
    %cst_40 = arith.constant dense<0.000000e+00> : vector<8x384xf32>
    %49 = tpu.matmul %47, %48, %cst_40 {dimension_numbers = #tpu.dot_dimension_numbers<[1], [0], [0], [1], [0, 0, 1, 1], [], []>} : vector<8x128xf32>, vector<128x384xf32>, vector<8x384xf32> -> vector<8x384xf32>
    %c0_41 = arith.constant 0 : index
    %c0_42 = arith.constant 0 : index
    %50 = vector.load %arg14[%c0_41, %c0_42] : memref<1x384xf32, #tpu.memory_space<vmem>>, vector<1x384xf32>
    %51 = vector.broadcast %50 : vector<1x384xf32> to vector<8x384xf32>
    %52 = arith.addf %49, %51 : vector<8x384xf32>
    %53 = vector.extract_strided_slice %52 {offsets = [0, 0], sizes = [8, 128], strides = [1, 1]} : vector<8x384xf32> to vector<8x128xf32>
    %54 = math.exp %53 : vector<8x128xf32>
    %cst_43 = arith.constant 9.99999974E-6 : f32
    %cst_44 = arith.constant 1.000000e+06 : f32
    %55 = vector.broadcast %cst_43 : f32 to vector<8x128xf32>
    %56 = arith.maximumf %55, %54 : vector<8x128xf32>
    %57 = vector.broadcast %cst_44 : f32 to vector<8x128xf32>
    %58 = arith.minimumf %57, %56 : vector<8x128xf32>
    %c0_45 = arith.constant 0 : index
    %c0_46 = arith.constant 0 : index
    %59 = vector.load %arg19[%c0_45, %c0_46] : memref<8x128xf32, #tpu.memory_space<vmem>>, vector<8x128xf32>
    tpu.vector_store %arg19[%c0_45, %c0_46], %58 {strides = array<i32>} : memref<8x128xf32, #tpu.memory_space<vmem>>, vector<8x128xf32>,
    %60 = vector.extract_strided_slice %52 {offsets = [0, 128], sizes = [8, 128], strides = [1, 1]} : vector<8x384xf32> to vector<8x128xf32>
    %cst_47 = arith.constant 0.000000e+00 : f32
    %61 = vector.broadcast %cst_47 : f32 to vector<8x128xf32>
    %62 = arith.maximumf %60, %61 : vector<8x128xf32>
    %63 = vector.broadcast %cst_47 : f32 to vector<8x128xf32>
    %64 = arith.subf %60, %63 : vector<8x128xf32>
    %65 = arith.cmpf one, %64, %64 : vector<8x128xf32>
    %66 = vector.broadcast %cst_47 : f32 to vector<8x128xf32>
    %67 = arith.addf %60, %66 : vector<8x128xf32>
    %68 = math.absf %64 : vector<8x128xf32>
    %cst_48 = arith.constant 0.000000e+00 : f32
    %69 = vector.broadcast %cst_48 : f32 to vector<8x128xf32>
    %70 = arith.subf %69, %68 : vector<8x128xf32>
    %71 = math.exp %70 : vector<8x128xf32>
    %72 = math.log1p %71 : vector<8x128xf32>
    %73 = arith.addf %62, %72 : vector<8x128xf32>
    %74 = arith.select %65, %67, %73 : vector<8x128xi1>, vector<8x128xf32>
    %cst_49 = arith.constant 9.99999974E-5 : f32
    %cst_50 = arith.constant 1.000000e+04 : f32
    %75 = vector.broadcast %cst_49 : f32 to vector<8x128xf32>
    %76 = arith.maximumf %75, %74 : vector<8x128xf32>
    %77 = vector.broadcast %cst_50 : f32 to vector<8x128xf32>
    %78 = arith.minimumf %77, %76 : vector<8x128xf32>
    %c0_51 = arith.constant 0 : index
    %c0_52 = arith.constant 0 : index
    %79 = vector.load %arg20[%c0_51, %c0_52] : memref<8x128xf32, #tpu.memory_space<vmem>>, vector<8x128xf32>
    tpu.vector_store %arg20[%c0_51, %c0_52], %78 {strides = array<i32>} : memref<8x128xf32, #tpu.memory_space<vmem>>, vector<8x128xf32>,
    %80 = vector.extract_strided_slice %52 {offsets = [0, 256], sizes = [8, 128], strides = [1, 1]} : vector<8x384xf32> to vector<8x128xf32>
    %81 = arith.negf %80 : vector<8x128xf32>
    %82 = math.exp %81 : vector<8x128xf32>
    %cst_53 = arith.constant 1.000000e+00 : f32
    %83 = vector.broadcast %cst_53 : f32 to vector<8x128xf32>
    %84 = arith.addf %83, %82 : vector<8x128xf32>
    %85 = arith.divf %83, %84 : vector<8x128xf32>
    %c0_54 = arith.constant 0 : index
    %c0_55 = arith.constant 0 : index
    %86 = vector.load %arg21[%c0_54, %c0_55] : memref<8x128xf32, #tpu.memory_space<vmem>>, vector<8x128xf32>
    tpu.vector_store %arg21[%c0_54, %c0_55], %85 {strides = array<i32>} : memref<8x128xf32, #tpu.memory_space<vmem>>, vector<8x128xf32>,
    %c0_56 = arith.constant 0 : index
    %c0_57 = arith.constant 0 : index
    %87 = vector.load %arg17[%c0_56, %c0_57] : memref<8x128xf32, #tpu.memory_space<vmem>>, vector<8x128xf32>
    tpu.vector_store %arg17[%c0_56, %c0_57], %33 {strides = array<i32>} : memref<8x128xf32, #tpu.memory_space<vmem>>, vector<8x128xf32>,
    %88 = arith.mulf %33, %33 : vector<8x128xf32>
    %cst_58 = arith.constant dense<0.000000e+00> : vector<8xf32>
    %89 = vector.multi_reduction <add>, %88, %cst_58 [1] : vector<8x128xf32> to vector<8xf32>
    %90 = vector.shape_cast %89 : vector<8xf32> to vector<8x1xf32>
    %c0_59 = arith.constant 0 : index
    %c0_60 = arith.constant 0 : index
    %91 = vector.load %arg15[%c0_59, %c0_60] : memref<128x128xf32, #tpu.memory_space<vmem>>, vector<128x128xf32>
    %cst_61 = arith.constant dense<0.000000e+00> : vector<8x128xf32>
    %92 = tpu.matmul %33, %91, %cst_61 {dimension_numbers = #tpu.dot_dimension_numbers<[1], [0], [0], [1], [0, 0, 1, 1], [], []>} : vector<8x128xf32>, vector<128x128xf32>, vector<8x128xf32> -> vector<8x128xf32>
    %c0_62 = arith.constant 0 : index
    %c0_63 = arith.constant 0 : index
    %93 = vector.load %arg16[%c0_62, %c0_63] : memref<1x128xf32, #tpu.memory_space<vmem>>, vector<1x128xf32>
    %94 = vector.broadcast %90 : vector<8x1xf32> to vector<8x128xf32>
    %95 = vector.broadcast %93 : vector<1x128xf32> to vector<8x128xf32>
    %96 = arith.addf %94, %95 : vector<8x128xf32>
    %cst_64 = arith.constant 2.000000e+00 : f32
    %97 = vector.broadcast %cst_64 : f32 to vector<8x128xf32>
    %98 = arith.mulf %97, %92 : vector<8x128xf32>
    %99 = arith.subf %96, %98 : vector<8x128xf32>
    %cst_65 = arith.constant 0.000000e+00 : f32
    %100 = vector.broadcast %cst_65 : f32 to vector<8x128xf32>
    %101 = arith.maximumf %99, %100 : vector<8x128xf32>
    %cst_66 = arith.constant 1.000000e+00 : f32
    %102 = vector.broadcast %cst_66 : f32 to vector<8x128xf32>
    %103 = arith.mulf %101, %102 : vector<8x128xf32>
    %cst_67 = arith.constant 1.000000e+00 : f32
    %104 = vector.broadcast %cst_67 : f32 to vector<8x128xf32>
    %105 = arith.addf %104, %103 : vector<8x128xf32>
    %106 = tpu.reciprocal %105 {approx = true} : vector<8x128xf32> -> vector<8x128xf32>
    %cst_68 = arith.constant dense<0.000000e+00> : vector<8xf32>
    %107 = vector.multi_reduction <add>, %106, %cst_68 [1] : vector<8x128xf32> to vector<8xf32>
    %108 = vector.shape_cast %107 : vector<8xf32> to vector<8x1xf32>
    %109 = tpu.reciprocal %108 {approx = true} : vector<8x1xf32> -> vector<8x1xf32>
    %110 = vector.broadcast %109 : vector<8x1xf32> to vector<8x128xf32>
    %111 = arith.mulf %106, %110 : vector<8x128xf32>
    %c0_69 = arith.constant 0 : index
    %c0_70 = arith.constant 0 : index
    %112 = vector.load %arg18[%c0_69, %c0_70] : memref<8x128xf32, #tpu.memory_space<vmem>>, vector<8x128xf32>
    tpu.vector_store %arg18[%c0_69, %c0_70], %111 {strides = array<i32>} : memref<8x128xf32, #tpu.memory_space<vmem>>, vector<8x128xf32>,
    return
  }
  func.func @transform_0(%arg0: i32) -> (i32, i32) {
    %c0_i32 = arith.constant 0 : i32
    %c0_i32_0 = arith.constant 0 : i32
    return %arg0, %c0_i32 : i32, i32
  }
  func.func @transform_1(%arg0: i32) -> (i32, i32) {
    %c0_i32 = arith.constant 0 : i32
    %c0_i32_0 = arith.constant 0 : i32
    return %arg0, %c0_i32 : i32, i32
  }
  func.func @transform_2(%arg0: i32) -> (i32, i32) {
    %c0_i32 = arith.constant 0 : i32
    %c0_i32_0 = arith.constant 0 : i32
    %c0_i32_1 = arith.constant 0 : i32
    return %c0_i32, %c0_i32_0 : i32, i32
  }
  func.func @transform_3(%arg0: i32) -> (i32, i32) {
    %c0_i32 = arith.constant 0 : i32
    %c0_i32_0 = arith.constant 0 : i32
    %c0_i32_1 = arith.constant 0 : i32
    return %c0_i32, %c0_i32_0 : i32, i32
  }
  func.func @transform_4(%arg0: i32) -> (i32, i32) {
    %c0_i32 = arith.constant 0 : i32
    %c0_i32_0 = arith.constant 0 : i32
    %c0_i32_1 = arith.constant 0 : i32
    return %c0_i32, %c0_i32_0 : i32, i32
  }
  func.func @transform_5(%arg0: i32) -> (i32, i32) {
    %c0_i32 = arith.constant 0 : i32
    %c0_i32_0 = arith.constant 0 : i32
    %c0_i32_1 = arith.constant 0 : i32
    return %c0_i32, %c0_i32_0 : i32, i32
  }
  func.func @transform_6(%arg0: i32) -> (i32, i32) {
    %c0_i32 = arith.constant 0 : i32
    %c0_i32_0 = arith.constant 0 : i32
    %c0_i32_1 = arith.constant 0 : i32
    return %c0_i32, %c0_i32_0 : i32, i32
  }
  func.func @transform_7(%arg0: i32) -> (i32, i32) {
    %c0_i32 = arith.constant 0 : i32
    %c0_i32_0 = arith.constant 0 : i32
    %c0_i32_1 = arith.constant 0 : i32
    return %c0_i32, %c0_i32_0 : i32, i32
  }
  func.func @transform_8(%arg0: i32) -> (i32, i32) {
    %c0_i32 = arith.constant 0 : i32
    %c0_i32_0 = arith.constant 0 : i32
    %c0_i32_1 = arith.constant 0 : i32
    return %c0_i32, %c0_i32_0 : i32, i32
  }
  func.func @transform_9(%arg0: i32) -> (i32, i32) {
    %c0_i32 = arith.constant 0 : i32
    %c0_i32_0 = arith.constant 0 : i32
    %c0_i32_1 = arith.constant 0 : i32
    return %c0_i32, %c0_i32_0 : i32, i32
  }
  func.func @transform_10(%arg0: i32) -> (i32, i32) {
    %c0_i32 = arith.constant 0 : i32
    %c0_i32_0 = arith.constant 0 : i32
    %c0_i32_1 = arith.constant 0 : i32
    return %c0_i32, %c0_i32_0 : i32, i32
  }
  func.func @transform_11(%arg0: i32) -> (i32, i32) {
    %c0_i32 = arith.constant 0 : i32
    %c0_i32_0 = arith.constant 0 : i32
    %c0_i32_1 = arith.constant 0 : i32
    return %c0_i32, %c0_i32_0 : i32, i32
  }
  func.func @transform_12(%arg0: i32) -> (i32, i32) {
    %c0_i32 = arith.constant 0 : i32
    %c0_i32_0 = arith.constant 0 : i32
    %c0_i32_1 = arith.constant 0 : i32
    return %c0_i32, %c0_i32_0 : i32, i32
  }
  func.func @transform_13(%arg0: i32) -> (i32, i32) {
    %c0_i32 = arith.constant 0 : i32
    %c0_i32_0 = arith.constant 0 : i32
    %c0_i32_1 = arith.constant 0 : i32
    return %c0_i32, %c0_i32_0 : i32, i32
  }
  func.func @transform_14(%arg0: i32) -> (i32, i32) {
    %c0_i32 = arith.constant 0 : i32
    %c0_i32_0 = arith.constant 0 : i32
    %c0_i32_1 = arith.constant 0 : i32
    return %c0_i32, %c0_i32_0 : i32, i32
  }
  func.func @transform_15(%arg0: i32) -> (i32, i32) {
    %c0_i32 = arith.constant 0 : i32
    %c0_i32_0 = arith.constant 0 : i32
    %c0_i32_1 = arith.constant 0 : i32
    return %c0_i32, %c0_i32_0 : i32, i32
  }
  func.func @transform_16(%arg0: i32) -> (i32, i32) {
    %c0_i32 = arith.constant 0 : i32
    %c0_i32_0 = arith.constant 0 : i32
    return %arg0, %c0_i32 : i32, i32
  }
  func.func @transform_17(%arg0: i32) -> (i32, i32) {
    %c0_i32 = arith.constant 0 : i32
    %c0_i32_0 = arith.constant 0 : i32
    return %arg0, %c0_i32 : i32, i32
  }
  func.func @transform_18(%arg0: i32) -> (i32, i32) {
    %c0_i32 = arith.constant 0 : i32
    %c0_i32_0 = arith.constant 0 : i32
    return %arg0, %c0_i32 : i32, i32
  }
  func.func @transform_19(%arg0: i32) -> (i32, i32) {
    %c0_i32 = arith.constant 0 : i32
    %c0_i32_0 = arith.constant 0 : i32
    return %arg0, %c0_i32 : i32, i32
  }
  func.func @transform_20(%arg0: i32) -> (i32, i32) {
    %c0_i32 = arith.constant 0 : i32
    %c0_i32_0 = arith.constant 0 : i32
    return %arg0, %c0_i32 : i32, i32
  }
}

module attributes {stable_mosaic.version = 11 : i64} {
  func.func @scdcc_forward_kernel(%arg0: i32, %arg1: memref<8x128xf32, #tpu.memory_space<vmem>>, %arg2: memref<8x128xf32, #tpu.memory_space<vmem>>, %arg3: memref<128x128xf32, #tpu.memory_space<vmem>>, %arg4: memref<1x128xf32, #tpu.memory_space<vmem>>, %arg5: memref<128x128xf32, #tpu.memory_space<vmem>>, %arg6: memref<1x128xf32, #tpu.memory_space<vmem>>, %arg7: memref<128x128xf32, #tpu.memory_space<vmem>>, %arg8: memref<1x128xf32, #tpu.memory_space<vmem>>, %arg9: memref<128x128xf32, #tpu.memory_space<vmem>>, %arg10: memref<1x128xf32, #tpu.memory_space<vmem>>, %arg11: memref<128x128xf32, #tpu.memory_space<vmem>>, %arg12: memref<1x128xf32, #tpu.memory_space<vmem>>, %arg13: memref<128x384xf32, #tpu.memory_space<vmem>>, %arg14: memref<1x384xf32, #tpu.memory_space<vmem>>, %arg15: memref<128x128xf32, #tpu.memory_space<vmem>>, %arg16: memref<1x128xf32, #tpu.memory_space<vmem>>, %arg17: memref<8x128xf32, #tpu.memory_space<vmem>>, %arg18: memref<8x128xf32, #tpu.memory_space<vmem>>, %arg19: memref<8x128xf32, #tpu.memory_space<vmem>>, %arg20: memref<8x128xf32, #tpu.memory_space<vmem>>, %arg21: memref<8x128xf32, #tpu.memory_space<vmem>>) attributes {dimension_semantics = [#tpu.dimension_semantics<parallel>], iteration_bounds = array<i64: 1>, scalar_prefetch = 0 : i64, scratch_operands = 0 : i64, tpu.core_type = #tpu.core_type<tc>, window_params = [{transform_indices = @transform_0, window_bounds = array<i64: 8, 128>}, {transform_indices = @transform_1, window_bounds = array<i64: 8, 128>}, {pipeline_mode = #tpu.pipeline_mode<synchronous>, transform_indices = @transform_2, window_bounds = array<i64: 128, 128>}, {pipeline_mode = #tpu.pipeline_mode<synchronous>, transform_indices = @transform_3, window_bounds = array<i64: 1, 128>}, {pipeline_mode = #tpu.pipeline_mode<synchronous>, transform_indices = @transform_4, window_bounds = array<i64: 128, 128>}, {pipeline_mode = #tpu.pipeline_mode<synchronous>, transform_indices = @transform_5, window_bounds = array<i64: 1, 128>}, {pipeline_mode = #tpu.pipeline_mode<synchronous>, transform_indices = @transform_6, window_bounds = array<i64: 128, 128>}, {pipeline_mode = #tpu.pipeline_mode<synchronous>, transform_indices = @transform_7, window_bounds = array<i64: 1, 128>}, {pipeline_mode = #tpu.pipeline_mode<synchronous>, transform_indices = @transform_8, window_bounds = array<i64: 128, 128>}, {pipeline_mode = #tpu.pipeline_mode<synchronous>, transform_indices = @transform_9, window_bounds = array<i64: 1, 128>}, {pipeline_mode = #tpu.pipeline_mode<synchronous>, transform_indices = @transform_10, window_bounds = array<i64: 128, 128>}, {pipeline_mode = #tpu.pipeline_mode<synchronous>, transform_indices = @transform_11, window_bounds = array<i64: 1, 128>}, {pipeline_mode = #tpu.pipeline_mode<synchronous>, transform_indices = @transform_12, window_bounds = array<i64: 128, 384>}, {pipeline_mode = #tpu.pipeline_mode<synchronous>, transform_indices = @transform_13, window_bounds = array<i64: 1, 384>}, {pipeline_mode = #tpu.pipeline_mode<synchronous>, transform_indices = @transform_14, window_bounds = array<i64: 128, 128>}, {pipeline_mode = #tpu.pipeline_mode<synchronous>, transform_indices = @transform_15, window_bounds = array<i64: 1, 128>}, {transform_indices = @transform_16, window_bounds = array<i64: 8, 128>}, {transform_indices = @transform_17, window_bounds = array<i64: 8, 128>}, {transform_indices = @transform_18, window_bounds = array<i64: 8, 128>}, {transform_indices = @transform_19, window_bounds = array<i64: 8, 128>}, {transform_indices = @transform_20, window_bounds = array<i64: 8, 128>}]} {
    %c0 = arith.constant 0 : index
    %c0_0 = arith.constant 0 : index
    %0 = vector.load %arg1[%c0, %c0_0] : memref<8x128xf32, #tpu.memory_space<vmem>>, vector<8x128xf32>
    %c0_1 = arith.constant 0 : index
    %c0_2 = arith.constant 0 : index
    %1 = vector.load %arg2[%c0_1, %c0_2] : memref<8x128xf32, #tpu.memory_space<vmem>>, vector<8x128xf32>
    %cst = arith.constant 1.000000e+00 : f32
    %2 = vector.broadcast %cst : f32 to vector<8x128xf32>
    %3 = arith.mulf %1, %2 : vector<8x128xf32>
    %4 = arith.addf %0, %3 : vector<8x128xf32>
    %c0_3 = arith.constant 0 : index
    %c0_4 = arith.constant 0 : index
    %5 = vector.load %arg3[%c0_3, %c0_4] : memref<128x128xf32, #tpu.memory_space<vmem>>, vector<128x128xf32>
    %cst_5 = arith.constant dense<0.000000e+00> : vector<8x128xf32>
    %6 = tpu.matmul %4, %5, %cst_5 {dimension_numbers = #tpu.dot_dimension_numbers<[1], [0], [0], [1], [0, 0, 1, 1], [], []>} : vector<8x128xf32>, vector<128x128xf32>, vector<8x128xf32> -> vector<8x128xf32>
    %c0_6 = arith.constant 0 : index
    %c0_7 = arith.constant 0 : index
    %7 = vector.load %arg4[%c0_6, %c0_7] : memref<1x128xf32, #tpu.memory_space<vmem>>, vector<1x128xf32>
    %8 = vector.broadcast %7 : vector<1x128xf32> to vector<8x128xf32>
    %9 = arith.addf %6, %8 : vector<8x128xf32>
    %cst_8 = arith.constant 0.000000e+00 : f32
    %10 = vector.broadcast %cst_8 : f32 to vector<8x128xf32>
    %11 = arith.maximumf %9, %10 : vector<8x128xf32>
    %c0_9 = arith.constant 0 : index
    %c0_10 = arith.constant 0 : index
    %12 = vector.load %arg3[%c0_9, %c0_10] : memref<128x128xf32, #tpu.memory_space<vmem>>, vector<128x128xf32>
    %cst_11 = arith.constant dense<0.000000e+00> : vector<8x128xf32>
    %13 = tpu.matmul %0, %12, %cst_11 {dimension_numbers = #tpu.dot_dimension_numbers<[1], [0], [0], [1], [0, 0, 1, 1], [], []>} : vector<8x128xf32>, vector<128x128xf32>, vector<8x128xf32> -> vector<8x128xf32>
    %c0_12 = arith.constant 0 : index
    %c0_13 = arith.constant 0 : index
    %14 = vector.load %arg4[%c0_12, %c0_13] : memref<1x128xf32, #tpu.memory_space<vmem>>, vector<1x128xf32>
    %15 = vector.broadcast %14 : vector<1x128xf32> to vector<8x128xf32>
    %16 = arith.addf %13, %15 : vector<8x128xf32>
    %cst_14 = arith.constant 0.000000e+00 : f32
    %17 = vector.broadcast %cst_14 : f32 to vector<8x128xf32>
    %18 = arith.maximumf %16, %17 : vector<8x128xf32>
    %19 = tpu.concatenate %11, %18 in 0 : vector<8x128xf32>, vector<8x128xf32> -> vector<16x128xf32>
    %c0_15 = arith.constant 0 : index
    %c0_16 = arith.constant 0 : index
    %20 = vector.load %arg5[%c0_15, %c0_16] : memref<128x128xf32, #tpu.memory_space<vmem>>, vector<128x128xf32>
    %cst_17 = arith.constant dense<0.000000e+00> : vector<16x128xf32>
    %21 = tpu.matmul %19, %20, %cst_17 {dimension_numbers = #tpu.dot_dimension_numbers<[1], [0], [0], [1], [0, 0, 1, 1], [], []>} : vector<16x128xf32>, vector<128x128xf32>, vector<16x128xf32> -> vector<16x128xf32>
    %c0_18 = arith.constant 0 : index
    %c0_19 = arith.constant 0 : index
    %22 = vector.load %arg6[%c0_18, %c0_19] : memref<1x128xf32, #tpu.memory_space<vmem>>, vector<1x128xf32>
    %23 = vector.broadcast %22 : vector<1x128xf32> to vector<16x128xf32>
    %24 = arith.addf %21, %23 : vector<16x128xf32>
    %cst_20 = arith.constant 0.000000e+00 : f32
    %25 = vector.broadcast %cst_20 : f32 to vector<16x128xf32>
    %26 = arith.maximumf %24, %25 : vector<16x128xf32>
    %c0_21 = arith.constant 0 : index
    %c0_22 = arith.constant 0 : index
    %27 = vector.load %arg7[%c0_21, %c0_22] : memref<128x128xf32, #tpu.memory_space<vmem>>, vector<128x128xf32>
    %cst_23 = arith.constant dense<0.000000e+00> : vector<16x128xf32>
    %28 = tpu.matmul %26, %27, %cst_23 {dimension_numbers = #tpu.dot_dimension_numbers<[1], [0], [0], [1], [0, 0, 1, 1], [], []>} : vector<16x128xf32>, vector<128x128xf32>, vector<16x128xf32> -> vector<16x128xf32>
    %c0_24 = arith.constant 0 : index
    %c0_25 = arith.constant 0 : index
    %29 = vector.load %arg8[%c0_24, %c0_25] : memref<1x128xf32, #tpu.memory_space<vmem>>, vector<1x128xf32>
    %30 = vector.broadcast %29 : vector<1x128xf32> to vector<16x128xf32>
    %31 = arith.addf %28, %30 : vector<16x128xf32>
    %32 = vector.extract_strided_slice %31 {offsets = [0, 0], sizes = [8, 128], strides = [1, 1]} : vector<16x128xf32> to vector<8x128xf32>
    %33 = vector.extract_strided_slice %31 {offsets = [8, 0], sizes = [8, 128], strides = [1, 1]} : vector<16x128xf32> to vector<8x128xf32>
    %c0_26 = arith.constant 0 : index
    %c0_27 = arith.constant 0 : index
    %34 = vector.load %arg9[%c0_26, %c0_27] : memref<128x128xf32, #tpu.memory_space<vmem>>, vector<128x128xf32>
    %cst_28 = arith.constant dense<0.000000e+00> : vector<8x128xf32>
    %35 = tpu.matmul %32, %34, %cst_28 {dimension_numbers = #tpu.dot_dimension_numbers<[1], [0], [0], [1], [0, 0, 1, 1], [], []>} : vector<8x128xf32>, vector<128x128xf32>, vector<8x128xf32> -> vector<8x128xf32>
    %c0_29 = arith.constant 0 : index
    %c0_30 = arith.constant 0 : index
    %36 = vector.load %arg10[%c0_29, %c0_30] : memref<1x128xf32, #tpu.memory_space<vmem>>, vector<1x128xf32>
    %37 = vector.broadcast %36 : vector<1x128xf32> to vector<8x128xf32>
    %38 = arith.addf %35, %37 : vector<8x128xf32>
    %cst_31 = arith.constant 0.000000e+00 : f32
    %39 = vector.broadcast %cst_31 : f32 to vector<8x128xf32>
    %40 = arith.maximumf %38, %39 : vector<8x128xf32>
    %c0_32 = arith.constant 0 : index
    %c0_33 = arith.constant 0 : index
    %41 = vector.load %arg11[%c0_32, %c0_33] : memref<128x128xf32, #tpu.memory_space<vmem>>, vector<128x128xf32>
    %cst_34 = arith.constant dense<0.000000e+00> : vector<8x128xf32>
    %42 = tpu.matmul %40, %41, %cst_34 {dimension_numbers = #tpu.dot_dimension_numbers<[1], [0], [0], [1], [0, 0, 1, 1], [], []>} : vector<8x128xf32>, vector<128x128xf32>, vector<8x128xf32> -> vector<8x128xf32>
    %c0_35 = arith.constant 0 : index
    %c0_36 = arith.constant 0 : index
    %43 = vector.load %arg12[%c0_35, %c0_36] : memref<1x128xf32, #tpu.memory_space<vmem>>, vector<1x128xf32>
    %44 = vector.broadcast %43 : vector<1x128xf32> to vector<8x128xf32>
    %45 = arith.addf %42, %44 : vector<8x128xf32>
    %cst_37 = arith.constant 0.000000e+00 : f32
    %46 = vector.broadcast %cst_37 : f32 to vector<8x128xf32>
    %47 = arith.maximumf %45, %46 : vector<8x128xf32>
    %c0_38 = arith.constant 0 : index
    %c0_39 = arith.constant 0 : index
    %48 = vector.load %arg13[%c0_38, %c0_39] : memref<128x384xf32, #tpu.memory_space<vmem>>, vector<128x384xf32>
    %cst_40 = arith.constant dense<0.000000e+00> : vector<8x384xf32>
    %49 = tpu.matmul %47, %48, %cst_40 {dimension_numbers = #tpu.dot_dimension_numbers<[1], [0], [0], [1], [0, 0, 1, 1], [], []>} : vector<8x128xf32>, vector<128x384xf32>, vector<8x384xf32> -> vector<8x384xf32>
    %c0_41 = arith.constant 0 : index
    %c0_42 = arith.constant 0 : index
    %50 = vector.load %arg14[%c0_41, %c0_42] : memref<1x384xf32, #tpu.memory_space<vmem>>, vector<1x384xf32>
    %51 = vector.broadcast %50 : vector<1x384xf32> to vector<8x384xf32>
    %52 = arith.addf %49, %51 : vector<8x384xf32>
    %53 = vector.extract_strided_slice %52 {offsets = [0, 0], sizes = [8, 128], strides = [1, 1]} : vector<8x384xf32> to vector<8x128xf32>
    %54 = math.exp %53 : vector<8x128xf32>
    %cst_43 = arith.constant 9.99999974E-6 : f32
    %cst_44 = arith.constant 1.000000e+06 : f32
    %55 = vector.broadcast %cst_43 : f32 to vector<8x128xf32>
    %56 = arith.maximumf %55, %54 : vector<8x128xf32>
    %57 = vector.broadcast %cst_44 : f32 to vector<8x128xf32>
    %58 = arith.minimumf %57, %56 : vector<8x128xf32>
    %c0_45 = arith.constant 0 : index
    %c0_46 = arith.constant 0 : index
    %59 = vector.load %arg19[%c0_45, %c0_46] : memref<8x128xf32, #tpu.memory_space<vmem>>, vector<8x128xf32>
    tpu.vector_store %arg19[%c0_45, %c0_46], %58 {strides = array<i32>} : memref<8x128xf32, #tpu.memory_space<vmem>>, vector<8x128xf32>,
    %60 = vector.extract_strided_slice %52 {offsets = [0, 128], sizes = [8, 128], strides = [1, 1]} : vector<8x384xf32> to vector<8x128xf32>
    %cst_47 = arith.constant 0.000000e+00 : f32
    %61 = vector.broadcast %cst_47 : f32 to vector<8x128xf32>
    %62 = arith.maximumf %60, %61 : vector<8x128xf32>
    %63 = vector.broadcast %cst_47 : f32 to vector<8x128xf32>
    %64 = arith.subf %60, %63 : vector<8x128xf32>
    %65 = arith.cmpf one, %64, %64 : vector<8x128xf32>
    %66 = vector.broadcast %cst_47 : f32 to vector<8x128xf32>
    %67 = arith.addf %60, %66 : vector<8x128xf32>
    %68 = math.absf %64 : vector<8x128xf32>
    %cst_48 = arith.constant 0.000000e+00 : f32
    %69 = vector.broadcast %cst_48 : f32 to vector<8x128xf32>
    %70 = arith.subf %69, %68 : vector<8x128xf32>
    %71 = math.exp %70 : vector<8x128xf32>
    %72 = math.log1p %71 : vector<8x128xf32>
    %73 = arith.addf %62, %72 : vector<8x128xf32>
    %74 = arith.select %65, %67, %73 : vector<8x128xi1>, vector<8x128xf32>
    %cst_49 = arith.constant 9.99999974E-5 : f32
    %cst_50 = arith.constant 1.000000e+04 : f32
    %75 = vector.broadcast %cst_49 : f32 to vector<8x128xf32>
    %76 = arith.maximumf %75, %74 : vector<8x128xf32>
    %77 = vector.broadcast %cst_50 : f32 to vector<8x128xf32>
    %78 = arith.minimumf %77, %76 : vector<8x128xf32>
    %c0_51 = arith.constant 0 : index
    %c0_52 = arith.constant 0 : index
    %79 = vector.load %arg20[%c0_51, %c0_52] : memref<8x128xf32, #tpu.memory_space<vmem>>, vector<8x128xf32>
    tpu.vector_store %arg20[%c0_51, %c0_52], %78 {strides = array<i32>} : memref<8x128xf32, #tpu.memory_space<vmem>>, vector<8x128xf32>,
    %80 = vector.extract_strided_slice %52 {offsets = [0, 256], sizes = [8, 128], strides = [1, 1]} : vector<8x384xf32> to vector<8x128xf32>
    %81 = arith.negf %80 : vector<8x128xf32>
    %82 = math.exp %81 : vector<8x128xf32>
    %cst_53 = arith.constant 1.000000e+00 : f32
    %83 = vector.broadcast %cst_53 : f32 to vector<8x128xf32>
    %84 = arith.addf %83, %82 : vector<8x128xf32>
    %85 = arith.divf %83, %84 : vector<8x128xf32>
    %c0_54 = arith.constant 0 : index
    %c0_55 = arith.constant 0 : index
    %86 = vector.load %arg21[%c0_54, %c0_55] : memref<8x128xf32, #tpu.memory_space<vmem>>, vector<8x128xf32>
    tpu.vector_store %arg21[%c0_54, %c0_55], %85 {strides = array<i32>} : memref<8x128xf32, #tpu.memory_space<vmem>>, vector<8x128xf32>,
    %c0_56 = arith.constant 0 : index
    %c0_57 = arith.constant 0 : index
    %87 = vector.load %arg17[%c0_56, %c0_57] : memref<8x128xf32, #tpu.memory_space<vmem>>, vector<8x128xf32>
    tpu.vector_store %arg17[%c0_56, %c0_57], %33 {strides = array<i32>} : memref<8x128xf32, #tpu.memory_space<vmem>>, vector<8x128xf32>,
    %88 = arith.mulf %33, %33 : vector<8x128xf32>
    %cst_58 = arith.constant dense<0.000000e+00> : vector<8xf32>
    %89 = vector.multi_reduction <add>, %88, %cst_58 [1] : vector<8x128xf32> to vector<8xf32>
    %90 = vector.shape_cast %89 : vector<8xf32> to vector<8x1xf32>
    %c0_59 = arith.constant 0 : index
    %c0_60 = arith.constant 0 : index
    %91 = vector.load %arg15[%c0_59, %c0_60] : memref<128x128xf32, #tpu.memory_space<vmem>>, vector<128x128xf32>
    %cst_61 = arith.constant dense<0.000000e+00> : vector<8x128xf32>
    %92 = tpu.matmul %33, %91, %cst_61 {dimension_numbers = #tpu.dot_dimension_numbers<[1], [0], [0], [1], [0, 0, 1, 1], [], []>} : vector<8x128xf32>, vector<128x128xf32>, vector<8x128xf32> -> vector<8x128xf32>
    %c0_62 = arith.constant 0 : index
    %c0_63 = arith.constant 0 : index
    %93 = vector.load %arg16[%c0_62, %c0_63] : memref<1x128xf32, #tpu.memory_space<vmem>>, vector<1x128xf32>
    %94 = vector.broadcast %90 : vector<8x1xf32> to vector<8x128xf32>
    %95 = vector.broadcast %93 : vector<1x128xf32> to vector<8x128xf32>
    %96 = arith.addf %94, %95 : vector<8x128xf32>
    %cst_64 = arith.constant 2.000000e+00 : f32
    %97 = vector.broadcast %cst_64 : f32 to vector<8x128xf32>
    %98 = arith.mulf %97, %92 : vector<8x128xf32>
    %99 = arith.subf %96, %98 : vector<8x128xf32>
    %cst_65 = arith.constant 0.000000e+00 : f32
    %100 = vector.broadcast %cst_65 : f32 to vector<8x128xf32>
    %101 = arith.maximumf %99, %100 : vector<8x128xf32>
    %cst_66 = arith.constant 1.000000e+00 : f32
    %102 = vector.broadcast %cst_66 : f32 to vector<8x128xf32>
    %103 = arith.mulf %101, %102 : vector<8x128xf32>
    %cst_67 = arith.constant 1.000000e+00 : f32
    %104 = vector.broadcast %cst_67 : f32 to vector<8x128xf32>
    %105 = arith.addf %104, %103 : vector<8x128xf32>
    %106 = tpu.reciprocal %105 {approx = true} : vector<8x128xf32> -> vector<8x128xf32>
    %cst_68 = arith.constant dense<0.000000e+00> : vector<8xf32>
    %107 = vector.multi_reduction <add>, %106, %cst_68 [1] : vector<8x128xf32> to vector<8xf32>
    %108 = vector.shape_cast %107 : vector<8xf32> to vector<8x1xf32>
    %109 = tpu.reciprocal %108 {approx = true} : vector<8x1xf32> -> vector<8x1xf32>
    %110 = vector.broadcast %109 : vector<8x1xf32> to vector<8x128xf32>
    %111 = arith.mulf %106, %110 : vector<8x128xf32>
    %c0_69 = arith.constant 0 : index
    %c0_70 = arith.constant 0 : index
    %112 = vector.load %arg18[%c0_69, %c0_70] : memref<8x128xf32, #tpu.memory_space<vmem>>, vector<8x128xf32>
    tpu.vector_store %arg18[%c0_69, %c0_70], %111 {strides = array<i32>} : memref<8x128xf32, #tpu.memory_space<vmem>>, vector<8x128xf32>,
    return
  }
  func.func @transform_0(%arg0: i32) -> (i32, i32) {
    %c0_i32 = arith.constant 0 : i32
    %c0_i32_0 = arith.constant 0 : i32
    return %arg0, %c0_i32 : i32, i32
  }
  func.func @transform_1(%arg0: i32) -> (i32, i32) {
    %c0_i32 = arith.constant 0 : i32
    %c0_i32_0 = arith.constant 0 : i32
    return %arg0, %c0_i32 : i32, i32
  }
  func.func @transform_2(%arg0: i32) -> (i32, i32) {
    %c0_i32 = arith.constant 0 : i32
    %c0_i32_0 = arith.constant 0 : i32
    %c0_i32_1 = arith.constant 0 : i32
    return %c0_i32, %c0_i32_0 : i32, i32
  }
  func.func @transform_3(%arg0: i32) -> (i32, i32) {
    %c0_i32 = arith.constant 0 : i32
    %c0_i32_0 = arith.constant 0 : i32
    %c0_i32_1 = arith.constant 0 : i32
    return %c0_i32, %c0_i32_0 : i32, i32
  }
  func.func @transform_4(%arg0: i32) -> (i32, i32) {
    %c0_i32 = arith.constant 0 : i32
    %c0_i32_0 = arith.constant 0 : i32
    %c0_i32_1 = arith.constant 0 : i32
    return %c0_i32, %c0_i32_0 : i32, i32
  }
  func.func @transform_5(%arg0: i32) -> (i32, i32) {
    %c0_i32 = arith.constant 0 : i32
    %c0_i32_0 = arith.constant 0 : i32
    %c0_i32_1 = arith.constant 0 : i32
    return %c0_i32, %c0_i32_0 : i32, i32
  }
  func.func @transform_6(%arg0: i32) -> (i32, i32) {
    %c0_i32 = arith.constant 0 : i32
    %c0_i32_0 = arith.constant 0 : i32
    %c0_i32_1 = arith.constant 0 : i32
    return %c0_i32, %c0_i32_0 : i32, i32
  }
  func.func @transform_7(%arg0: i32) -> (i32, i32) {
    %c0_i32 = arith.constant 0 : i32
    %c0_i32_0 = arith.constant 0 : i32
    %c0_i32_1 = arith.constant 0 : i32
    return %c0_i32, %c0_i32_0 : i32, i32
  }
  func.func @transform_8(%arg0: i32) -> (i32, i32) {
    %c0_i32 = arith.constant 0 : i32
    %c0_i32_0 = arith.constant 0 : i32
    %c0_i32_1 = arith.constant 0 : i32
    return %c0_i32, %c0_i32_0 : i32, i32
  }
  func.func @transform_9(%arg0: i32) -> (i32, i32) {
    %c0_i32 = arith.constant 0 : i32
    %c0_i32_0 = arith.constant 0 : i32
    %c0_i32_1 = arith.constant 0 : i32
    return %c0_i32, %c0_i32_0 : i32, i32
  }
  func.func @transform_10(%arg0: i32) -> (i32, i32) {
    %c0_i32 = arith.constant 0 : i32
    %c0_i32_0 = arith.constant 0 : i32
    %c0_i32_1 = arith.constant 0 : i32
    return %c0_i32, %c0_i32_0 : i32, i32
  }
  func.func @transform_11(%arg0: i32) -> (i32, i32) {
    %c0_i32 = arith.constant 0 : i32
    %c0_i32_0 = arith.constant 0 : i32
    %c0_i32_1 = arith.constant 0 : i32
    return %c0_i32, %c0_i32_0 : i32, i32
  }
  func.func @transform_12(%arg0: i32) -> (i32, i32) {
    %c0_i32 = arith.constant 0 : i32
    %c0_i32_0 = arith.constant 0 : i32
    %c0_i32_1 = arith.constant 0 : i32
    return %c0_i32, %c0_i32_0 : i32, i32
  }
  func.func @transform_13(%arg0: i32) -> (i32, i32) {
    %c0_i32 = arith.constant 0 : i32
    %c0_i32_0 = arith.constant 0 : i32
    %c0_i32_1 = arith.constant 0 : i32
    return %c0_i32, %c0_i32_0 : i32, i32
  }
  func.func @transform_14(%arg0: i32) -> (i32, i32) {
    %c0_i32 = arith.constant 0 : i32
    %c0_i32_0 = arith.constant 0 : i32
    %c0_i32_1 = arith.constant 0 : i32
    return %c0_i32, %c0_i32_0 : i32, i32
  }
  func.func @transform_15(%arg0: i32) -> (i32, i32) {
    %c0_i32 = arith.constant 0 : i32
    %c0_i32_0 = arith.constant 0 : i32
    %c0_i32_1 = arith.constant 0 : i32
    return %c0_i32, %c0_i32_0 : i32, i32
  }
  func.func @transform_16(%arg0: i32) -> (i32, i32) {
    %c0_i32 = arith.constant 0 : i32
    %c0_i32_0 = arith.constant 0 : i32
    return %arg0, %c0_i32 : i32, i32
  }
  func.func @transform_17(%arg0: i32) -> (i32, i32) {
    %c0_i32 = arith.constant 0 : i32
    %c0_i32_0 = arith.constant 0 : i32
    return %arg0, %c0_i32 : i32, i32
  }
  func.func @transform_18(%arg0: i32) -> (i32, i32) {
    %c0_i32 = arith.constant 0 : i32
    %c0_i32_0 = arith.constant 0 : i32
    return %arg0, %c0_i32 : i32, i32
  }
  func.func @transform_19(%arg0: i32) -> (i32, i32) {
    %c0_i32 = arith.constant 0 : i32
    %c0_i32_0 = arith.constant 0 : i32
    return %arg0, %c0_i32 : i32, i32
  }
  func.func @transform_20(%arg0: i32) -> (i32, i32) {
    %c0_i32 = arith.constant 0 : i32
    %c0_i32_0 = arith.constant 0 : i32
    return %arg0, %c0_i32 : i32, i32
  }
}

</mosaic_0001>

<llo_original>
// kernel: tpu_custom_call.1
$region0: #{tpu_custom_call.1}
  #allocation0 [shape = 'u32[]', space=smem, size = 0x4, offset = 0x4, fixed_abs, tag = 'smem constant byte address 0x4 - core index']
  #allocation1 [shape = 'u32[144,128]{1,0:T(1,128)}', space=vmem, size = 0x12000, scoped, tag = 'internal scratch']
  %s0 = inlined_call_operand.hbm [shape: f32[8,128], index: 0, kind: input, shape index: {}]
  %s1 = inlined_call_operand.hbm [shape: f32[8,128], index: 1, kind: input, shape index: {}]
  %s2 = inlined_call_operand.hbm [shape: f32[128,128], index: 2, kind: input, shape index: {}]
  %s3 = inlined_call_operand.vmem [shape: f32[1,128], index: 3, kind: input, shape index: {}]
  %s4 = inlined_call_operand.hbm [shape: f32[128,128], index: 4, kind: input, shape index: {}]
  %s5 = inlined_call_operand.vmem [shape: f32[1,128], index: 5, kind: input, shape index: {}]
  %s6 = inlined_call_operand.hbm [shape: f32[128,128], index: 6, kind: input, shape index: {}]
  %s7 = inlined_call_operand.vmem [shape: f32[1,128], index: 7, kind: input, shape index: {}]
  %s8 = inlined_call_operand.hbm [shape: f32[128,128], index: 8, kind: input, shape index: {}]
  %s9 = inlined_call_operand.vmem [shape: f32[1,128], index: 9, kind: input, shape index: {}]
  %s10 = inlined_call_operand.hbm [shape: f32[128,128], index: 10, kind: input, shape index: {}]
  %s11 = inlined_call_operand.vmem [shape: f32[1,128], index: 11, kind: input, shape index: {}]
  %s12 = inlined_call_operand.hbm [shape: f32[128,384], index: 12, kind: input, shape index: {}]
  %s13 = inlined_call_operand.vmem [shape: f32[1,384], index: 13, kind: input, shape index: {}]
  %s14 = inlined_call_operand.hbm [shape: f32[128,128], index: 14, kind: input, shape index: {}]
  %s15 = inlined_call_operand.vmem [shape: f32[1,128], index: 15, kind: input, shape index: {}]
  %s16 = inlined_call_operand.hbm [shape: f32[8,128], index: 16, kind: output, shape index: {0}]
  %s17 = inlined_call_operand.hbm [shape: f32[8,128], index: 17, kind: output, shape index: {1}]
  %s18 = inlined_call_operand.hbm [shape: f32[8,128], index: 18, kind: output, shape index: {2}]
  %s19 = inlined_call_operand.hbm [shape: f32[8,128], index: 19, kind: output, shape index: {3}]
  %s20 = inlined_call_operand.hbm [shape: f32[8,128], index: 20, kind: output, shape index: {4}]
  %21 = xla_tuple %s16, %s17, %s18, %s19, %s20
  %s22 = sld [smem:[#allocation0]]
  $region142: #{tpu_custom_call.1} parent=0
    _
  %s24 = ssub.s32 1, %s22
  %s25 = scalar_select 0, %s24, %s22
  $region1: #{tpu_custom_call.1} parent=0
    #allocation2 [shape = 'u8[4096]{0}', space=vmem, size = 0x1000, scoped, tag = 'input window, operand 0, single buffered']
    #allocation3 [shape = 's32[1]{0}', space=sflag, size = 0x4, scoped, tag = 'scoped memory for tpu_custom_call.1']
    #allocation4 [shape = 's32[1]{0}', space=sflag, size = 0x4, scoped, tag = 'scoped memory for tpu_custom_call.1']
    #allocation5 [shape = 'u8[4096]{0}', space=vmem, size = 0x1000, scoped, tag = 'input window, operand 1, single buffered']
    #allocation6 [shape = 's32[1]{0}', space=sflag, size = 0x4, scoped, tag = 'scoped memory for tpu_custom_call.1']
    #allocation7 [shape = 'u8[65536]{0}', space=vmem, size = 0x10000, scoped, tag = 'input window, operand 2, single buffered']
    #allocation8 [shape = 'u8[65536]{0}', space=vmem, size = 0x10000, scoped, tag = 'input window, operand 4, single buffered']
    #allocation9 [shape = 's32[1]{0}', space=sflag, size = 0x4, scoped, tag = 'scoped memory for tpu_custom_call.1']
    #allocation10 [shape = 'u8[65536]{0}', space=vmem, size = 0x10000, scoped, tag = 'input window, operand 6, single buffered']
    #allocation11 [shape = 'u8[65536]{0}', space=vmem, size = 0x10000, scoped, tag = 'input window, operand 8, single buffered']
    #allocation12 [shape = 's32[1]{0}', space=sflag, size = 0x4, scoped, tag = 'scoped memory for tpu_custom_call.1']
    #allocation13 [shape = 'u8[65536]{0}', space=vmem, size = 0x10000, scoped, tag = 'input window, operand 10, single buffered']
    #allocation14 [shape = 'u8[196608]{0}', space=vmem, size = 0x30000, scoped, tag = 'input window, operand 12, single buffered']
    #allocation15 [shape = 's32[1]{0}', space=sflag, size = 0x4, scoped, tag = 'scoped memory for tpu_custom_call.1']
    #allocation16 [shape = 'u8[65536]{0}', space=vmem, size = 0x10000, scoped, tag = 'input window, operand 14, single buffered']
    #allocation17 [shape = 'u8[4096]{0}', space=vmem, size = 0x1000, scoped, tag = 'output window, operand 0, single buffered']
    #allocation18 [shape = 'u8[4096]{0}', space=vmem, size = 0x1000, scoped, tag = 'output window, operand 1, single buffered']
    #allocation19 [shape = 's32[1]{0}', space=sflag, size = 0x4, scoped, tag = 'scoped memory for tpu_custom_call.1']
    #allocation20 [shape = 'u8[4096]{0}', space=vmem, size = 0x1000, scoped, tag = 'output window, operand 2, single buffered']
    #allocation21 [shape = 'u8[4096]{0}', space=vmem, size = 0x1000, scoped, tag = 'output window, operand 3, single buffered']
    #allocation22 [shape = 's32[1]{0}', space=sflag, size = 0x4, scoped, tag = 'scoped memory for tpu_custom_call.1']
    #allocation23 [shape = 'u8[4096]{0}', space=vmem, size = 0x1000, scoped, tag = 'output window, operand 4, single buffered']
    %26 = vsyncpa [#allocation3], 0
    %27 = vsyncpa [#allocation6], 0
    %28 = vsyncpa [#allocation9], 0
    %29 = vsyncpa [#allocation12], 0
    %30 = vsyncpa [#allocation15], 0
    %31 = vsyncpa [#allocation4], 0
    %32 = vsyncpa [#allocation19], 0
    %33 = vsyncpa [#allocation22], 0
    // Predicated region
    $region2: #{tpu_custom_call.1} parent=1 // pred_check
      _
    $region3: #{tpu_custom_call.1} parent=1 // pred_check_branch
      %35 = sbr.rel (0) target = $region5
    $region4: #{tpu_custom_call.1} parent=1 // pred_region
      %s37 = ssub.s32 128, 128
      %38 = vsyncadd [#allocation3], %s37
      %s40 = sshll.u32 [#allocation2], 4
      %s41 = int_to_ptr.vmem [resolvable:$true] %s40
      %43 = dma.hbm_to_vmem [thread:$0]  %s0, 128, %s41, [#allocation3]
    $region5: #{tpu_custom_call.1} parent=1 // pred_fallthru
      _
    // Predicated region
    $region6: #{tpu_custom_call.1} parent=1 // pred_check
      _
    $region7: #{tpu_custom_call.1} parent=1 // pred_check_branch
      %45 = sbr.rel (0) target = $region9
    $region8: #{tpu_custom_call.1} parent=1 // pred_region
      %s47 = ssub.s32 128, 128
      %48 = vsyncadd [#allocation6], %s47
      %s50 = sshll.u32 [#allocation5], 4
      %s51 = int_to_ptr.vmem [resolvable:$true] %s50
      %53 = dma.hbm_to_vmem [thread:$0]  %s1, 128, %s51, [#allocation6]
    $region9: #{tpu_custom_call.1} parent=1 // pred_fallthru
      _
    // Predicated region
    $region10: #{tpu_custom_call.1} parent=1 // pred_check
      _
    $region11: #{tpu_custom_call.1} parent=1 // pred_check_branch
      %55 = sbr.rel (0) target = $region13
    $region12: #{tpu_custom_call.1} parent=1 // pred_region
      %s57 = ssub.s32 2048, 2048
      %58 = vsyncadd [#allocation6], %s57
      %s59 = sshll.u32 [#allocation7], 4
      %s60 = int_to_ptr.vmem [resolvable:$true] %s59
      %65 = dma.hbm_to_vmem [thread:$0]  %s2, 2048, %s60, [#allocation6], 128, 128, 8
    $region13: #{tpu_custom_call.1} parent=1 // pred_fallthru
      _
    // Predicated region
    $region14: #{tpu_custom_call.1} parent=1 // pred_check
      _
    $region15: #{tpu_custom_call.1} parent=1 // pred_check_branch
      %67 = sbr.rel (0) target = $region17
    $region16: #{tpu_custom_call.1} parent=1 // pred_region
      _
    $region17: #{tpu_custom_call.1} parent=1 // pred_fallthru
      _
    // Predicated region
    $region18: #{tpu_custom_call.1} parent=1 // pred_check
      _
    $region19: #{tpu_custom_call.1} parent=1 // pred_check_branch
      %69 = sbr.rel (0) target = $region21
    $region20: #{tpu_custom_call.1} parent=1 // pred_region
      %s71 = ssub.s32 2048, 2048
      %72 = vsyncadd [#allocation9], %s71
      %s73 = sshll.u32 [#allocation8], 4
      %s74 = int_to_ptr.vmem [resolvable:$true] %s73
      %79 = dma.hbm_to_vmem [thread:$0]  %s4, 2048, %s74, [#allocation9], 128, 128, 8
    $region21: #{tpu_custom_call.1} parent=1 // pred_fallthru
      _
    // Predicated region
    $region22: #{tpu_custom_call.1} parent=1 // pred_check
      _
    $region23: #{tpu_custom_call.1} parent=1 // pred_check_branch
      %81 = sbr.rel (0) target = $region25
    $region24: #{tpu_custom_call.1} parent=1 // pred_region
      _
    $region25: #{tpu_custom_call.1} parent=1 // pred_fallthru
      _
    // Predicated region
    $region26: #{tpu_custom_call.1} parent=1 // pred_check
      _
    $region27: #{tpu_custom_call.1} parent=1 // pred_check_branch
      %83 = sbr.rel (0) target = $region29
    $region28: #{tpu_custom_call.1} parent=1 // pred_region
      %s85 = ssub.s32 2048, 2048
      %86 = vsyncadd [#allocation9], %s85
      %s87 = sshll.u32 [#allocation10], 4
      %s88 = int_to_ptr.vmem [resolvable:$true] %s87
      %93 = dma.hbm_to_vmem [thread:$0]  %s6, 2048, %s88, [#allocation9], 128, 128, 8
    $region29: #{tpu_custom_call.1} parent=1 // pred_fallthru
      _
    // Predicated region
    $region30: #{tpu_custom_call.1} parent=1 // pred_check
      _
    $region31: #{tpu_custom_call.1} parent=1 // pred_check_branch
      %95 = sbr.rel (0) target = $region33
    $region32: #{tpu_custom_call.1} parent=1 // pred_region
      _
    $region33: #{tpu_custom_call.1} parent=1 // pred_fallthru
      _
    // Predicated region
    $region34: #{tpu_custom_call.1} parent=1 // pred_check
      _
    $region35: #{tpu_custom_call.1} parent=1 // pred_check_branch
      %97 = sbr.rel (0) target = $region37
    $region36: #{tpu_custom_call.1} parent=1 // pred_region
      %s99 = ssub.s32 2048, 2048
      %100 = vsyncadd [#allocation12], %s99
      %s101 = sshll.u32 [#allocation11], 4
      %s102 = int_to_ptr.vmem [resolvable:$true] %s101
      %107 = dma.hbm_to_vmem [thread:$0]  %s8, 2048, %s102, [#allocation12], 128, 128, 8
    $region37: #{tpu_custom_call.1} parent=1 // pred_fallthru
      _
    // Predicated region
    $region38: #{tpu_custom_call.1} parent=1 // pred_check
      _
    $region39: #{tpu_custom_call.1} parent=1 // pred_check_branch
      %109 = sbr.rel (0) target = $region41
    $region40: #{tpu_custom_call.1} parent=1 // pred_region
      _
    $region41: #{tpu_custom_call.1} parent=1 // pred_fallthru
      _
    // Predicated region
    $region42: #{tpu_custom_call.1} parent=1 // pred_check
      _
    $region43: #{tpu_custom_call.1} parent=1 // pred_check_branch
      %111 = sbr.rel (0) target = $region45
    $region44: #{tpu_custom_call.1} parent=1 // pred_region
      %s113 = ssub.s32 2048, 2048
      %114 = vsyncadd [#allocation12], %s113
      %s115 = sshll.u32 [#allocation13], 4
      %s116 = int_to_ptr.vmem [resolvable:$true] %s115
      %121 = dma.hbm_to_vmem [thread:$0]  %s10, 2048, %s116, [#allocation12], 128, 128, 8
    $region45: #{tpu_custom_call.1} parent=1 // pred_fallthru
      _
    // Predicated region
    $region46: #{tpu_custom_call.1} parent=1 // pred_check
      _
    $region47: #{tpu_custom_call.1} parent=1 // pred_check_branch
      %123 = sbr.rel (0) target = $region49
    $region48: #{tpu_custom_call.1} parent=1 // pred_region
      _
    $region49: #{tpu_custom_call.1} parent=1 // pred_fallthru
      _
    // Predicated region
    $region50: #{tpu_custom_call.1} parent=1 // pred_check
      _
    $region51: #{tpu_custom_call.1} parent=1 // pred_check_branch
      %125 = sbr.rel (0) target = $region53
    $region52: #{tpu_custom_call.1} parent=1 // pred_region
      %s127 = ssub.s32 6144, 6144
      %128 = vsyncadd [#allocation15], %s127
      %s129 = sshll.u32 [#allocation14], 4
      %s130 = int_to_ptr.vmem [resolvable:$true] %s129
      %135 = dma.hbm_to_vmem [thread:$0]  %s12, 6144, %s130, [#allocation15], 384, 384, 24
    $region53: #{tpu_custom_call.1} parent=1 // pred_fallthru
      _
    // Predicated region
    $region54: #{tpu_custom_call.1} parent=1 // pred_check
      _
    $region55: #{tpu_custom_call.1} parent=1 // pred_check_branch
      %137 = sbr.rel (0) target = $region57
    $region56: #{tpu_custom_call.1} parent=1 // pred_region
      _
    $region57: #{tpu_custom_call.1} parent=1 // pred_fallthru
      _
    // Predicated region
    $region58: #{tpu_custom_call.1} parent=1 // pred_check
      _
    $region59: #{tpu_custom_call.1} parent=1 // pred_check_branch
      %139 = sbr.rel (0) target = $region61
    $region60: #{tpu_custom_call.1} parent=1 // pred_region
      %s141 = ssub.s32 2048, 2048
      %142 = vsyncadd [#allocation15], %s141
      %s143 = sshll.u32 [#allocation16], 4
      %s144 = int_to_ptr.vmem [resolvable:$true] %s143
      %149 = dma.hbm_to_vmem [thread:$0]  %s14, 2048, %s144, [#allocation15], 128, 128, 8
    $region61: #{tpu_custom_call.1} parent=1 // pred_fallthru
      _
    // Predicated region
    $region62: #{tpu_custom_call.1} parent=1 // pred_check
      _
    $region63: #{tpu_custom_call.1} parent=1 // pred_check_branch
      %151 = sbr.rel (0) target = $region65
    $region64: #{tpu_custom_call.1} parent=1 // pred_region
      _
    $region65: #{tpu_custom_call.1} parent=1 // pred_fallthru
      _
    // Predicated region
    $region66: #{tpu_custom_call.1} parent=1 // pred_check
      _
    $region67: #{tpu_custom_call.1} parent=1 // pred_check_branch
      %153 = sbr.rel (0) target = $region69
    $region68: #{tpu_custom_call.1} parent=1 // pred_region
      %154 = dma.done [#allocation3], 128
    $region69: #{tpu_custom_call.1} parent=1 // pred_fallthru
      _
    // Predicated region
    $region70: #{tpu_custom_call.1} parent=1 // pred_check
      _
    $region71: #{tpu_custom_call.1} parent=1 // pred_check_branch
      %156 = sbr.rel (0) target = $region73
    $region72: #{tpu_custom_call.1} parent=1 // pred_region
      %157 = dma.done [#allocation6], 128
    $region73: #{tpu_custom_call.1} parent=1 // pred_fallthru
      _
    // Predicated region
    $region74: #{tpu_custom_call.1} parent=1 // pred_check
      _
    $region75: #{tpu_custom_call.1} parent=1 // pred_check_branch
      %159 = sbr.rel (0) target = $region77
    $region76: #{tpu_custom_call.1} parent=1 // pred_region
      %160 = dma.done [#allocation6], 2048
    $region77: #{tpu_custom_call.1} parent=1 // pred_fallthru
      _
    // Predicated region
    $region78: #{tpu_custom_call.1} parent=1 // pred_check
      _
    $region79: #{tpu_custom_call.1} parent=1 // pred_check_branch
      %162 = sbr.rel (0) target = $region81
    $region80: #{tpu_custom_call.1} parent=1 // pred_region
      %163 = dma.done [#allocation9], 2048
    $region81: #{tpu_custom_call.1} parent=1 // pred_fallthru
      _
    // Predicated region
    $region82: #{tpu_custom_call.1} parent=1 // pred_check
      _
    $region83: #{tpu_custom_call.1} parent=1 // pred_check_branch
      %165 = sbr.rel (0) target = $region85
    $region84: #{tpu_custom_call.1} parent=1 // pred_region
      %166 = dma.done [#allocation9], 2048
    $region85: #{tpu_custom_call.1} parent=1 // pred_fallthru
      _
    // Predicated region
    $region86: #{tpu_custom_call.1} parent=1 // pred_check
      _
    $region87: #{tpu_custom_call.1} parent=1 // pred_check_branch
      %168 = sbr.rel (0) target = $region89
    $region88: #{tpu_custom_call.1} parent=1 // pred_region
      %169 = dma.done [#allocation12], 2048
    $region89: #{tpu_custom_call.1} parent=1 // pred_fallthru
      _
    // Predicated region
    $region90: #{tpu_custom_call.1} parent=1 // pred_check
      _
    $region91: #{tpu_custom_call.1} parent=1 // pred_check_branch
      %171 = sbr.rel (0) target = $region93
    $region92: #{tpu_custom_call.1} parent=1 // pred_region
      %172 = dma.done [#allocation12], 2048
    $region93: #{tpu_custom_call.1} parent=1 // pred_fallthru
      _
    // Predicated region
    $region94: #{tpu_custom_call.1} parent=1 // pred_check
      _
    $region95: #{tpu_custom_call.1} parent=1 // pred_check_branch
      %174 = sbr.rel (0) target = $region97
    $region96: #{tpu_custom_call.1} parent=1 // pred_region
      %175 = dma.done [#allocation15], 6144
    $region97: #{tpu_custom_call.1} parent=1 // pred_fallthru
      _
    // Predicated region
    $region98: #{tpu_custom_call.1} parent=1 // pred_check
      _
    $region99: #{tpu_custom_call.1} parent=1 // pred_check_branch
      %177 = sbr.rel (0) target = $region101
    $region100: #{tpu_custom_call.1} parent=1 // pred_region
      %178 = dma.done [#allocation15], 2048
    $region101: #{tpu_custom_call.1} parent=1 // pred_fallthru
      _
    %v179 = vld [vmem:[#allocation2] sm:$0xff]
    %v180 = vld [vmem:[#allocation5] sm:$0xff]
    %v181 = vadd.f32 %v179, %v180
    %v182 = vld [vmem:[#allocation7] sm:$0xff]
    %v183 = vld [vmem:[#allocation7 + $0x8] sm:$0xff]
    %v184 = vld [vmem:[#allocation7 + $0x10] sm:$0xff]
    %v185 = vld [vmem:[#allocation7 + $0x18] sm:$0xff]
    %v186 = vld [vmem:[#allocation7 + $0x20] sm:$0xff]
    %v187 = vld [vmem:[#allocation7 + $0x28] sm:$0xff]
    %v188 = vld [vmem:[#allocation7 + $0x30] sm:$0xff]
    %v189 = vld [vmem:[#allocation7 + $0x38] sm:$0xff]
    %v190 = vld [vmem:[#allocation7 + $0x40] sm:$0xff]
    %v191 = vld [vmem:[#allocation7 + $0x48] sm:$0xff]
    %v192 = vld [vmem:[#allocation7 + $0x50] sm:$0xff]
    %v193 = vld [vmem:[#allocation7 + $0x58] sm:$0xff]
    %v194 = vld [vmem:[#allocation7 + $0x60] sm:$0xff]
    %v195 = vld [vmem:[#allocation7 + $0x68] sm:$0xff]
    %v196 = vld [vmem:[#allocation7 + $0x70] sm:$0xff]
    %v197 = vld [vmem:[#allocation7 + $0x78] sm:$0xff]
    %v198 = vld [vmem:[%s3] sm:$0x1]
    %v200 = vlaneseq
    %v201 = vshrl.u32 %v200, 7
    %v202 = vsub.s32 0, %v201
    %v203 = vrot.slane %v198, %v202
    %205 = vmatprep.subr.mxu0 0.0
    %206 = vmatpush1.msra.mxu0 %v182
    %207 = vmatprep.subr.mxu0 0.0
    %208 = vmatpush1.msra.mxu0 %v183
    %209 = vmatprep.subr.mxu0 0.0
    %210 = vmatpush1.msra.mxu0 %v184
    %211 = vmatprep.subr.mxu0 0.0
    %212 = vmatpush1.msra.mxu0 %v185
    %213 = vmatprep.subr.mxu0 0.0
    %214 = vmatpush1.msra.mxu0 %v186
    %215 = vmatprep.subr.mxu0 0.0
    %216 = vmatpush1.msra.mxu0 %v187
    %217 = vmatprep.subr.mxu0 0.0
    %218 = vmatpush1.msra.mxu0 %v188
    %219 = vmatprep.subr.mxu0 0.0
    %220 = vmatpush1.msra.mxu0 %v189
    %221 = vmatprep.subr.mxu0 0.0
    %222 = vmatpush1.msra.mxu0 %v190
    %223 = vmatprep.subr.mxu0 0.0
    %224 = vmatpush1.msra.mxu0 %v191
    %225 = vmatprep.subr.mxu0 0.0
    %226 = vmatpush1.msra.mxu0 %v192
    %227 = vmatprep.subr.mxu0 0.0
    %228 = vmatpush1.msra.mxu0 %v193
    %229 = vmatprep.subr.mxu0 0.0
    %230 = vmatpush1.msra.mxu0 %v194
    %231 = vmatprep.subr.mxu0 0.0
    %232 = vmatpush1.msra.mxu0 %v195
    %233 = vmatprep.subr.mxu0 0.0
    %234 = vmatpush1.msra.mxu0 %v196
    %235 = vmatprep.subr.mxu0 0.0
    %236 = vmatpush1.msra.mxu0 %v197
    %237 = vmatprep.subr.mxu0 0.0
    %238 = vmatpush1.msra.mxu0 0.0
    %239 = vmatprep.subr.mxu0 0.0
    %240 = vmatpush1.msra.mxu0 0.0
    %241 = vmatprep.subr.mxu0 0.0
    %242 = vmatpush1.msra.mxu0 0.0
    %243 = vmatprep.subr.mxu0 0.0
    %244 = vmatpush1.msra.mxu0 0.0
    %245 = vmatprep.subr.mxu0 0.0
    %246 = vmatpush1.msra.mxu0 0.0
    %247 = vmatprep.subr.mxu0 0.0
    %248 = vmatpush1.msra.mxu0 0.0
    %249 = vmatprep.subr.mxu0 0.0
    %250 = vmatpush1.msra.mxu0 0.0
    %251 = vmatprep.subr.mxu0 0.0
    %252 = vmatpush1.msra.mxu0 0.0
    %253 = vmatprep.subr.mxu0 0.0
    %254 = vmatpush1.msra.mxu0 0.0
    %255 = vmatprep.subr.mxu0 0.0
    %256 = vmatpush1.msra.mxu0 0.0
    %257 = vmatprep.subr.mxu0 0.0
    %258 = vmatpush1.msra.mxu0 0.0
    %259 = vmatprep.subr.mxu0 0.0
    %260 = vmatpush1.msra.mxu0 0.0
    %261 = vmatprep.subr.mxu0 0.0
    %262 = vmatpush1.msra.mxu0 0.0
    %263 = vmatprep.subr.mxu0 0.0
    %264 = vmatpush1.msra.mxu0 0.0
    %265 = vmatprep.subr.mxu0 0.0
    %266 = vmatpush1.msra.mxu0 0.0
    %267 = vmatprep.subr.mxu0 0.0
    %268 = vmatpush1.msra.mxu0 0.0
    %269 = vmatprep.mubr.f32.mxu0 0.0
    %270 = vmatmul.mubr.f32.gmra.mrb[0].mxu0 %v181
    %v271 = vpop.f32.mrb[0].mxu0
    %v272 = vadd.f32 %v203, %v271
    %v273 = vpop.f32.mrb[0].mxu0
    %274 = vdwg.mxu0
    %v275 = vmax.f32 %v272, 0.0
    %276 = vmatprep.subr.mxu0 0.0
    %277 = vmatpush1.msra.mxu0 %v182
    %278 = vmatprep.subr.mxu0 0.0
    %279 = vmatpush1.msra.mxu0 %v183
    %280 = vmatprep.subr.mxu0 0.0
    %281 = vmatpush1.msra.mxu0 %v184
    %282 = vmatprep.subr.mxu0 0.0
    %283 = vmatpush1.msra.mxu0 %v185
    %284 = vmatprep.subr.mxu0 0.0
    %285 = vmatpush1.msra.mxu0 %v186
    %286 = vmatprep.subr.mxu0 0.0
    %287 = vmatpush1.msra.mxu0 %v187
    %288 = vmatprep.subr.mxu0 0.0
    %289 = vmatpush1.msra.mxu0 %v188
    %290 = vmatprep.subr.mxu0 0.0
    %291 = vmatpush1.msra.mxu0 %v189
    %292 = vmatprep.subr.mxu0 0.0
    %293 = vmatpush1.msra.mxu0 %v190
    %294 = vmatprep.subr.mxu0 0.0
    %295 = vmatpush1.msra.mxu0 %v191
    %296 = vmatprep.subr.mxu0 0.0
    %297 = vmatpush1.msra.mxu0 %v192
    %298 = vmatprep.subr.mxu0 0.0
    %299 = vmatpush1.msra.mxu0 %v193
    %300 = vmatprep.subr.mxu0 0.0
    %301 = vmatpush1.msra.mxu0 %v194
    %302 = vmatprep.subr.mxu0 0.0
    %303 = vmatpush1.msra.mxu0 %v195
    %304 = vmatprep.subr.mxu0 0.0
    %305 = vmatpush1.msra.mxu0 %v196
    %306 = vmatprep.subr.mxu0 0.0
    %307 = vmatpush1.msra.mxu0 %v197
    %308 = vmatprep.subr.mxu0 0.0
    %309 = vmatpush1.msra.mxu0 0.0
    %310 = vmatprep.subr.mxu0 0.0
    %311 = vmatpush1.msra.mxu0 0.0
    %312 = vmatprep.subr.mxu0 0.0
    %313 = vmatpush1.msra.mxu0 0.0
    %314 = vmatprep.subr.mxu0 0.0
    %315 = vmatpush1.msra.mxu0 0.0
    %316 = vmatprep.subr.mxu0 0.0
    %317 = vmatpush1.msra.mxu0 0.0
    %318 = vmatprep.subr.mxu0 0.0
    %319 = vmatpush1.msra.mxu0 0.0
    %320 = vmatprep.subr.mxu0 0.0
    %321 = vmatpush1.msra.mxu0 0.0
    %322 = vmatprep.subr.mxu0 0.0
    %323 = vmatpush1.msra.mxu0 0.0
    %324 = vmatprep.subr.mxu0 0.0
    %325 = vmatpush1.msra.mxu0 0.0
    %326 = vmatprep.subr.mxu0 0.0
    %327 = vmatpush1.msra.mxu0 0.0
    %328 = vmatprep.subr.mxu0 0.0
    %329 = vmatpush1.msra.mxu0 0.0
    %330 = vmatprep.subr.mxu0 0.0
    %331 = vmatpush1.msra.mxu0 0.0
    %332 = vmatprep.subr.mxu0 0.0
    %333 = vmatpush1.msra.mxu0 0.0
    %334 = vmatprep.subr.mxu0 0.0
    %335 = vmatpush1.msra.mxu0 0.0
    %336 = vmatprep.subr.mxu0 0.0
    %337 = vmatpush1.msra.mxu0 0.0
    %338 = vmatprep.subr.mxu0 0.0
    %339 = vmatpush1.msra.mxu0 0.0
    %340 = vmatprep.mubr.f32.mxu0 0.0
    %341 = vmatmul.mubr.f32.gmra.mrb[0].mxu0 %v179
    %v342 = vpop.f32.mrb[0].mxu0
    %v343 = vadd.f32 %v203, %v342
    %v344 = vpop.f32.mrb[0].mxu0
    %345 = vdwg.mxu0
    %v346 = vmax.f32 %v343, 0.0
    %v347 = vld [vmem:[#allocation8] sm:$0xff]
    %v348 = vld [vmem:[#allocation8 + $0x8] sm:$0xff]
    %v349 = vld [vmem:[#allocation8 + $0x10] sm:$0xff]
    %v350 = vld [vmem:[#allocation8 + $0x18] sm:$0xff]
    %v351 = vld [vmem:[#allocation8 + $0x20] sm:$0xff]
    %v352 = vld [vmem:[#allocation8 + $0x28] sm:$0xff]
    %v353 = vld [vmem:[#allocation8 + $0x30] sm:$0xff]
    %v354 = vld [vmem:[#allocation8 + $0x38] sm:$0xff]
    %v355 = vld [vmem:[#allocation8 + $0x40] sm:$0xff]
    %v356 = vld [vmem:[#allocation8 + $0x48] sm:$0xff]
    %v357 = vld [vmem:[#allocation8 + $0x50] sm:$0xff]
    %v358 = vld [vmem:[#allocation8 + $0x58] sm:$0xff]
    %v359 = vld [vmem:[#allocation8 + $0x60] sm:$0xff]
    %v360 = vld [vmem:[#allocation8 + $0x68] sm:$0xff]
    %v361 = vld [vmem:[#allocation8 + $0x70] sm:$0xff]
    %v362 = vld [vmem:[#allocation8 + $0x78] sm:$0xff]
    %v363 = vld [vmem:[%s5] sm:$0x1]
    %v365 = vlaneseq
    %v366 = vshrl.u32 %v365, 7
    %v367 = vsub.s32 0, %v366
    %v368 = vrot.slane %v363, %v367
    %370 = vmatprep.subr.mxu0 0.0
    %371 = vmatpush1.msra.mxu0 %v347
    %372 = vmatprep.subr.mxu0 0.0
    %373 = vmatpush1.msra.mxu0 %v348
    %374 = vmatprep.subr.mxu0 0.0
    %375 = vmatpush1.msra.mxu0 %v349
    %376 = vmatprep.subr.mxu0 0.0
    %377 = vmatpush1.msra.mxu0 %v350
    %378 = vmatprep.subr.mxu0 0.0
    %379 = vmatpush1.msra.mxu0 %v351
    %380 = vmatprep.subr.mxu0 0.0
    %381 = vmatpush1.msra.mxu0 %v352
    %382 = vmatprep.subr.mxu0 0.0
    %383 = vmatpush1.msra.mxu0 %v353
    %384 = vmatprep.subr.mxu0 0.0
    %385 = vmatpush1.msra.mxu0 %v354
    %386 = vmatprep.subr.mxu0 0.0
    %387 = vmatpush1.msra.mxu0 %v355
    %388 = vmatprep.subr.mxu0 0.0
    %389 = vmatpush1.msra.mxu0 %v356
    %390 = vmatprep.subr.mxu0 0.0
    %391 = vmatpush1.msra.mxu0 %v357
    %392 = vmatprep.subr.mxu0 0.0
    %393 = vmatpush1.msra.mxu0 %v358
    %394 = vmatprep.subr.mxu0 0.0
    %395 = vmatpush1.msra.mxu0 %v359
    %396 = vmatprep.subr.mxu0 0.0
    %397 = vmatpush1.msra.mxu0 %v360
    %398 = vmatprep.subr.mxu0 0.0
    %399 = vmatpush1.msra.mxu0 %v361
    %400 = vmatprep.subr.mxu0 0.0
    %401 = vmatpush1.msra.mxu0 %v362
    %402 = vmatprep.subr.mxu0 0.0
    %403 = vmatpush1.msra.mxu0 0.0
    %404 = vmatprep.subr.mxu0 0.0
    %405 = vmatpush1.msra.mxu0 0.0
    %406 = vmatprep.subr.mxu0 0.0
    %407 = vmatpush1.msra.mxu0 0.0
    %408 = vmatprep.subr.mxu0 0.0
    %409 = vmatpush1.msra.mxu0 0.0
    %410 = vmatprep.subr.mxu0 0.0
    %411 = vmatpush1.msra.mxu0 0.0
    %412 = vmatprep.subr.mxu0 0.0
    %413 = vmatpush1.msra.mxu0 0.0
    %414 = vmatprep.subr.mxu0 0.0
    %415 = vmatpush1.msra.mxu0 0.0
    %416 = vmatprep.subr.mxu0 0.0
    %417 = vmatpush1.msra.mxu0 0.0
    %418 = vmatprep.subr.mxu0 0.0
    %419 = vmatpush1.msra.mxu0 0.0
    %420 = vmatprep.subr.mxu0 0.0
    %421 = vmatpush1.msra.mxu0 0.0
    %422 = vmatprep.subr.mxu0 0.0
    %423 = vmatpush1.msra.mxu0 0.0
    %424 = vmatprep.subr.mxu0 0.0
    %425 = vmatpush1.msra.mxu0 0.0
    %426 = vmatprep.subr.mxu0 0.0
    %427 = vmatpush1.msra.mxu0 0.0
    %428 = vmatprep.subr.mxu0 0.0
    %429 = vmatpush1.msra.mxu0 0.0
    %430 = vmatprep.subr.mxu0 0.0
    %431 = vmatpush1.msra.mxu0 0.0
    %432 = vmatprep.subr.mxu0 0.0
    %433 = vmatpush1.msra.mxu0 0.0
    %434 = vmatprep.mubr.f32.mxu0 0.0
    %435 = vmatmul.mubr.f32.gmra.mrb[0].mxu0 %v275
    %v436 = vpop.f32.mrb[0].mxu0
    %v437 = vadd.f32 %v368, %v436
    %v438 = vpop.f32.mrb[0].mxu0
    %439 = vmatprep.mubr.f32.mxu0 0.0
    %440 = vmatmul.mubr.f32.gmra.mrb[0].mxu0 %v346
    %v441 = vpop.f32.mrb[0].mxu0
    %v442 = vadd.f32 %v368, %v441
    %v443 = vpop.f32.mrb[0].mxu0
    %444 = vdwg.mxu0
    %v445 = vmax.f32 %v437, 0.0
    %v446 = vmax.f32 %v442, 0.0
    %v447 = vld [vmem:[#allocation10] sm:$0xff]
    %v448 = vld [vmem:[#allocation10 + $0x8] sm:$0xff]
    %v449 = vld [vmem:[#allocation10 + $0x10] sm:$0xff]
    %v450 = vld [vmem:[#allocation10 + $0x18] sm:$0xff]
    %v451 = vld [vmem:[#allocation10 + $0x20] sm:$0xff]
    %v452 = vld [vmem:[#allocation10 + $0x28] sm:$0xff]
    %v453 = vld [vmem:[#allocation10 + $0x30] sm:$0xff]
    %v454 = vld [vmem:[#allocation10 + $0x38] sm:$0xff]
    %v455 = vld [vmem:[#allocation10 + $0x40] sm:$0xff]
    %v456 = vld [vmem:[#allocation10 + $0x48] sm:$0xff]
    %v457 = vld [vmem:[#allocation10 + $0x50] sm:$0xff]
    %v458 = vld [vmem:[#allocation10 + $0x58] sm:$0xff]
    %v459 = vld [vmem:[#allocation10 + $0x60] sm:$0xff]
    %v460 = vld [vmem:[#allocation10 + $0x68] sm:$0xff]
    %v461 = vld [vmem:[#allocation10 + $0x70] sm:$0xff]
    %v462 = vld [vmem:[#allocation10 + $0x78] sm:$0xff]
    %v463 = vld [vmem:[%s7] sm:$0x1]
    %v465 = vlaneseq
    %v466 = vshrl.u32 %v465, 7
    %v467 = vsub.s32 0, %v466
    %v468 = vrot.slane %v463, %v467
    %470 = vmatprep.subr.mxu0 0.0
    %471 = vmatpush1.msra.mxu0 %v447
    %472 = vmatprep.subr.mxu0 0.0
    %473 = vmatpush1.msra.mxu0 %v448
    %474 = vmatprep.subr.mxu0 0.0
    %475 = vmatpush1.msra.mxu0 %v449
    %476 = vmatprep.subr.mxu0 0.0
    %477 = vmatpush1.msra.mxu0 %v450
    %478 = vmatprep.subr.mxu0 0.0
    %479 = vmatpush1.msra.mxu0 %v451
    %480 = vmatprep.subr.mxu0 0.0
    %481 = vmatpush1.msra.mxu0 %v452
    %482 = vmatprep.subr.mxu0 0.0
    %483 = vmatpush1.msra.mxu0 %v453
    %484 = vmatprep.subr.mxu0 0.0
    %485 = vmatpush1.msra.mxu0 %v454
    %486 = vmatprep.subr.mxu0 0.0
    %487 = vmatpush1.msra.mxu0 %v455
    %488 = vmatprep.subr.mxu0 0.0
    %489 = vmatpush1.msra.mxu0 %v456
    %490 = vmatprep.subr.mxu0 0.0
    %491 = vmatpush1.msra.mxu0 %v457
    %492 = vmatprep.subr.mxu0 0.0
    %493 = vmatpush1.msra.mxu0 %v458
    %494 = vmatprep.subr.mxu0 0.0
    %495 = vmatpush1.msra.mxu0 %v459
    %496 = vmatprep.subr.mxu0 0.0
    %497 = vmatpush1.msra.mxu0 %v460
    %498 = vmatprep.subr.mxu0 0.0
    %499 = vmatpush1.msra.mxu0 %v461
    %500 = vmatprep.subr.mxu0 0.0
    %501 = vmatpush1.msra.mxu0 %v462
    %502 = vmatprep.subr.mxu0 0.0
    %503 = vmatpush1.msra.mxu0 0.0
    %504 = vmatprep.subr.mxu0 0.0
    %505 = vmatpush1.msra.mxu0 0.0
    %506 = vmatprep.subr.mxu0 0.0
    %507 = vmatpush1.msra.mxu0 0.0
    %508 = vmatprep.subr.mxu0 0.0
    %509 = vmatpush1.msra.mxu0 0.0
    %510 = vmatprep.subr.mxu0 0.0
    %511 = vmatpush1.msra.mxu0 0.0
    %512 = vmatprep.subr.mxu0 0.0
    %513 = vmatpush1.msra.mxu0 0.0
    %514 = vmatprep.subr.mxu0 0.0
    %515 = vmatpush1.msra.mxu0 0.0
    %516 = vmatprep.subr.mxu0 0.0
    %517 = vmatpush1.msra.mxu0 0.0
    %518 = vmatprep.subr.mxu0 0.0
    %519 = vmatpush1.msra.mxu0 0.0
    %520 = vmatprep.subr.mxu0 0.0
    %521 = vmatpush1.msra.mxu0 0.0
    %522 = vmatprep.subr.mxu0 0.0
    %523 = vmatpush1.msra.mxu0 0.0
    %524 = vmatprep.subr.mxu0 0.0
    %525 = vmatpush1.msra.mxu0 0.0
    %526 = vmatprep.subr.mxu0 0.0
    %527 = vmatpush1.msra.mxu0 0.0
    %528 = vmatprep.subr.mxu0 0.0
    %529 = vmatpush1.msra.mxu0 0.0
    %530 = vmatprep.subr.mxu0 0.0
    %531 = vmatpush1.msra.mxu0 0.0
    %532 = vmatprep.subr.mxu0 0.0
    %533 = vmatpush1.msra.mxu0 0.0
    %534 = vmatprep.mubr.f32.mxu0 0.0
    %535 = vmatmul.mubr.f32.gmra.mrb[0].mxu0 %v445
    %v536 = vpop.f32.mrb[0].mxu0
    %v537 = vadd.f32 %v468, %v536
    %v538 = vpop.f32.mrb[0].mxu0
    %539 = vmatprep.mubr.f32.mxu0 0.0
    %540 = vmatmul.mubr.f32.gmra.mrb[0].mxu0 %v446
    %v541 = vpop.f32.mrb[0].mxu0
    %v542 = vadd.f32 %v468, %v541
    %v543 = vpop.f32.mrb[0].mxu0
    %544 = vdwg.mxu0
    %v545 = vld [vmem:[#allocation11] sm:$0xff]
    %v546 = vld [vmem:[#allocation11 + $0x8] sm:$0xff]
    %v547 = vld [vmem:[#allocation11 + $0x10] sm:$0xff]
    %v548 = vld [vmem:[#allocation11 + $0x18] sm:$0xff]
    %v549 = vld [vmem:[#allocation11 + $0x20] sm:$0xff]
    %v550 = vld [vmem:[#allocation11 + $0x28] sm:$0xff]
    %v551 = vld [vmem:[#allocation11 + $0x30] sm:$0xff]
    %v552 = vld [vmem:[#allocation11 + $0x38] sm:$0xff]
    %v553 = vld [vmem:[#allocation11 + $0x40] sm:$0xff]
    %v554 = vld [vmem:[#allocation11 + $0x48] sm:$0xff]
    %v555 = vld [vmem:[#allocation11 + $0x50] sm:$0xff]
    %v556 = vld [vmem:[#allocation11 + $0x58] sm:$0xff]
    %v557 = vld [vmem:[#allocation11 + $0x60] sm:$0xff]
    %v558 = vld [vmem:[#allocation11 + $0x68] sm:$0xff]
    %v559 = vld [vmem:[#allocation11 + $0x70] sm:$0xff]
    %v560 = vld [vmem:[#allocation11 + $0x78] sm:$0xff]
    %v561 = vld [vmem:[%s9] sm:$0x1]
    %v563 = vlaneseq
    %v564 = vshrl.u32 %v563, 7
    %v565 = vsub.s32 0, %v564
    %v566 = vrot.slane %v561, %v565
    %568 = vmatprep.subr.mxu0 0.0
    %569 = vmatpush1.msra.mxu0 %v545
    %570 = vmatprep.subr.mxu0 0.0
    %571 = vmatpush1.msra.mxu0 %v546
    %572 = vmatprep.subr.mxu0 0.0
    %573 = vmatpush1.msra.mxu0 %v547
    %574 = vmatprep.subr.mxu0 0.0
    %575 = vmatpush1.msra.mxu0 %v548
    %576 = vmatprep.subr.mxu0 0.0
    %577 = vmatpush1.msra.mxu0 %v549
    %578 = vmatprep.subr.mxu0 0.0
    %579 = vmatpush1.msra.mxu0 %v550
    %580 = vmatprep.subr.mxu0 0.0
    %581 = vmatpush1.msra.mxu0 %v551
    %582 = vmatprep.subr.mxu0 0.0
    %583 = vmatpush1.msra.mxu0 %v552
    %584 = vmatprep.subr.mxu0 0.0
    %585 = vmatpush1.msra.mxu0 %v553
    %586 = vmatprep.subr.mxu0 0.0
    %587 = vmatpush1.msra.mxu0 %v554
    %588 = vmatprep.subr.mxu0 0.0
    %589 = vmatpush1.msra.mxu0 %v555
    %590 = vmatprep.subr.mxu0 0.0
    %591 = vmatpush1.msra.mxu0 %v556
    %592 = vmatprep.subr.mxu0 0.0
    %593 = vmatpush1.msra.mxu0 %v557
    %594 = vmatprep.subr.mxu0 0.0
    %595 = vmatpush1.msra.mxu0 %v558
    %596 = vmatprep.subr.mxu0 0.0
    %597 = vmatpush1.msra.mxu0 %v559
    %598 = vmatprep.subr.mxu0 0.0
    %599 = vmatpush1.msra.mxu0 %v560
    %600 = vmatprep.subr.mxu0 0.0
    %601 = vmatpush1.msra.mxu0 0.0
    %602 = vmatprep.subr.mxu0 0.0
    %603 = vmatpush1.msra.mxu0 0.0
    %604 = vmatprep.subr.mxu0 0.0
    %605 = vmatpush1.msra.mxu0 0.0
    %606 = vmatprep.subr.mxu0 0.0
    %607 = vmatpush1.msra.mxu0 0.0
    %608 = vmatprep.subr.mxu0 0.0
    %609 = vmatpush1.msra.mxu0 0.0
    %610 = vmatprep.subr.mxu0 0.0
    %611 = vmatpush1.msra.mxu0 0.0
    %612 = vmatprep.subr.mxu0 0.0
    %613 = vmatpush1.msra.mxu0 0.0
    %614 = vmatprep.subr.mxu0 0.0
    %615 = vmatpush1.msra.mxu0 0.0
    %616 = vmatprep.subr.mxu0 0.0
    %617 = vmatpush1.msra.mxu0 0.0
    %618 = vmatprep.subr.mxu0 0.0
    %619 = vmatpush1.msra.mxu0 0.0
    %620 = vmatprep.subr.mxu0 0.0
    %621 = vmatpush1.msra.mxu0 0.0
    %622 = vmatprep.subr.mxu0 0.0
    %623 = vmatpush1.msra.mxu0 0.0
    %624 = vmatprep.subr.mxu0 0.0
    %625 = vmatpush1.msra.mxu0 0.0
    %626 = vmatprep.subr.mxu0 0.0
    %627 = vmatpush1.msra.mxu0 0.0
    %628 = vmatprep.subr.mxu0 0.0
    %629 = vmatpush1.msra.mxu0 0.0
    %630 = vmatprep.subr.mxu0 0.0
    %631 = vmatpush1.msra.mxu0 0.0
    %632 = vmatprep.mubr.f32.mxu0 0.0
    %633 = vmatmul.mubr.f32.gmra.mrb[0].mxu0 %v537
    %v634 = vpop.f32.mrb[0].mxu0
    %v635 = vadd.f32 %v566, %v634
    %v636 = vpop.f32.mrb[0].mxu0
    %637 = vdwg.mxu0
    %v638 = vmax.f32 %v635, 0.0
    %v639 = vld [vmem:[#allocation13] sm:$0xff]
    %v640 = vld [vmem:[#allocation13 + $0x8] sm:$0xff]
    %v641 = vld [vmem:[#allocation13 + $0x10] sm:$0xff]
    %v642 = vld [vmem:[#allocation13 + $0x18] sm:$0xff]
    %v643 = vld [vmem:[#allocation13 + $0x20] sm:$0xff]
    %v644 = vld [vmem:[#allocation13 + $0x28] sm:$0xff]
    %v645 = vld [vmem:[#allocation13 + $0x30] sm:$0xff]
    %v646 = vld [vmem:[#allocation13 + $0x38] sm:$0xff]
    %v647 = vld [vmem:[#allocation13 + $0x40] sm:$0xff]
    %v648 = vld [vmem:[#allocation13 + $0x48] sm:$0xff]
    %v649 = vld [vmem:[#allocation13 + $0x50] sm:$0xff]
    %v650 = vld [vmem:[#allocation13 + $0x58] sm:$0xff]
    %v651 = vld [vmem:[#allocation13 + $0x60] sm:$0xff]
    %v652 = vld [vmem:[#allocation13 + $0x68] sm:$0xff]
    %v653 = vld [vmem:[#allocation13 + $0x70] sm:$0xff]
    %v654 = vld [vmem:[#allocation13 + $0x78] sm:$0xff]
    %v655 = vld [vmem:[%s11] sm:$0x1]
    %v657 = vlaneseq
    %v658 = vshrl.u32 %v657, 7
    %v659 = vsub.s32 0, %v658
    %v660 = vrot.slane %v655, %v659
    %662 = vmatprep.subr.mxu0 0.0
    %663 = vmatpush1.msra.mxu0 %v639
    %664 = vmatprep.subr.mxu0 0.0
    %665 = vmatpush1.msra.mxu0 %v640
    %666 = vmatprep.subr.mxu0 0.0
    %667 = vmatpush1.msra.mxu0 %v641
    %668 = vmatprep.subr.mxu0 0.0
    %669 = vmatpush1.msra.mxu0 %v642
    %670 = vmatprep.subr.mxu0 0.0
    %671 = vmatpush1.msra.mxu0 %v643
    %672 = vmatprep.subr.mxu0 0.0
    %673 = vmatpush1.msra.mxu0 %v644
    %674 = vmatprep.subr.mxu0 0.0
    %675 = vmatpush1.msra.mxu0 %v645
    %676 = vmatprep.subr.mxu0 0.0
    %677 = vmatpush1.msra.mxu0 %v646
    %678 = vmatprep.subr.mxu0 0.0
    %679 = vmatpush1.msra.mxu0 %v647
    %680 = vmatprep.subr.mxu0 0.0
    %681 = vmatpush1.msra.mxu0 %v648
    %682 = vmatprep.subr.mxu0 0.0
    %683 = vmatpush1.msra.mxu0 %v649
    %684 = vmatprep.subr.mxu0 0.0
    %685 = vmatpush1.msra.mxu0 %v650
    %686 = vmatprep.subr.mxu0 0.0
    %687 = vmatpush1.msra.mxu0 %v651
    %688 = vmatprep.subr.mxu0 0.0
    %689 = vmatpush1.msra.mxu0 %v652
    %690 = vmatprep.subr.mxu0 0.0
    %691 = vmatpush1.msra.mxu0 %v653
    %692 = vmatprep.subr.mxu0 0.0
    %693 = vmatpush1.msra.mxu0 %v654
    %694 = vmatprep.subr.mxu0 0.0
    %695 = vmatpush1.msra.mxu0 0.0
    %696 = vmatprep.subr.mxu0 0.0
    %697 = vmatpush1.msra.mxu0 0.0
    %698 = vmatprep.subr.mxu0 0.0
    %699 = vmatpush1.msra.mxu0 0.0
    %700 = vmatprep.subr.mxu0 0.0
    %701 = vmatpush1.msra.mxu0 0.0
    %702 = vmatprep.subr.mxu0 0.0
    %703 = vmatpush1.msra.mxu0 0.0
    %704 = vmatprep.subr.mxu0 0.0
    %705 = vmatpush1.msra.mxu0 0.0
    %706 = vmatprep.subr.mxu0 0.0
    %707 = vmatpush1.msra.mxu0 0.0
    %708 = vmatprep.subr.mxu0 0.0
    %709 = vmatpush1.msra.mxu0 0.0
    %710 = vmatprep.subr.mxu0 0.0
    %711 = vmatpush1.msra.mxu0 0.0
    %712 = vmatprep.subr.mxu0 0.0
    %713 = vmatpush1.msra.mxu0 0.0
    %714 = vmatprep.subr.mxu0 0.0
    %715 = vmatpush1.msra.mxu0 0.0
    %716 = vmatprep.subr.mxu0 0.0
    %717 = vmatpush1.msra.mxu0 0.0
    %718 = vmatprep.subr.mxu0 0.0
    %719 = vmatpush1.msra.mxu0 0.0
    %720 = vmatprep.subr.mxu0 0.0
    %721 = vmatpush1.msra.mxu0 0.0
    %722 = vmatprep.subr.mxu0 0.0
    %723 = vmatpush1.msra.mxu0 0.0
    %724 = vmatprep.subr.mxu0 0.0
    %725 = vmatpush1.msra.mxu0 0.0
    %726 = vmatprep.mubr.f32.mxu0 0.0
    %727 = vmatmul.mubr.f32.gmra.mrb[0].mxu0 %v638
    %v728 = vpop.f32.mrb[0].mxu0
    %v729 = vadd.f32 %v660, %v728
    %v730 = vpop.f32.mrb[0].mxu0
    %731 = vdwg.mxu0
    %v732 = vmax.f32 %v729, 0.0
    %v733 = vld [vmem:[#allocation14] sm:$0xff]
    %v734 = vld [vmem:[#allocation14 + $0x8] sm:$0xff]
    %v735 = vld [vmem:[#allocation14 + $0x10] sm:$0xff]
    %v736 = vld [vmem:[#allocation14 + $0x18] sm:$0xff]
    %v737 = vld [vmem:[#allocation14 + $0x20] sm:$0xff]
    %v738 = vld [vmem:[#allocation14 + $0x28] sm:$0xff]
    %v739 = vld [vmem:[#allocation14 + $0x30] sm:$0xff]
    %v740 = vld [vmem:[#allocation14 + $0x38] sm:$0xff]
    %v741 = vld [vmem:[#allocation14 + $0x40] sm:$0xff]
    %v742 = vld [vmem:[#allocation14 + $0x48] sm:$0xff]
    %v743 = vld [vmem:[#allocation14 + $0x50] sm:$0xff]
    %v744 = vld [vmem:[#allocation14 + $0x58] sm:$0xff]
    %v745 = vld [vmem:[#allocation14 + $0x60] sm:$0xff]
    %v746 = vld [vmem:[#allocation14 + $0x68] sm:$0xff]
    %v747 = vld [vmem:[#allocation14 + $0x70] sm:$0xff]
    %v748 = vld [vmem:[#allocation14 + $0x78] sm:$0xff]
    %v749 = vld [vmem:[#allocation14 + $0x80] sm:$0xff]
    %v750 = vld [vmem:[#allocation14 + $0x88] sm:$0xff]
    %v751 = vld [vmem:[#allocation14 + $0x90] sm:$0xff]
    %v752 = vld [vmem:[#allocation14 + $0x98] sm:$0xff]
    %v753 = vld [vmem:[#allocation14 + $0xa0] sm:$0xff]
    %v754 = vld [vmem:[#allocation14 + $0xa8] sm:$0xff]
    %v755 = vld [vmem:[#allocation14 + $0xb0] sm:$0xff]
    %v756 = vld [vmem:[#allocation14 + $0xb8] sm:$0xff]
    %v757 = vld [vmem:[#allocation14 + $0xc0] sm:$0xff]
    %v758 = vld [vmem:[#allocation14 + $0xc8] sm:$0xff]
    %v759 = vld [vmem:[#allocation14 + $0xd0] sm:$0xff]
    %v760 = vld [vmem:[#allocation14 + $0xd8] sm:$0xff]
    %v761 = vld [vmem:[#allocation14 + $0xe0] sm:$0xff]
    %v762 = vld [vmem:[#allocation14 + $0xe8] sm:$0xff]
    %v763 = vld [vmem:[#allocation14 + $0xf0] sm:$0xff]
    %v764 = vld [vmem:[#allocation14 + $0xf8] sm:$0xff]
    %v765 = vld [vmem:[#allocation14 + $0x100] sm:$0xff]
    %v766 = vld [vmem:[#allocation14 + $0x108] sm:$0xff]
    %v767 = vld [vmem:[#allocation14 + $0x110] sm:$0xff]
    %v768 = vld [vmem:[#allocation14 + $0x118] sm:$0xff]
    %v769 = vld [vmem:[#allocation14 + $0x120] sm:$0xff]
    %v770 = vld [vmem:[#allocation14 + $0x128] sm:$0xff]
    %v771 = vld [vmem:[#allocation14 + $0x130] sm:$0xff]
    %v772 = vld [vmem:[#allocation14 + $0x138] sm:$0xff]
    %v773 = vld [vmem:[#allocation14 + $0x140] sm:$0xff]
    %v774 = vld [vmem:[#allocation14 + $0x148] sm:$0xff]
    %v775 = vld [vmem:[#allocation14 + $0x150] sm:$0xff]
    %v776 = vld [vmem:[#allocation14 + $0x158] sm:$0xff]
    %v777 = vld [vmem:[#allocation14 + $0x160] sm:$0xff]
    %v778 = vld [vmem:[#allocation14 + $0x168] sm:$0xff]
    %v779 = vld [vmem:[#allocation14 + $0x170] sm:$0xff]
    %v780 = vld [vmem:[#allocation14 + $0x178] sm:$0xff]
    %v781 = vld [vmem:[%s13] sm:$0x7]
    %v783 = vlaneseq
    %v784 = vshrl.u32 %v783, 7
    %v785 = vsub.s32 0, %v784
    %v786 = vrot.slane %v781, %v785
    %v787 = vlaneseq
    %v788 = vshrl.u32 %v787, 7
    %v789 = vsub.s32 1, %v788
    %v790 = vrot.slane %v781, %v789
    %v791 = vlaneseq
    %v792 = vshrl.u32 %v791, 7
    %v793 = vsub.s32 2, %v792
    %v794 = vrot.slane %v781, %v793
    %798 = vmatprep.subr.mxu0 %v734
    %799 = vmatpush1.msra.mxu0 %v733
    %800 = vmatprep.subr.mxu0 %v737
    %801 = vmatpush1.msra.mxu0 %v736
    %802 = vmatprep.subr.mxu0 %v740
    %803 = vmatpush1.msra.mxu0 %v739
    %804 = vmatprep.subr.mxu0 %v743
    %805 = vmatpush1.msra.mxu0 %v742
    %806 = vmatprep.subr.mxu0 %v746
    %807 = vmatpush1.msra.mxu0 %v745
    %808 = vmatprep.subr.mxu0 %v749
    %809 = vmatpush1.msra.mxu0 %v748
    %810 = vmatprep.subr.mxu0 %v752
    %811 = vmatpush1.msra.mxu0 %v751
    %812 = vmatprep.subr.mxu0 %v755
    %813 = vmatpush1.msra.mxu0 %v754
    %814 = vmatprep.subr.mxu0 %v758
    %815 = vmatpush1.msra.mxu0 %v757
    %816 = vmatprep.subr.mxu0 %v761
    %817 = vmatpush1.msra.mxu0 %v760
    %818 = vmatprep.subr.mxu0 %v764
    %819 = vmatpush1.msra.mxu0 %v763
    %820 = vmatprep.subr.mxu0 %v767
    %821 = vmatpush1.msra.mxu0 %v766
    %822 = vmatprep.subr.mxu0 %v770
    %823 = vmatpush1.msra.mxu0 %v769
    %824 = vmatprep.subr.mxu0 %v773
    %825 = vmatpush1.msra.mxu0 %v772
    %826 = vmatprep.subr.mxu0 %v776
    %827 = vmatpush1.msra.mxu0 %v775
    %828 = vmatprep.subr.mxu0 %v779
    %829 = vmatpush1.msra.mxu0 %v778
    %830 = vmatprep.subr.mxu0 0.0
    %831 = vmatpush1.msra.mxu0 0.0
    %832 = vmatprep.subr.mxu0 0.0
    %833 = vmatpush1.msra.mxu0 0.0
    %834 = vmatprep.subr.mxu0 0.0
    %835 = vmatpush1.msra.mxu0 0.0
    %836 = vmatprep.subr.mxu0 0.0
    %837 = vmatpush1.msra.mxu0 0.0
    %838 = vmatprep.subr.mxu0 0.0
    %839 = vmatpush1.msra.mxu0 0.0
    %840 = vmatprep.subr.mxu0 0.0
    %841 = vmatpush1.msra.mxu0 0.0
    %842 = vmatprep.subr.mxu0 0.0
    %843 = vmatpush1.msra.mxu0 0.0
    %844 = vmatprep.subr.mxu0 0.0
    %845 = vmatpush1.msra.mxu0 0.0
    %846 = vmatprep.subr.mxu0 0.0
    %847 = vmatpush1.msra.mxu0 0.0
    %848 = vmatprep.subr.mxu0 0.0
    %849 = vmatpush1.msra.mxu0 0.0
    %850 = vmatprep.subr.mxu0 0.0
    %851 = vmatpush1.msra.mxu0 0.0
    %852 = vmatprep.subr.mxu0 0.0
    %853 = vmatpush1.msra.mxu0 0.0
    %854 = vmatprep.subr.mxu0 0.0
    %855 = vmatpush1.msra.mxu0 0.0
    %856 = vmatprep.subr.mxu0 0.0
    %857 = vmatpush1.msra.mxu0 0.0
    %858 = vmatprep.subr.mxu0 0.0
    %859 = vmatpush1.msra.mxu0 0.0
    %860 = vmatprep.subr.mxu0 0.0
    %861 = vmatpush1.msra.mxu0 0.0
    %862 = vmatprep.mubr.f32.mxu0 0.0
    %863 = vmatmul.mubr.f32.gmra.mrb[0].mxu0 %v732
    %v864 = vpop.f32.mrb[0].mxu0
    %v865 = vadd.f32 %v786, %v864
    %v866 = vpop.f32.mrb[0].mxu0
    %v867 = vadd.f32 %v790, %v866
    %868 = vdwg.mxu0
    %869 = vmatprep.subr.mxu0 0.0
    %870 = vmatpush1.msra.mxu0 %v735
    %871 = vmatprep.subr.mxu0 0.0
    %872 = vmatpush1.msra.mxu0 %v738
    %873 = vmatprep.subr.mxu0 0.0
    %874 = vmatpush1.msra.mxu0 %v741
    %875 = vmatprep.subr.mxu0 0.0
    %876 = vmatpush1.msra.mxu0 %v744
    %877 = vmatprep.subr.mxu0 0.0
    %878 = vmatpush1.msra.mxu0 %v747
    %879 = vmatprep.subr.mxu0 0.0
    %880 = vmatpush1.msra.mxu0 %v750
    %881 = vmatprep.subr.mxu0 0.0
    %882 = vmatpush1.msra.mxu0 %v753
    %883 = vmatprep.subr.mxu0 0.0
    %884 = vmatpush1.msra.mxu0 %v756
    %885 = vmatprep.subr.mxu0 0.0
    %886 = vmatpush1.msra.mxu0 %v759
    %887 = vmatprep.subr.mxu0 0.0
    %888 = vmatpush1.msra.mxu0 %v762
    %889 = vmatprep.subr.mxu0 0.0
    %890 = vmatpush1.msra.mxu0 %v765
    %891 = vmatprep.subr.mxu0 0.0
    %892 = vmatpush1.msra.mxu0 %v768
    %893 = vmatprep.subr.mxu0 0.0
    %894 = vmatpush1.msra.mxu0 %v771
    %895 = vmatprep.subr.mxu0 0.0
    %896 = vmatpush1.msra.mxu0 %v774
    %897 = vmatprep.subr.mxu0 0.0
    %898 = vmatpush1.msra.mxu0 %v777
    %899 = vmatprep.subr.mxu0 0.0
    %900 = vmatpush1.msra.mxu0 %v780
    %901 = vmatprep.subr.mxu0 0.0
    %902 = vmatpush1.msra.mxu0 0.0
    %903 = vmatprep.subr.mxu0 0.0
    %904 = vmatpush1.msra.mxu0 0.0
    %905 = vmatprep.subr.mxu0 0.0
    %906 = vmatpush1.msra.mxu0 0.0
    %907 = vmatprep.subr.mxu0 0.0
    %908 = vmatpush1.msra.mxu0 0.0
    %909 = vmatprep.subr.mxu0 0.0
    %910 = vmatpush1.msra.mxu0 0.0
    %911 = vmatprep.subr.mxu0 0.0
    %912 = vmatpush1.msra.mxu0 0.0
    %913 = vmatprep.subr.mxu0 0.0
    %914 = vmatpush1.msra.mxu0 0.0
    %915 = vmatprep.subr.mxu0 0.0
    %916 = vmatpush1.msra.mxu0 0.0
    %917 = vmatprep.subr.mxu0 0.0
    %918 = vmatpush1.msra.mxu0 0.0
    %919 = vmatprep.subr.mxu0 0.0
    %920 = vmatpush1.msra.mxu0 0.0
    %921 = vmatprep.subr.mxu0 0.0
    %922 = vmatpush1.msra.mxu0 0.0
    %923 = vmatprep.subr.mxu0 0.0
    %924 = vmatpush1.msra.mxu0 0.0
    %925 = vmatprep.subr.mxu0 0.0
    %926 = vmatpush1.msra.mxu0 0.0
    %927 = vmatprep.subr.mxu0 0.0
    %928 = vmatpush1.msra.mxu0 0.0
    %929 = vmatprep.subr.mxu0 0.0
    %930 = vmatpush1.msra.mxu0 0.0
    %931 = vmatprep.subr.mxu0 0.0
    %932 = vmatpush1.msra.mxu0 0.0
    %933 = vmatprep.mubr.f32.mxu0 0.0
    %934 = vmatmul.mubr.f32.gmra.mrb[0].mxu0 %v732
    %v935 = vpop.f32.mrb[0].mxu0
    %v936 = vadd.f32 %v794, %v935
    %v937 = vpop.f32.mrb[0].mxu0
    %938 = vdwg.mxu0
    %v939 = vmul.f32 %v865, 1.442695
    %v940 = vpow.pop %v939
    %v941 = vmax.f32 %v940, 1e-05
    %v942 = vmin.f32 %v941, 1000000.0
    %943 = vst [vmem:[#allocation20] sm:$0xff] %v942
    %v944 = vmax.f32 %v867, 0.0
    %vm945 = vcmp.ne.f32.partialorder %v867, %v867
    %v946 = vadd.f32 %v867, 0.0
    %v947 = vand.u32 2147483647, %v867
    %v948 = vsub.f32 0.0, %v947
    %v949 = vmul.f32 %v948, 1.442695
    %v950 = vpow.pop %v949
    %v951 = vadd.f32 %v950, 1.0
    %v952 = vlog2.pop %v951
    %v953 = vmul.f32 %v952, 0.6931472
    %v954 = vmul.f32 -0.5, %v950
    %v955 = vadd.f32 %v954, 1.0
    %v956 = vmul.f32 %v955, %v950
    %v957 = vand.u32 2147483647, %v950
    %vm958 = vcmp.lt.f32.partialorder %v957, 0.0004427343
    %v959 = vsel %vm958, %v956, %v953
    %v960 = vadd.f32 %v944, %v959
    %v961 = vsel %vm945, %v946, %v960
    %v962 = vmax.f32 %v961, 0.0001
    %v963 = vmin.f32 %v962, 10000.0
    %964 = vst [vmem:[#allocation21] sm:$0xff] %v963
    %v965 = vxor.u32 %v936, 2147483648
    %v966 = vmul.f32 %v965, 1.442695
    %v967 = vpow.pop %v966
    %v968 = vadd.f32 %v967, 1.0
    %v969 = vrcp.pop %v968
    %v970 = vmul.f32 1.0, %v969
    %971 = vst [vmem:[#allocation23] sm:$0xff] %v970
    %972 = vst [vmem:[#allocation17] sm:$0xff] %v542
    %v973 = vmul.f32 %v542, %v542
    %974 = vadd.xlane.f32.xlu0 %v973
    %v975 = vpop.xlane.xlu0 %974
    %v976 = vld [vmem:[#allocation16] sm:$0xff]
    %v977 = vld [vmem:[#allocation16 + $0x8] sm:$0xff]
    %v978 = vld [vmem:[#allocation16 + $0x10] sm:$0xff]
    %v979 = vld [vmem:[#allocation16 + $0x18] sm:$0xff]
    %v980 = vld [vmem:[#allocation16 + $0x20] sm:$0xff]
    %v981 = vld [vmem:[#allocation16 + $0x28] sm:$0xff]
    %v982 = vld [vmem:[#allocation16 + $0x30] sm:$0xff]
    %v983 = vld [vmem:[#allocation16 + $0x38] sm:$0xff]
    %v984 = vld [vmem:[#allocation16 + $0x40] sm:$0xff]
    %v985 = vld [vmem:[#allocation16 + $0x48] sm:$0xff]
    %v986 = vld [vmem:[#allocation16 + $0x50] sm:$0xff]
    %v987 = vld [vmem:[#allocation16 + $0x58] sm:$0xff]
    %v988 = vld [vmem:[#allocation16 + $0x60] sm:$0xff]
    %v989 = vld [vmem:[#allocation16 + $0x68] sm:$0xff]
    %v990 = vld [vmem:[#allocation16 + $0x70] sm:$0xff]
    %v991 = vld [vmem:[#allocation16 + $0x78] sm:$0xff]
    %992 = vmatprep.subr.mxu0 0.0
    %993 = vmatpush1.msra.mxu0 %v976
    %994 = vmatprep.subr.mxu0 0.0
    %995 = vmatpush1.msra.mxu0 %v977
    %996 = vmatprep.subr.mxu0 0.0
    %997 = vmatpush1.msra.mxu0 %v978
    %998 = vmatprep.subr.mxu0 0.0
    %999 = vmatpush1.msra.mxu0 %v979
    %1000 = vmatprep.subr.mxu0 0.0
    %1001 = vmatpush1.msra.mxu0 %v980
    %1002 = vmatprep.subr.mxu0 0.0
    %1003 = vmatpush1.msra.mxu0 %v981
    %1004 = vmatprep.subr.mxu0 0.0
    %1005 = vmatpush1.msra.mxu0 %v982
    %1006 = vmatprep.subr.mxu0 0.0
    %1007 = vmatpush1.msra.mxu0 %v983
    %1008 = vmatprep.subr.mxu0 0.0
    %1009 = vmatpush1.msra.mxu0 %v984
    %1010 = vmatprep.subr.mxu0 0.0
    %1011 = vmatpush1.msra.mxu0 %v985
    %1012 = vmatprep.subr.mxu0 0.0
    %1013 = vmatpush1.msra.mxu0 %v986
    %1014 = vmatprep.subr.mxu0 0.0
    %1015 = vmatpush1.msra.mxu0 %v987
    %1016 = vmatprep.subr.mxu0 0.0
    %1017 = vmatpush1.msra.mxu0 %v988
    %1018 = vmatprep.subr.mxu0 0.0
    %1019 = vmatpush1.msra.mxu0 %v989
    %1020 = vmatprep.subr.mxu0 0.0
    %1021 = vmatpush1.msra.mxu0 %v990
    %1022 = vmatprep.subr.mxu0 0.0
    %1023 = vmatpush1.msra.mxu0 %v991
    %1024 = vmatprep.subr.mxu0 0.0
    %1025 = vmatpush1.msra.mxu0 0.0
    %1026 = vmatprep.subr.mxu0 0.0
    %1027 = vmatpush1.msra.mxu0 0.0
    %1028 = vmatprep.subr.mxu0 0.0
    %1029 = vmatpush1.msra.mxu0 0.0
    %1030 = vmatprep.subr.mxu0 0.0
    %1031 = vmatpush1.msra.mxu0 0.0
    %1032 = vmatprep.subr.mxu0 0.0
    %1033 = vmatpush1.msra.mxu0 0.0
    %1034 = vmatprep.subr.mxu0 0.0
    %1035 = vmatpush1.msra.mxu0 0.0
    %1036 = vmatprep.subr.mxu0 0.0
    %1037 = vmatpush1.msra.mxu0 0.0
    %1038 = vmatprep.subr.mxu0 0.0
    %1039 = vmatpush1.msra.mxu0 0.0
    %1040 = vmatprep.subr.mxu0 0.0
    %1041 = vmatpush1.msra.mxu0 0.0
    %1042 = vmatprep.subr.mxu0 0.0
    %1043 = vmatpush1.msra.mxu0 0.0
    %1044 = vmatprep.subr.mxu0 0.0
    %1045 = vmatpush1.msra.mxu0 0.0
    %1046 = vmatprep.subr.mxu0 0.0
    %1047 = vmatpush1.msra.mxu0 0.0
    %1048 = vmatprep.subr.mxu0 0.0
    %1049 = vmatpush1.msra.mxu0 0.0
    %1050 = vmatprep.subr.mxu0 0.0
    %1051 = vmatpush1.msra.mxu0 0.0
    %1052 = vmatprep.subr.mxu0 0.0
    %1053 = vmatpush1.msra.mxu0 0.0
    %1054 = vmatprep.subr.mxu0 0.0
    %1055 = vmatpush1.msra.mxu0 0.0
    %1056 = vmatprep.mubr.f32.mxu0 0.0
    %1057 = vmatmul.mubr.f32.gmra.mrb[0].mxu0 %v542
    %v1058 = vpop.f32.mrb[0].mxu0
    %v1059 = vadd.f32 0.0, %v1058
    %v1060 = vpop.f32.mrb[0].mxu0
    %1061 = vdwg.mxu0
    %v1062 = vld [vmem:[%s15] sm:$0x1]
    %v1064 = vlaneseq
    %v1065 = vshrl.u32 %v1064, 7
    %v1066 = vsub.s32 0, %v1065
    %v1067 = vrot.slane %v1062, %v1066
    %v1069 = vadd.f32 %v975, %v1067
    %v1070 = vmul.f32 %v1059, 2.0
    %v1071 = vsub.f32 %v1069, %v1070
    %v1072 = vmax.f32 %v1071, 0.0
    %v1073 = vadd.f32 %v1072, 1.0
    %v1074 = vrcp.pop %v1073
    %1075 = vadd.xlane.f32.xlu0 %v1074
    %v1076 = vpop.xlane.xlu0 %1075
    %v1077 = vrcp.pop %v1076
    %v1078 = vmul.f32 %v1074, %v1077
    %1079 = vst [vmem:[#allocation18] sm:$0xff] %v1078
    // Predicated region
    $region102: #{tpu_custom_call.1} parent=1 // pred_check
      _
    $region103: #{tpu_custom_call.1} parent=1 // pred_check_branch
      %1081 = sbr.rel (0) target = $region105
    $region104: #{tpu_custom_call.1} parent=1 // pred_region
      %s1083 = ssub.s32 128, 128
      %1084 = vsyncadd [#allocation4], %s1083
      %s1086 = sshll.u32 [#allocation17], 4
      %s1087 = int_to_ptr.vmem [resolvable:$true] %s1086
      %1089 = dma.vmem_to_hbm [thread:$0]  %s1087, 128, %s16, [#allocation4]
    $region105: #{tpu_custom_call.1} parent=1 // pred_fallthru
      _
    // Predicated region
    $region106: #{tpu_custom_call.1} parent=1 // pred_check
      _
    $region107: #{tpu_custom_call.1} parent=1 // pred_check_branch
      %1091 = sbr.rel (0) target = $region109
    $region108: #{tpu_custom_call.1} parent=1 // pred_region
      %s1093 = ssub.s32 128, 128
      %1094 = vsyncadd [#allocation19], %s1093
      %s1096 = sshll.u32 [#allocation18], 4
      %s1097 = int_to_ptr.vmem [resolvable:$true] %s1096
      %1099 = dma.vmem_to_hbm [thread:$0]  %s1097, 128, %s17, [#allocation19]
    $region109: #{tpu_custom_call.1} parent=1 // pred_fallthru
      _
    // Predicated region
    $region110: #{tpu_custom_call.1} parent=1 // pred_check
      _
    $region111: #{tpu_custom_call.1} parent=1 // pred_check_branch
      %1101 = sbr.rel (0) target = $region113
    $region112: #{tpu_custom_call.1} parent=1 // pred_region
      %s1103 = ssub.s32 128, 128
      %1104 = vsyncadd [#allocation19], %s1103
      %s1106 = sshll.u32 [#allocation20], 4
      %s1107 = int_to_ptr.vmem [resolvable:$true] %s1106
      %1109 = dma.vmem_to_hbm [thread:$0]  %s1107, 128, %s18, [#allocation19]
    $region113: #{tpu_custom_call.1} parent=1 // pred_fallthru
      _
    // Predicated region
    $region114: #{tpu_custom_call.1} parent=1 // pred_check
      _
    $region115: #{tpu_custom_call.1} parent=1 // pred_check_branch
      %1111 = sbr.rel (0) target = $region117
    $region116: #{tpu_custom_call.1} parent=1 // pred_region
      %s1113 = ssub.s32 128, 128
      %1114 = vsyncadd [#allocation22], %s1113
      %s1116 = sshll.u32 [#allocation21], 4
      %s1117 = int_to_ptr.vmem [resolvable:$true] %s1116
      %1119 = dma.vmem_to_hbm [thread:$0]  %s1117, 128, %s19, [#allocation22]
    $region117: #{tpu_custom_call.1} parent=1 // pred_fallthru
      _
    // Predicated region
    $region118: #{tpu_custom_call.1} parent=1 // pred_check
      _
    $region119: #{tpu_custom_call.1} parent=1 // pred_check_branch
      %1121 = sbr.rel (0) target = $region121
    $region120: #{tpu_custom_call.1} parent=1 // pred_region
      %s1123 = ssub.s32 128, 128
      %1124 = vsyncadd [#allocation22], %s1123
      %s1126 = sshll.u32 [#allocation23], 4
      %s1127 = int_to_ptr.vmem [resolvable:$true] %s1126
      %1129 = dma.vmem_to_hbm [thread:$0]  %s1127, 128, %s20, [#allocation22]
    $region121: #{tpu_custom_call.1} parent=1 // pred_fallthru
      _
    // Predicated region
    $region122: #{tpu_custom_call.1} parent=1 // pred_check
      _
    $region123: #{tpu_custom_call.1} parent=1 // pred_check_branch
      %1131 = sbr.rel (0) target = $region125
    $region124: #{tpu_custom_call.1} parent=1 // pred_region
      %1132 = dma.done [#allocation4], 128
    $region125: #{tpu_custom_call.1} parent=1 // pred_fallthru
      _
    // Predicated region
    $region126: #{tpu_custom_call.1} parent=1 // pred_check
      _
    $region127: #{tpu_custom_call.1} parent=1 // pred_check_branch
      %1134 = sbr.rel (0) target = $region129
    $region128: #{tpu_custom_call.1} parent=1 // pred_region
      %1135 = dma.done [#allocation19], 128
    $region129: #{tpu_custom_call.1} parent=1 // pred_fallthru
      _
    // Predicated region
    $region130: #{tpu_custom_call.1} parent=1 // pred_check
      _
    $region131: #{tpu_custom_call.1} parent=1 // pred_check_branch
      %1137 = sbr.rel (0) target = $region133
    $region132: #{tpu_custom_call.1} parent=1 // pred_region
      %1138 = dma.done [#allocation19], 128
    $region133: #{tpu_custom_call.1} parent=1 // pred_fallthru
      _
    // Predicated region
    $region134: #{tpu_custom_call.1} parent=1 // pred_check
      _
    $region135: #{tpu_custom_call.1} parent=1 // pred_check_branch
      %1140 = sbr.rel (0) target = $region137
    $region136: #{tpu_custom_call.1} parent=1 // pred_region
      %1141 = dma.done [#allocation22], 128
    $region137: #{tpu_custom_call.1} parent=1 // pred_fallthru
      _
    // Predicated region
    $region138: #{tpu_custom_call.1} parent=1 // pred_check
      _
    $region139: #{tpu_custom_call.1} parent=1 // pred_check_branch
      %1143 = sbr.rel (0) target = $region141
    $region140: #{tpu_custom_call.1} parent=1 // pred_region
      %1144 = dma.done [#allocation22], 128
    $region141: #{tpu_custom_call.1} parent=1 // pred_fallthru
      _
    %1145 = vsyncpa [#allocation3], 1
    %1146 = vsyncpa [#allocation6], 1
    %1147 = vsyncpa [#allocation9], 1
    %1148 = vsyncpa [#allocation12], 1
    %1149 = vsyncpa [#allocation15], 1
    %1150 = vsyncpa [#allocation4], 1
    %1151 = vsyncpa [#allocation19], 1
    %1152 = vsyncpa [#allocation22], 1

// kernel: tpu_custom_call.1
$region0: #{tpu_custom_call.1}
  #allocation0 [shape = 'u32[]', space=smem, size = 0x4, offset = 0x4, fixed_abs, tag = 'smem constant byte address 0x4 - core index']
  #allocation1 [shape = 'u32[144,128]{1,0:T(1,128)}', space=vmem, size = 0x12000, scoped, tag = 'internal scratch']
  %s0 = inlined_call_operand.hbm [shape: f32[8,128], index: 0, kind: input, shape index: {}]
  %s1 = inlined_call_operand.hbm [shape: f32[8,128], index: 1, kind: input, shape index: {}]
  %s2 = inlined_call_operand.hbm [shape: f32[128,128], index: 2, kind: input, shape index: {}]
  %s3 = inlined_call_operand.vmem [shape: f32[1,128], index: 3, kind: input, shape index: {}]
  %s4 = inlined_call_operand.hbm [shape: f32[128,128], index: 4, kind: input, shape index: {}]
  %s5 = inlined_call_operand.vmem [shape: f32[1,128], index: 5, kind: input, shape index: {}]
  %s6 = inlined_call_operand.hbm [shape: f32[128,128], index: 6, kind: input, shape index: {}]
  %s7 = inlined_call_operand.vmem [shape: f32[1,128], index: 7, kind: input, shape index: {}]
  %s8 = inlined_call_operand.hbm [shape: f32[128,128], index: 8, kind: input, shape index: {}]
  %s9 = inlined_call_operand.vmem [shape: f32[1,128], index: 9, kind: input, shape index: {}]
  %s10 = inlined_call_operand.hbm [shape: f32[128,128], index: 10, kind: input, shape index: {}]
  %s11 = inlined_call_operand.vmem [shape: f32[1,128], index: 11, kind: input, shape index: {}]
  %s12 = inlined_call_operand.hbm [shape: f32[128,384], index: 12, kind: input, shape index: {}]
  %s13 = inlined_call_operand.vmem [shape: f32[1,384], index: 13, kind: input, shape index: {}]
  %s14 = inlined_call_operand.hbm [shape: f32[128,128], index: 14, kind: input, shape index: {}]
  %s15 = inlined_call_operand.vmem [shape: f32[1,128], index: 15, kind: input, shape index: {}]
  %s16 = inlined_call_operand.hbm [shape: f32[8,128], index: 16, kind: output, shape index: {0}]
  %s17 = inlined_call_operand.hbm [shape: f32[8,128], index: 17, kind: output, shape index: {1}]
  %s18 = inlined_call_operand.hbm [shape: f32[8,128], index: 18, kind: output, shape index: {2}]
  %s19 = inlined_call_operand.hbm [shape: f32[8,128], index: 19, kind: output, shape index: {3}]
  %s20 = inlined_call_operand.hbm [shape: f32[8,128], index: 20, kind: output, shape index: {4}]
  %21 = xla_tuple %s16, %s17, %s18, %s19, %s20
  %s22 = sld [smem:[#allocation0]]
  $region142: #{tpu_custom_call.1} parent=0
    _
  %s24 = ssub.s32 1, %s22
  %s25 = scalar_select 0, %s24, %s22
  $region1: #{tpu_custom_call.1} parent=0
    #allocation2 [shape = 'u8[4096]{0}', space=vmem, size = 0x1000, scoped, tag = 'input window, operand 0, single buffered']
    #allocation3 [shape = 's32[1]{0}', space=sflag, size = 0x4, scoped, tag = 'scoped memory for tpu_custom_call.1']
    #allocation4 [shape = 's32[1]{0}', space=sflag, size = 0x4, scoped, tag = 'scoped memory for tpu_custom_call.1']
    #allocation5 [shape = 'u8[4096]{0}', space=vmem, size = 0x1000, scoped, tag = 'input window, operand 1, single buffered']
    #allocation6 [shape = 's32[1]{0}', space=sflag, size = 0x4, scoped, tag = 'scoped memory for tpu_custom_call.1']
    #allocation7 [shape = 'u8[65536]{0}', space=vmem, size = 0x10000, scoped, tag = 'input window, operand 2, single buffered']
    #allocation8 [shape = 'u8[65536]{0}', space=vmem, size = 0x10000, scoped, tag = 'input window, operand 4, single buffered']
    #allocation9 [shape = 's32[1]{0}', space=sflag, size = 0x4, scoped, tag = 'scoped memory for tpu_custom_call.1']
    #allocation10 [shape = 'u8[65536]{0}', space=vmem, size = 0x10000, scoped, tag = 'input window, operand 6, single buffered']
    #allocation11 [shape = 'u8[65536]{0}', space=vmem, size = 0x10000, scoped, tag = 'input window, operand 8, single buffered']
    #allocation12 [shape = 's32[1]{0}', space=sflag, size = 0x4, scoped, tag = 'scoped memory for tpu_custom_call.1']
    #allocation13 [shape = 'u8[65536]{0}', space=vmem, size = 0x10000, scoped, tag = 'input window, operand 10, single buffered']
    #allocation14 [shape = 'u8[196608]{0}', space=vmem, size = 0x30000, scoped, tag = 'input window, operand 12, single buffered']
    #allocation15 [shape = 's32[1]{0}', space=sflag, size = 0x4, scoped, tag = 'scoped memory for tpu_custom_call.1']
    #allocation16 [shape = 'u8[65536]{0}', space=vmem, size = 0x10000, scoped, tag = 'input window, operand 14, single buffered']
    #allocation17 [shape = 'u8[4096]{0}', space=vmem, size = 0x1000, scoped, tag = 'output window, operand 0, single buffered']
    #allocation18 [shape = 'u8[4096]{0}', space=vmem, size = 0x1000, scoped, tag = 'output window, operand 1, single buffered']
    #allocation19 [shape = 's32[1]{0}', space=sflag, size = 0x4, scoped, tag = 'scoped memory for tpu_custom_call.1']
    #allocation20 [shape = 'u8[4096]{0}', space=vmem, size = 0x1000, scoped, tag = 'output window, operand 2, single buffered']
    #allocation21 [shape = 'u8[4096]{0}', space=vmem, size = 0x1000, scoped, tag = 'output window, operand 3, single buffered']
    #allocation22 [shape = 's32[1]{0}', space=sflag, size = 0x4, scoped, tag = 'scoped memory for tpu_custom_call.1']
    #allocation23 [shape = 'u8[4096]{0}', space=vmem, size = 0x1000, scoped, tag = 'output window, operand 4, single buffered']
    %26 = vsyncpa [#allocation3], 0
    %27 = vsyncpa [#allocation6], 0
    %28 = vsyncpa [#allocation9], 0
    %29 = vsyncpa [#allocation12], 0
    %30 = vsyncpa [#allocation15], 0
    %31 = vsyncpa [#allocation4], 0
    %32 = vsyncpa [#allocation19], 0
    %33 = vsyncpa [#allocation22], 0
    // Predicated region
    $region2: #{tpu_custom_call.1} parent=1 // pred_check
      _
    $region3: #{tpu_custom_call.1} parent=1 // pred_check_branch
      %35 = sbr.rel (0) target = $region5
    $region4: #{tpu_custom_call.1} parent=1 // pred_region
      %s37 = ssub.s32 128, 128
      %38 = vsyncadd [#allocation3], %s37
      %s40 = sshll.u32 [#allocation2], 4
      %s41 = int_to_ptr.vmem [resolvable:$true] %s40
      %43 = dma.hbm_to_vmem [thread:$0]  %s0, 128, %s41, [#allocation3]
    $region5: #{tpu_custom_call.1} parent=1 // pred_fallthru
      _
    // Predicated region
    $region6: #{tpu_custom_call.1} parent=1 // pred_check
      _
    $region7: #{tpu_custom_call.1} parent=1 // pred_check_branch
      %45 = sbr.rel (0) target = $region9
    $region8: #{tpu_custom_call.1} parent=1 // pred_region
      %s47 = ssub.s32 128, 128
      %48 = vsyncadd [#allocation6], %s47
      %s50 = sshll.u32 [#allocation5], 4
      %s51 = int_to_ptr.vmem [resolvable:$true] %s50
      %53 = dma.hbm_to_vmem [thread:$0]  %s1, 128, %s51, [#allocation6]
    $region9: #{tpu_custom_call.1} parent=1 // pred_fallthru
      _
    // Predicated region
    $region10: #{tpu_custom_call.1} parent=1 // pred_check
      _
    $region11: #{tpu_custom_call.1} parent=1 // pred_check_branch
      %55 = sbr.rel (0) target = $region13
    $region12: #{tpu_custom_call.1} parent=1 // pred_region
      %s57 = ssub.s32 2048, 2048
      %58 = vsyncadd [#allocation6], %s57
      %s59 = sshll.u32 [#allocation7], 4
      %s60 = int_to_ptr.vmem [resolvable:$true] %s59
      %65 = dma.hbm_to_vmem [thread:$0]  %s2, 2048, %s60, [#allocation6], 128, 128, 8
    $region13: #{tpu_custom_call.1} parent=1 // pred_fallthru
      _
    // Predicated region
    $region14: #{tpu_custom_call.1} parent=1 // pred_check
      _
    $region15: #{tpu_custom_call.1} parent=1 // pred_check_branch
      %67 = sbr.rel (0) target = $region17
    $region16: #{tpu_custom_call.1} parent=1 // pred_region
      _
    $region17: #{tpu_custom_call.1} parent=1 // pred_fallthru
      _
    // Predicated region
    $region18: #{tpu_custom_call.1} parent=1 // pred_check
      _
    $region19: #{tpu_custom_call.1} parent=1 // pred_check_branch
      %69 = sbr.rel (0) target = $region21
    $region20: #{tpu_custom_call.1} parent=1 // pred_region
      %s71 = ssub.s32 2048, 2048
      %72 = vsyncadd [#allocation9], %s71
      %s73 = sshll.u32 [#allocation8], 4
      %s74 = int_to_ptr.vmem [resolvable:$true] %s73
      %79 = dma.hbm_to_vmem [thread:$0]  %s4, 2048, %s74, [#allocation9], 128, 128, 8
    $region21: #{tpu_custom_call.1} parent=1 // pred_fallthru
      _
    // Predicated region
    $region22: #{tpu_custom_call.1} parent=1 // pred_check
      _
    $region23: #{tpu_custom_call.1} parent=1 // pred_check_branch
      %81 = sbr.rel (0) target = $region25
    $region24: #{tpu_custom_call.1} parent=1 // pred_region
      _
    $region25: #{tpu_custom_call.1} parent=1 // pred_fallthru
      _
    // Predicated region
    $region26: #{tpu_custom_call.1} parent=1 // pred_check
      _
    $region27: #{tpu_custom_call.1} parent=1 // pred_check_branch
      %83 = sbr.rel (0) target = $region29
    $region28: #{tpu_custom_call.1} parent=1 // pred_region
      %s85 = ssub.s32 2048, 2048
      %86 = vsyncadd [#allocation9], %s85
      %s87 = sshll.u32 [#allocation10], 4
      %s88 = int_to_ptr.vmem [resolvable:$true] %s87
      %93 = dma.hbm_to_vmem [thread:$0]  %s6, 2048, %s88, [#allocation9], 128, 128, 8
    $region29: #{tpu_custom_call.1} parent=1 // pred_fallthru
      _
    // Predicated region
    $region30: #{tpu_custom_call.1} parent=1 // pred_check
      _
    $region31: #{tpu_custom_call.1} parent=1 // pred_check_branch
      %95 = sbr.rel (0) target = $region33
    $region32: #{tpu_custom_call.1} parent=1 // pred_region
      _
    $region33: #{tpu_custom_call.1} parent=1 // pred_fallthru
      _
    // Predicated region
    $region34: #{tpu_custom_call.1} parent=1 // pred_check
      _
    $region35: #{tpu_custom_call.1} parent=1 // pred_check_branch
      %97 = sbr.rel (0) target = $region37
    $region36: #{tpu_custom_call.1} parent=1 // pred_region
      %s99 = ssub.s32 2048, 2048
      %100 = vsyncadd [#allocation12], %s99
      %s101 = sshll.u32 [#allocation11], 4
      %s102 = int_to_ptr.vmem [resolvable:$true] %s101
      %107 = dma.hbm_to_vmem [thread:$0]  %s8, 2048, %s102, [#allocation12], 128, 128, 8
    $region37: #{tpu_custom_call.1} parent=1 // pred_fallthru
      _
    // Predicated region
    $region38: #{tpu_custom_call.1} parent=1 // pred_check
      _
    $region39: #{tpu_custom_call.1} parent=1 // pred_check_branch
      %109 = sbr.rel (0) target = $region41
    $region40: #{tpu_custom_call.1} parent=1 // pred_region
      _
    $region41: #{tpu_custom_call.1} parent=1 // pred_fallthru
      _
    // Predicated region
    $region42: #{tpu_custom_call.1} parent=1 // pred_check
      _
    $region43: #{tpu_custom_call.1} parent=1 // pred_check_branch
      %111 = sbr.rel (0) target = $region45
    $region44: #{tpu_custom_call.1} parent=1 // pred_region
      %s113 = ssub.s32 2048, 2048
      %114 = vsyncadd [#allocation12], %s113
      %s115 = sshll.u32 [#allocation13], 4
      %s116 = int_to_ptr.vmem [resolvable:$true] %s115
      %121 = dma.hbm_to_vmem [thread:$0]  %s10, 2048, %s116, [#allocation12], 128, 128, 8
    $region45: #{tpu_custom_call.1} parent=1 // pred_fallthru
      _
    // Predicated region
    $region46: #{tpu_custom_call.1} parent=1 // pred_check
      _
    $region47: #{tpu_custom_call.1} parent=1 // pred_check_branch
      %123 = sbr.rel (0) target = $region49
    $region48: #{tpu_custom_call.1} parent=1 // pred_region
      _
    $region49: #{tpu_custom_call.1} parent=1 // pred_fallthru
      _
    // Predicated region
    $region50: #{tpu_custom_call.1} parent=1 // pred_check
      _
    $region51: #{tpu_custom_call.1} parent=1 // pred_check_branch
      %125 = sbr.rel (0) target = $region53
    $region52: #{tpu_custom_call.1} parent=1 // pred_region
      %s127 = ssub.s32 6144, 6144
      %128 = vsyncadd [#allocation15], %s127
      %s129 = sshll.u32 [#allocation14], 4
      %s130 = int_to_ptr.vmem [resolvable:$true] %s129
      %135 = dma.hbm_to_vmem [thread:$0]  %s12, 6144, %s130, [#allocation15], 384, 384, 24
    $region53: #{tpu_custom_call.1} parent=1 // pred_fallthru
      _
    // Predicated region
    $region54: #{tpu_custom_call.1} parent=1 // pred_check
      _
    $region55: #{tpu_custom_call.1} parent=1 // pred_check_branch
      %137 = sbr.rel (0) target = $region57
    $region56: #{tpu_custom_call.1} parent=1 // pred_region
      _
    $region57: #{tpu_custom_call.1} parent=1 // pred_fallthru
      _
    // Predicated region
    $region58: #{tpu_custom_call.1} parent=1 // pred_check
      _
    $region59: #{tpu_custom_call.1} parent=1 // pred_check_branch
      %139 = sbr.rel (0) target = $region61
    $region60: #{tpu_custom_call.1} parent=1 // pred_region
      %s141 = ssub.s32 2048, 2048
      %142 = vsyncadd [#allocation15], %s141
      %s143 = sshll.u32 [#allocation16], 4
      %s144 = int_to_ptr.vmem [resolvable:$true] %s143
      %149 = dma.hbm_to_vmem [thread:$0]  %s14, 2048, %s144, [#allocation15], 128, 128, 8
    $region61: #{tpu_custom_call.1} parent=1 // pred_fallthru
      _
    // Predicated region
    $region62: #{tpu_custom_call.1} parent=1 // pred_check
      _
    $region63: #{tpu_custom_call.1} parent=1 // pred_check_branch
      %151 = sbr.rel (0) target = $region65
    $region64: #{tpu_custom_call.1} parent=1 // pred_region
      _
    $region65: #{tpu_custom_call.1} parent=1 // pred_fallthru
      _
    // Predicated region
    $region66: #{tpu_custom_call.1} parent=1 // pred_check
      _
    $region67: #{tpu_custom_call.1} parent=1 // pred_check_branch
      %153 = sbr.rel (0) target = $region69
    $region68: #{tpu_custom_call.1} parent=1 // pred_region
      %154 = dma.done [#allocation3], 128
    $region69: #{tpu_custom_call.1} parent=1 // pred_fallthru
      _
    // Predicated region
    $region70: #{tpu_custom_call.1} parent=1 // pred_check
      _
    $region71: #{tpu_custom_call.1} parent=1 // pred_check_branch
      %156 = sbr.rel (0) target = $region73
    $region72: #{tpu_custom_call.1} parent=1 // pred_region
      %157 = dma.done [#allocation6], 128
    $region73: #{tpu_custom_call.1} parent=1 // pred_fallthru
      _
    // Predicated region
    $region74: #{tpu_custom_call.1} parent=1 // pred_check
      _
    $region75: #{tpu_custom_call.1} parent=1 // pred_check_branch
      %159 = sbr.rel (0) target = $region77
    $region76: #{tpu_custom_call.1} parent=1 // pred_region
      %160 = dma.done [#allocation6], 2048
    $region77: #{tpu_custom_call.1} parent=1 // pred_fallthru
      _
    // Predicated region
    $region78: #{tpu_custom_call.1} parent=1 // pred_check
      _
    $region79: #{tpu_custom_call.1} parent=1 // pred_check_branch
      %162 = sbr.rel (0) target = $region81
    $region80: #{tpu_custom_call.1} parent=1 // pred_region
      %163 = dma.done [#allocation9], 2048
    $region81: #{tpu_custom_call.1} parent=1 // pred_fallthru
      _
    // Predicated region
    $region82: #{tpu_custom_call.1} parent=1 // pred_check
      _
    $region83: #{tpu_custom_call.1} parent=1 // pred_check_branch
      %165 = sbr.rel (0) target = $region85
    $region84: #{tpu_custom_call.1} parent=1 // pred_region
      %166 = dma.done [#allocation9], 2048
    $region85: #{tpu_custom_call.1} parent=1 // pred_fallthru
      _
    // Predicated region
    $region86: #{tpu_custom_call.1} parent=1 // pred_check
      _
    $region87: #{tpu_custom_call.1} parent=1 // pred_check_branch
      %168 = sbr.rel (0) target = $region89
    $region88: #{tpu_custom_call.1} parent=1 // pred_region
      %169 = dma.done [#allocation12], 2048
    $region89: #{tpu_custom_call.1} parent=1 // pred_fallthru
      _
    // Predicated region
    $region90: #{tpu_custom_call.1} parent=1 // pred_check
      _
    $region91: #{tpu_custom_call.1} parent=1 // pred_check_branch
      %171 = sbr.rel (0) target = $region93
    $region92: #{tpu_custom_call.1} parent=1 // pred_region
      %172 = dma.done [#allocation12], 2048
    $region93: #{tpu_custom_call.1} parent=1 // pred_fallthru
      _
    // Predicated region
    $region94: #{tpu_custom_call.1} parent=1 // pred_check
      _
    $region95: #{tpu_custom_call.1} parent=1 // pred_check_branch
      %174 = sbr.rel (0) target = $region97
    $region96: #{tpu_custom_call.1} parent=1 // pred_region
      %175 = dma.done [#allocation15], 6144
    $region97: #{tpu_custom_call.1} parent=1 // pred_fallthru
      _
    // Predicated region
    $region98: #{tpu_custom_call.1} parent=1 // pred_check
      _
    $region99: #{tpu_custom_call.1} parent=1 // pred_check_branch
      %177 = sbr.rel (0) target = $region101
    $region100: #{tpu_custom_call.1} parent=1 // pred_region
      %178 = dma.done [#allocation15], 2048
    $region101: #{tpu_custom_call.1} parent=1 // pred_fallthru
      _
    %v179 = vld [vmem:[#allocation2] sm:$0xff]
    %v180 = vld [vmem:[#allocation5] sm:$0xff]
    %v181 = vadd.f32 %v179, %v180
    %v182 = vld [vmem:[#allocation7] sm:$0xff]
    %v183 = vld [vmem:[#allocation7 + $0x8] sm:$0xff]
    %v184 = vld [vmem:[#allocation7 + $0x10] sm:$0xff]
    %v185 = vld [vmem:[#allocation7 + $0x18] sm:$0xff]
    %v186 = vld [vmem:[#allocation7 + $0x20] sm:$0xff]
    %v187 = vld [vmem:[#allocation7 + $0x28] sm:$0xff]
    %v188 = vld [vmem:[#allocation7 + $0x30] sm:$0xff]
    %v189 = vld [vmem:[#allocation7 + $0x38] sm:$0xff]
    %v190 = vld [vmem:[#allocation7 + $0x40] sm:$0xff]
    %v191 = vld [vmem:[#allocation7 + $0x48] sm:$0xff]
    %v192 = vld [vmem:[#allocation7 + $0x50] sm:$0xff]
    %v193 = vld [vmem:[#allocation7 + $0x58] sm:$0xff]
    %v194 = vld [vmem:[#allocation7 + $0x60] sm:$0xff]
    %v195 = vld [vmem:[#allocation7 + $0x68] sm:$0xff]
    %v196 = vld [vmem:[#allocation7 + $0x70] sm:$0xff]
    %v197 = vld [vmem:[#allocation7 + $0x78] sm:$0xff]
    %v198 = vld [vmem:[%s3] sm:$0x1]
    %v200 = vlaneseq
    %v201 = vshrl.u32 %v200, 7
    %v202 = vsub.s32 0, %v201
    %v203 = vrot.slane %v198, %v202
    %205 = vmatprep.subr.mxu0 0.0
    %206 = vmatpush1.msra.mxu0 %v182
    %207 = vmatprep.subr.mxu0 0.0
    %208 = vmatpush1.msra.mxu0 %v183
    %209 = vmatprep.subr.mxu0 0.0
    %210 = vmatpush1.msra.mxu0 %v184
    %211 = vmatprep.subr.mxu0 0.0
    %212 = vmatpush1.msra.mxu0 %v185
    %213 = vmatprep.subr.mxu0 0.0
    %214 = vmatpush1.msra.mxu0 %v186
    %215 = vmatprep.subr.mxu0 0.0
    %216 = vmatpush1.msra.mxu0 %v187
    %217 = vmatprep.subr.mxu0 0.0
    %218 = vmatpush1.msra.mxu0 %v188
    %219 = vmatprep.subr.mxu0 0.0
    %220 = vmatpush1.msra.mxu0 %v189
    %221 = vmatprep.subr.mxu0 0.0
    %222 = vmatpush1.msra.mxu0 %v190
    %223 = vmatprep.subr.mxu0 0.0
    %224 = vmatpush1.msra.mxu0 %v191
    %225 = vmatprep.subr.mxu0 0.0
    %226 = vmatpush1.msra.mxu0 %v192
    %227 = vmatprep.subr.mxu0 0.0
    %228 = vmatpush1.msra.mxu0 %v193
    %229 = vmatprep.subr.mxu0 0.0
    %230 = vmatpush1.msra.mxu0 %v194
    %231 = vmatprep.subr.mxu0 0.0
    %232 = vmatpush1.msra.mxu0 %v195
    %233 = vmatprep.subr.mxu0 0.0
    %234 = vmatpush1.msra.mxu0 %v196
    %235 = vmatprep.subr.mxu0 0.0
    %236 = vmatpush1.msra.mxu0 %v197
    %237 = vmatprep.subr.mxu0 0.0
    %238 = vmatpush1.msra.mxu0 0.0
    %239 = vmatprep.subr.mxu0 0.0
    %240 = vmatpush1.msra.mxu0 0.0
    %241 = vmatprep.subr.mxu0 0.0
    %242 = vmatpush1.msra.mxu0 0.0
    %243 = vmatprep.subr.mxu0 0.0
    %244 = vmatpush1.msra.mxu0 0.0
    %245 = vmatprep.subr.mxu0 0.0
    %246 = vmatpush1.msra.mxu0 0.0
    %247 = vmatprep.subr.mxu0 0.0
    %248 = vmatpush1.msra.mxu0 0.0
    %249 = vmatprep.subr.mxu0 0.0
    %250 = vmatpush1.msra.mxu0 0.0
    %251 = vmatprep.subr.mxu0 0.0
    %252 = vmatpush1.msra.mxu0 0.0
    %253 = vmatprep.subr.mxu0 0.0
    %254 = vmatpush1.msra.mxu0 0.0
    %255 = vmatprep.subr.mxu0 0.0
    %256 = vmatpush1.msra.mxu0 0.0
    %257 = vmatprep.subr.mxu0 0.0
    %258 = vmatpush1.msra.mxu0 0.0
    %259 = vmatprep.subr.mxu0 0.0
    %260 = vmatpush1.msra.mxu0 0.0
    %261 = vmatprep.subr.mxu0 0.0
    %262 = vmatpush1.msra.mxu0 0.0
    %263 = vmatprep.subr.mxu0 0.0
    %264 = vmatpush1.msra.mxu0 0.0
    %265 = vmatprep.subr.mxu0 0.0
    %266 = vmatpush1.msra.mxu0 0.0
    %267 = vmatprep.subr.mxu0 0.0
    %268 = vmatpush1.msra.mxu0 0.0
    %269 = vmatprep.mubr.f32.mxu0 0.0
    %270 = vmatmul.mubr.f32.gmra.mrb[0].mxu0 %v181
    %v271 = vpop.f32.mrb[0].mxu0
    %v272 = vadd.f32 %v203, %v271
    %v273 = vpop.f32.mrb[0].mxu0
    %274 = vdwg.mxu0
    %v275 = vmax.f32 %v272, 0.0
    %276 = vmatprep.subr.mxu0 0.0
    %277 = vmatpush1.msra.mxu0 %v182
    %278 = vmatprep.subr.mxu0 0.0
    %279 = vmatpush1.msra.mxu0 %v183
    %280 = vmatprep.subr.mxu0 0.0
    %281 = vmatpush1.msra.mxu0 %v184
    %282 = vmatprep.subr.mxu0 0.0
    %283 = vmatpush1.msra.mxu0 %v185
    %284 = vmatprep.subr.mxu0 0.0
    %285 = vmatpush1.msra.mxu0 %v186
    %286 = vmatprep.subr.mxu0 0.0
    %287 = vmatpush1.msra.mxu0 %v187
    %288 = vmatprep.subr.mxu0 0.0
    %289 = vmatpush1.msra.mxu0 %v188
    %290 = vmatprep.subr.mxu0 0.0
    %291 = vmatpush1.msra.mxu0 %v189
    %292 = vmatprep.subr.mxu0 0.0
    %293 = vmatpush1.msra.mxu0 %v190
    %294 = vmatprep.subr.mxu0 0.0
    %295 = vmatpush1.msra.mxu0 %v191
    %296 = vmatprep.subr.mxu0 0.0
    %297 = vmatpush1.msra.mxu0 %v192
    %298 = vmatprep.subr.mxu0 0.0
    %299 = vmatpush1.msra.mxu0 %v193
    %300 = vmatprep.subr.mxu0 0.0
    %301 = vmatpush1.msra.mxu0 %v194
    %302 = vmatprep.subr.mxu0 0.0
    %303 = vmatpush1.msra.mxu0 %v195
    %304 = vmatprep.subr.mxu0 0.0
    %305 = vmatpush1.msra.mxu0 %v196
    %306 = vmatprep.subr.mxu0 0.0
    %307 = vmatpush1.msra.mxu0 %v197
    %308 = vmatprep.subr.mxu0 0.0
    %309 = vmatpush1.msra.mxu0 0.0
    %310 = vmatprep.subr.mxu0 0.0
    %311 = vmatpush1.msra.mxu0 0.0
    %312 = vmatprep.subr.mxu0 0.0
    %313 = vmatpush1.msra.mxu0 0.0
    %314 = vmatprep.subr.mxu0 0.0
    %315 = vmatpush1.msra.mxu0 0.0
    %316 = vmatprep.subr.mxu0 0.0
    %317 = vmatpush1.msra.mxu0 0.0
    %318 = vmatprep.subr.mxu0 0.0
    %319 = vmatpush1.msra.mxu0 0.0
    %320 = vmatprep.subr.mxu0 0.0
    %321 = vmatpush1.msra.mxu0 0.0
    %322 = vmatprep.subr.mxu0 0.0
    %323 = vmatpush1.msra.mxu0 0.0
    %324 = vmatprep.subr.mxu0 0.0
    %325 = vmatpush1.msra.mxu0 0.0
    %326 = vmatprep.subr.mxu0 0.0
    %327 = vmatpush1.msra.mxu0 0.0
    %328 = vmatprep.subr.mxu0 0.0
    %329 = vmatpush1.msra.mxu0 0.0
    %330 = vmatprep.subr.mxu0 0.0
    %331 = vmatpush1.msra.mxu0 0.0
    %332 = vmatprep.subr.mxu0 0.0
    %333 = vmatpush1.msra.mxu0 0.0
    %334 = vmatprep.subr.mxu0 0.0
    %335 = vmatpush1.msra.mxu0 0.0
    %336 = vmatprep.subr.mxu0 0.0
    %337 = vmatpush1.msra.mxu0 0.0
    %338 = vmatprep.subr.mxu0 0.0
    %339 = vmatpush1.msra.mxu0 0.0
    %340 = vmatprep.mubr.f32.mxu0 0.0
    %341 = vmatmul.mubr.f32.gmra.mrb[0].mxu0 %v179
    %v342 = vpop.f32.mrb[0].mxu0
    %v343 = vadd.f32 %v203, %v342
    %v344 = vpop.f32.mrb[0].mxu0
    %345 = vdwg.mxu0
    %v346 = vmax.f32 %v343, 0.0
    %v347 = vld [vmem:[#allocation8] sm:$0xff]
    %v348 = vld [vmem:[#allocation8 + $0x8] sm:$0xff]
    %v349 = vld [vmem:[#allocation8 + $0x10] sm:$0xff]
    %v350 = vld [vmem:[#allocation8 + $0x18] sm:$0xff]
    %v351 = vld [vmem:[#allocation8 + $0x20] sm:$0xff]
    %v352 = vld [vmem:[#allocation8 + $0x28] sm:$0xff]
    %v353 = vld [vmem:[#allocation8 + $0x30] sm:$0xff]
    %v354 = vld [vmem:[#allocation8 + $0x38] sm:$0xff]
    %v355 = vld [vmem:[#allocation8 + $0x40] sm:$0xff]
    %v356 = vld [vmem:[#allocation8 + $0x48] sm:$0xff]
    %v357 = vld [vmem:[#allocation8 + $0x50] sm:$0xff]
    %v358 = vld [vmem:[#allocation8 + $0x58] sm:$0xff]
    %v359 = vld [vmem:[#allocation8 + $0x60] sm:$0xff]
    %v360 = vld [vmem:[#allocation8 + $0x68] sm:$0xff]
    %v361 = vld [vmem:[#allocation8 + $0x70] sm:$0xff]
    %v362 = vld [vmem:[#allocation8 + $0x78] sm:$0xff]
    %v363 = vld [vmem:[%s5] sm:$0x1]
    %v365 = vlaneseq
    %v366 = vshrl.u32 %v365, 7
    %v367 = vsub.s32 0, %v366
    %v368 = vrot.slane %v363, %v367
    %370 = vmatprep.subr.mxu0 0.0
    %371 = vmatpush1.msra.mxu0 %v347
    %372 = vmatprep.subr.mxu0 0.0
    %373 = vmatpush1.msra.mxu0 %v348
    %374 = vmatprep.subr.mxu0 0.0
    %375 = vmatpush1.msra.mxu0 %v349
    %376 = vmatprep.subr.mxu0 0.0
    %377 = vmatpush1.msra.mxu0 %v350
    %378 = vmatprep.subr.mxu0 0.0
    %379 = vmatpush1.msra.mxu0 %v351
    %380 = vmatprep.subr.mxu0 0.0
    %381 = vmatpush1.msra.mxu0 %v352
    %382 = vmatprep.subr.mxu0 0.0
    %383 = vmatpush1.msra.mxu0 %v353
    %384 = vmatprep.subr.mxu0 0.0
    %385 = vmatpush1.msra.mxu0 %v354
    %386 = vmatprep.subr.mxu0 0.0
    %387 = vmatpush1.msra.mxu0 %v355
    %388 = vmatprep.subr.mxu0 0.0
    %389 = vmatpush1.msra.mxu0 %v356
    %390 = vmatprep.subr.mxu0 0.0
    %391 = vmatpush1.msra.mxu0 %v357
    %392 = vmatprep.subr.mxu0 0.0
    %393 = vmatpush1.msra.mxu0 %v358
    %394 = vmatprep.subr.mxu0 0.0
    %395 = vmatpush1.msra.mxu0 %v359
    %396 = vmatprep.subr.mxu0 0.0
    %397 = vmatpush1.msra.mxu0 %v360
    %398 = vmatprep.subr.mxu0 0.0
    %399 = vmatpush1.msra.mxu0 %v361
    %400 = vmatprep.subr.mxu0 0.0
    %401 = vmatpush1.msra.mxu0 %v362
    %402 = vmatprep.subr.mxu0 0.0
    %403 = vmatpush1.msra.mxu0 0.0
    %404 = vmatprep.subr.mxu0 0.0
    %405 = vmatpush1.msra.mxu0 0.0
    %406 = vmatprep.subr.mxu0 0.0
    %407 = vmatpush1.msra.mxu0 0.0
    %408 = vmatprep.subr.mxu0 0.0
    %409 = vmatpush1.msra.mxu0 0.0
    %410 = vmatprep.subr.mxu0 0.0
    %411 = vmatpush1.msra.mxu0 0.0
    %412 = vmatprep.subr.mxu0 0.0
    %413 = vmatpush1.msra.mxu0 0.0
    %414 = vmatprep.subr.mxu0 0.0
    %415 = vmatpush1.msra.mxu0 0.0
    %416 = vmatprep.subr.mxu0 0.0
    %417 = vmatpush1.msra.mxu0 0.0
    %418 = vmatprep.subr.mxu0 0.0
    %419 = vmatpush1.msra.mxu0 0.0
    %420 = vmatprep.subr.mxu0 0.0
    %421 = vmatpush1.msra.mxu0 0.0
    %422 = vmatprep.subr.mxu0 0.0
    %423 = vmatpush1.msra.mxu0 0.0
    %424 = vmatprep.subr.mxu0 0.0
    %425 = vmatpush1.msra.mxu0 0.0
    %426 = vmatprep.subr.mxu0 0.0
    %427 = vmatpush1.msra.mxu0 0.0
    %428 = vmatprep.subr.mxu0 0.0
    %429 = vmatpush1.msra.mxu0 0.0
    %430 = vmatprep.subr.mxu0 0.0
    %431 = vmatpush1.msra.mxu0 0.0
    %432 = vmatprep.subr.mxu0 0.0
    %433 = vmatpush1.msra.mxu0 0.0
    %434 = vmatprep.mubr.f32.mxu0 0.0
    %435 = vmatmul.mubr.f32.gmra.mrb[0].mxu0 %v275
    %v436 = vpop.f32.mrb[0].mxu0
    %v437 = vadd.f32 %v368, %v436
    %v438 = vpop.f32.mrb[0].mxu0
    %439 = vmatprep.mubr.f32.mxu0 0.0
    %440 = vmatmul.mubr.f32.gmra.mrb[0].mxu0 %v346
    %v441 = vpop.f32.mrb[0].mxu0
    %v442 = vadd.f32 %v368, %v441
    %v443 = vpop.f32.mrb[0].mxu0
    %444 = vdwg.mxu0
    %v445 = vmax.f32 %v437, 0.0
    %v446 = vmax.f32 %v442, 0.0
    %v447 = vld [vmem:[#allocation10] sm:$0xff]
    %v448 = vld [vmem:[#allocation10 + $0x8] sm:$0xff]
    %v449 = vld [vmem:[#allocation10 + $0x10] sm:$0xff]
    %v450 = vld [vmem:[#allocation10 + $0x18] sm:$0xff]
    %v451 = vld [vmem:[#allocation10 + $0x20] sm:$0xff]
    %v452 = vld [vmem:[#allocation10 + $0x28] sm:$0xff]
    %v453 = vld [vmem:[#allocation10 + $0x30] sm:$0xff]
    %v454 = vld [vmem:[#allocation10 + $0x38] sm:$0xff]
    %v455 = vld [vmem:[#allocation10 + $0x40] sm:$0xff]
    %v456 = vld [vmem:[#allocation10 + $0x48] sm:$0xff]
    %v457 = vld [vmem:[#allocation10 + $0x50] sm:$0xff]
    %v458 = vld [vmem:[#allocation10 + $0x58] sm:$0xff]
    %v459 = vld [vmem:[#allocation10 + $0x60] sm:$0xff]
    %v460 = vld [vmem:[#allocation10 + $0x68] sm:$0xff]
    %v461 = vld [vmem:[#allocation10 + $0x70] sm:$0xff]
    %v462 = vld [vmem:[#allocation10 + $0x78] sm:$0xff]
    %v463 = vld [vmem:[%s7] sm:$0x1]
    %v465 = vlaneseq
    %v466 = vshrl.u32 %v465, 7
    %v467 = vsub.s32 0, %v466
    %v468 = vrot.slane %v463, %v467
    %470 = vmatprep.subr.mxu0 0.0
    %471 = vmatpush1.msra.mxu0 %v447
    %472 = vmatprep.subr.mxu0 0.0
    %473 = vmatpush1.msra.mxu0 %v448
    %474 = vmatprep.subr.mxu0 0.0
    %475 = vmatpush1.msra.mxu0 %v449
    %476 = vmatprep.subr.mxu0 0.0
    %477 = vmatpush1.msra.mxu0 %v450
    %478 = vmatprep.subr.mxu0 0.0
    %479 = vmatpush1.msra.mxu0 %v451
    %480 = vmatprep.subr.mxu0 0.0
    %481 = vmatpush1.msra.mxu0 %v452
    %482 = vmatprep.subr.mxu0 0.0
    %483 = vmatpush1.msra.mxu0 %v453
    %484 = vmatprep.subr.mxu0 0.0
    %485 = vmatpush1.msra.mxu0 %v454
    %486 = vmatprep.subr.mxu0 0.0
    %487 = vmatpush1.msra.mxu0 %v455
    %488 = vmatprep.subr.mxu0 0.0
    %489 = vmatpush1.msra.mxu0 %v456
    %490 = vmatprep.subr.mxu0 0.0
    %491 = vmatpush1.msra.mxu0 %v457
    %492 = vmatprep.subr.mxu0 0.0
    %493 = vmatpush1.msra.mxu0 %v458
    %494 = vmatprep.subr.mxu0 0.0
    %495 = vmatpush1.msra.mxu0 %v459
    %496 = vmatprep.subr.mxu0 0.0
    %497 = vmatpush1.msra.mxu0 %v460
    %498 = vmatprep.subr.mxu0 0.0
    %499 = vmatpush1.msra.mxu0 %v461
    %500 = vmatprep.subr.mxu0 0.0
    %501 = vmatpush1.msra.mxu0 %v462
    %502 = vmatprep.subr.mxu0 0.0
    %503 = vmatpush1.msra.mxu0 0.0
    %504 = vmatprep.subr.mxu0 0.0
    %505 = vmatpush1.msra.mxu0 0.0
    %506 = vmatprep.subr.mxu0 0.0
    %507 = vmatpush1.msra.mxu0 0.0
    %508 = vmatprep.subr.mxu0 0.0
    %509 = vmatpush1.msra.mxu0 0.0
    %510 = vmatprep.subr.mxu0 0.0
    %511 = vmatpush1.msra.mxu0 0.0
    %512 = vmatprep.subr.mxu0 0.0
    %513 = vmatpush1.msra.mxu0 0.0
    %514 = vmatprep.subr.mxu0 0.0
    %515 = vmatpush1.msra.mxu0 0.0
    %516 = vmatprep.subr.mxu0 0.0
    %517 = vmatpush1.msra.mxu0 0.0
    %518 = vmatprep.subr.mxu0 0.0
    %519 = vmatpush1.msra.mxu0 0.0
    %520 = vmatprep.subr.mxu0 0.0
    %521 = vmatpush1.msra.mxu0 0.0
    %522 = vmatprep.subr.mxu0 0.0
    %523 = vmatpush1.msra.mxu0 0.0
    %524 = vmatprep.subr.mxu0 0.0
    %525 = vmatpush1.msra.mxu0 0.0
    %526 = vmatprep.subr.mxu0 0.0
    %527 = vmatpush1.msra.mxu0 0.0
    %528 = vmatprep.subr.mxu0 0.0
    %529 = vmatpush1.msra.mxu0 0.0
    %530 = vmatprep.subr.mxu0 0.0
    %531 = vmatpush1.msra.mxu0 0.0
    %532 = vmatprep.subr.mxu0 0.0
    %533 = vmatpush1.msra.mxu0 0.0
    %534 = vmatprep.mubr.f32.mxu0 0.0
    %535 = vmatmul.mubr.f32.gmra.mrb[0].mxu0 %v445
    %v536 = vpop.f32.mrb[0].mxu0
    %v537 = vadd.f32 %v468, %v536
    %v538 = vpop.f32.mrb[0].mxu0
    %539 = vmatprep.mubr.f32.mxu0 0.0
    %540 = vmatmul.mubr.f32.gmra.mrb[0].mxu0 %v446
    %v541 = vpop.f32.mrb[0].mxu0
    %v542 = vadd.f32 %v468, %v541
    %v543 = vpop.f32.mrb[0].mxu0
    %544 = vdwg.mxu0
    %v545 = vld [vmem:[#allocation11] sm:$0xff]
    %v546 = vld [vmem:[#allocation11 + $0x8] sm:$0xff]
    %v547 = vld [vmem:[#allocation11 + $0x10] sm:$0xff]
    %v548 = vld [vmem:[#allocation11 + $0x18] sm:$0xff]
    %v549 = vld [vmem:[#allocation11 + $0x20] sm:$0xff]
    %v550 = vld [vmem:[#allocation11 + $0x28] sm:$0xff]
    %v551 = vld [vmem:[#allocation11 + $0x30] sm:$0xff]
    %v552 = vld [vmem:[#allocation11 + $0x38] sm:$0xff]
    %v553 = vld [vmem:[#allocation11 + $0x40] sm:$0xff]
    %v554 = vld [vmem:[#allocation11 + $0x48] sm:$0xff]
    %v555 = vld [vmem:[#allocation11 + $0x50] sm:$0xff]
    %v556 = vld [vmem:[#allocation11 + $0x58] sm:$0xff]
    %v557 = vld [vmem:[#allocation11 + $0x60] sm:$0xff]
    %v558 = vld [vmem:[#allocation11 + $0x68] sm:$0xff]
    %v559 = vld [vmem:[#allocation11 + $0x70] sm:$0xff]
    %v560 = vld [vmem:[#allocation11 + $0x78] sm:$0xff]
    %v561 = vld [vmem:[%s9] sm:$0x1]
    %v563 = vlaneseq
    %v564 = vshrl.u32 %v563, 7
    %v565 = vsub.s32 0, %v564
    %v566 = vrot.slane %v561, %v565
    %568 = vmatprep.subr.mxu0 0.0
    %569 = vmatpush1.msra.mxu0 %v545
    %570 = vmatprep.subr.mxu0 0.0
    %571 = vmatpush1.msra.mxu0 %v546
    %572 = vmatprep.subr.mxu0 0.0
    %573 = vmatpush1.msra.mxu0 %v547
    %574 = vmatprep.subr.mxu0 0.0
    %575 = vmatpush1.msra.mxu0 %v548
    %576 = vmatprep.subr.mxu0 0.0
    %577 = vmatpush1.msra.mxu0 %v549
    %578 = vmatprep.subr.mxu0 0.0
    %579 = vmatpush1.msra.mxu0 %v550
    %580 = vmatprep.subr.mxu0 0.0
    %581 = vmatpush1.msra.mxu0 %v551
    %582 = vmatprep.subr.mxu0 0.0
    %583 = vmatpush1.msra.mxu0 %v552
    %584 = vmatprep.subr.mxu0 0.0
    %585 = vmatpush1.msra.mxu0 %v553
    %586 = vmatprep.subr.mxu0 0.0
    %587 = vmatpush1.msra.mxu0 %v554
    %588 = vmatprep.subr.mxu0 0.0
    %589 = vmatpush1.msra.mxu0 %v555
    %590 = vmatprep.subr.mxu0 0.0
    %591 = vmatpush1.msra.mxu0 %v556
    %592 = vmatprep.subr.mxu0 0.0
    %593 = vmatpush1.msra.mxu0 %v557
    %594 = vmatprep.subr.mxu0 0.0
    %595 = vmatpush1.msra.mxu0 %v558
    %596 = vmatprep.subr.mxu0 0.0
    %597 = vmatpush1.msra.mxu0 %v559
    %598 = vmatprep.subr.mxu0 0.0
    %599 = vmatpush1.msra.mxu0 %v560
    %600 = vmatprep.subr.mxu0 0.0
    %601 = vmatpush1.msra.mxu0 0.0
    %602 = vmatprep.subr.mxu0 0.0
    %603 = vmatpush1.msra.mxu0 0.0
    %604 = vmatprep.subr.mxu0 0.0
    %605 = vmatpush1.msra.mxu0 0.0
    %606 = vmatprep.subr.mxu0 0.0
    %607 = vmatpush1.msra.mxu0 0.0
    %608 = vmatprep.subr.mxu0 0.0
    %609 = vmatpush1.msra.mxu0 0.0
    %610 = vmatprep.subr.mxu0 0.0
    %611 = vmatpush1.msra.mxu0 0.0
    %612 = vmatprep.subr.mxu0 0.0
    %613 = vmatpush1.msra.mxu0 0.0
    %614 = vmatprep.subr.mxu0 0.0
    %615 = vmatpush1.msra.mxu0 0.0
    %616 = vmatprep.subr.mxu0 0.0
    %617 = vmatpush1.msra.mxu0 0.0
    %618 = vmatprep.subr.mxu0 0.0
    %619 = vmatpush1.msra.mxu0 0.0
    %620 = vmatprep.subr.mxu0 0.0
    %621 = vmatpush1.msra.mxu0 0.0
    %622 = vmatprep.subr.mxu0 0.0
    %623 = vmatpush1.msra.mxu0 0.0
    %624 = vmatprep.subr.mxu0 0.0
    %625 = vmatpush1.msra.mxu0 0.0
    %626 = vmatprep.subr.mxu0 0.0
    %627 = vmatpush1.msra.mxu0 0.0
    %628 = vmatprep.subr.mxu0 0.0
    %629 = vmatpush1.msra.mxu0 0.0
    %630 = vmatprep.subr.mxu0 0.0
    %631 = vmatpush1.msra.mxu0 0.0
    %632 = vmatprep.mubr.f32.mxu0 0.0
    %633 = vmatmul.mubr.f32.gmra.mrb[0].mxu0 %v537
    %v634 = vpop.f32.mrb[0].mxu0
    %v635 = vadd.f32 %v566, %v634
    %v636 = vpop.f32.mrb[0].mxu0
    %637 = vdwg.mxu0
    %v638 = vmax.f32 %v635, 0.0
    %v639 = vld [vmem:[#allocation13] sm:$0xff]
    %v640 = vld [vmem:[#allocation13 + $0x8] sm:$0xff]
    %v641 = vld [vmem:[#allocation13 + $0x10] sm:$0xff]
    %v642 = vld [vmem:[#allocation13 + $0x18] sm:$0xff]
    %v643 = vld [vmem:[#allocation13 + $0x20] sm:$0xff]
    %v644 = vld [vmem:[#allocation13 + $0x28] sm:$0xff]
    %v645 = vld [vmem:[#allocation13 + $0x30] sm:$0xff]
    %v646 = vld [vmem:[#allocation13 + $0x38] sm:$0xff]
    %v647 = vld [vmem:[#allocation13 + $0x40] sm:$0xff]
    %v648 = vld [vmem:[#allocation13 + $0x48] sm:$0xff]
    %v649 = vld [vmem:[#allocation13 + $0x50] sm:$0xff]
    %v650 = vld [vmem:[#allocation13 + $0x58] sm:$0xff]
    %v651 = vld [vmem:[#allocation13 + $0x60] sm:$0xff]
    %v652 = vld [vmem:[#allocation13 + $0x68] sm:$0xff]
    %v653 = vld [vmem:[#allocation13 + $0x70] sm:$0xff]
    %v654 = vld [vmem:[#allocation13 + $0x78] sm:$0xff]
    %v655 = vld [vmem:[%s11] sm:$0x1]
    %v657 = vlaneseq
    %v658 = vshrl.u32 %v657, 7
    %v659 = vsub.s32 0, %v658
    %v660 = vrot.slane %v655, %v659
    %662 = vmatprep.subr.mxu0 0.0
    %663 = vmatpush1.msra.mxu0 %v639
    %664 = vmatprep.subr.mxu0 0.0
    %665 = vmatpush1.msra.mxu0 %v640
    %666 = vmatprep.subr.mxu0 0.0
    %667 = vmatpush1.msra.mxu0 %v641
    %668 = vmatprep.subr.mxu0 0.0
    %669 = vmatpush1.msra.mxu0 %v642
    %670 = vmatprep.subr.mxu0 0.0
    %671 = vmatpush1.msra.mxu0 %v643
    %672 = vmatprep.subr.mxu0 0.0
    %673 = vmatpush1.msra.mxu0 %v644
    %674 = vmatprep.subr.mxu0 0.0
    %675 = vmatpush1.msra.mxu0 %v645
    %676 = vmatprep.subr.mxu0 0.0
    %677 = vmatpush1.msra.mxu0 %v646
    %678 = vmatprep.subr.mxu0 0.0
    %679 = vmatpush1.msra.mxu0 %v647
    %680 = vmatprep.subr.mxu0 0.0
    %681 = vmatpush1.msra.mxu0 %v648
    %682 = vmatprep.subr.mxu0 0.0
    %683 = vmatpush1.msra.mxu0 %v649
    %684 = vmatprep.subr.mxu0 0.0
    %685 = vmatpush1.msra.mxu0 %v650
    %686 = vmatprep.subr.mxu0 0.0
    %687 = vmatpush1.msra.mxu0 %v651
    %688 = vmatprep.subr.mxu0 0.0
    %689 = vmatpush1.msra.mxu0 %v652
    %690 = vmatprep.subr.mxu0 0.0
    %691 = vmatpush1.msra.mxu0 %v653
    %692 = vmatprep.subr.mxu0 0.0
    %693 = vmatpush1.msra.mxu0 %v654
    %694 = vmatprep.subr.mxu0 0.0
    %695 = vmatpush1.msra.mxu0 0.0
    %696 = vmatprep.subr.mxu0 0.0
    %697 = vmatpush1.msra.mxu0 0.0
    %698 = vmatprep.subr.mxu0 0.0
    %699 = vmatpush1.msra.mxu0 0.0
    %700 = vmatprep.subr.mxu0 0.0
    %701 = vmatpush1.msra.mxu0 0.0
    %702 = vmatprep.subr.mxu0 0.0
    %703 = vmatpush1.msra.mxu0 0.0
    %704 = vmatprep.subr.mxu0 0.0
    %705 = vmatpush1.msra.mxu0 0.0
    %706 = vmatprep.subr.mxu0 0.0
    %707 = vmatpush1.msra.mxu0 0.0
    %708 = vmatprep.subr.mxu0 0.0
    %709 = vmatpush1.msra.mxu0 0.0
    %710 = vmatprep.subr.mxu0 0.0
    %711 = vmatpush1.msra.mxu0 0.0
    %712 = vmatprep.subr.mxu0 0.0
    %713 = vmatpush1.msra.mxu0 0.0
    %714 = vmatprep.subr.mxu0 0.0
    %715 = vmatpush1.msra.mxu0 0.0
    %716 = vmatprep.subr.mxu0 0.0
    %717 = vmatpush1.msra.mxu0 0.0
    %718 = vmatprep.subr.mxu0 0.0
    %719 = vmatpush1.msra.mxu0 0.0
    %720 = vmatprep.subr.mxu0 0.0
    %721 = vmatpush1.msra.mxu0 0.0
    %722 = vmatprep.subr.mxu0 0.0
    %723 = vmatpush1.msra.mxu0 0.0
    %724 = vmatprep.subr.mxu0 0.0
    %725 = vmatpush1.msra.mxu0 0.0
    %726 = vmatprep.mubr.f32.mxu0 0.0
    %727 = vmatmul.mubr.f32.gmra.mrb[0].mxu0 %v638
    %v728 = vpop.f32.mrb[0].mxu0
    %v729 = vadd.f32 %v660, %v728
    %v730 = vpop.f32.mrb[0].mxu0
    %731 = vdwg.mxu0
    %v732 = vmax.f32 %v729, 0.0
    %v733 = vld [vmem:[#allocation14] sm:$0xff]
    %v734 = vld [vmem:[#allocation14 + $0x8] sm:$0xff]
    %v735 = vld [vmem:[#allocation14 + $0x10] sm:$0xff]
    %v736 = vld [vmem:[#allocation14 + $0x18] sm:$0xff]
    %v737 = vld [vmem:[#allocation14 + $0x20] sm:$0xff]
    %v738 = vld [vmem:[#allocation14 + $0x28] sm:$0xff]
    %v739 = vld [vmem:[#allocation14 + $0x30] sm:$0xff]
    %v740 = vld [vmem:[#allocation14 + $0x38] sm:$0xff]
    %v741 = vld [vmem:[#allocation14 + $0x40] sm:$0xff]
    %v742 = vld [vmem:[#allocation14 + $0x48] sm:$0xff]
    %v743 = vld [vmem:[#allocation14 + $0x50] sm:$0xff]
    %v744 = vld [vmem:[#allocation14 + $0x58] sm:$0xff]
    %v745 = vld [vmem:[#allocation14 + $0x60] sm:$0xff]
    %v746 = vld [vmem:[#allocation14 + $0x68] sm:$0xff]
    %v747 = vld [vmem:[#allocation14 + $0x70] sm:$0xff]
    %v748 = vld [vmem:[#allocation14 + $0x78] sm:$0xff]
    %v749 = vld [vmem:[#allocation14 + $0x80] sm:$0xff]
    %v750 = vld [vmem:[#allocation14 + $0x88] sm:$0xff]
    %v751 = vld [vmem:[#allocation14 + $0x90] sm:$0xff]
    %v752 = vld [vmem:[#allocation14 + $0x98] sm:$0xff]
    %v753 = vld [vmem:[#allocation14 + $0xa0] sm:$0xff]
    %v754 = vld [vmem:[#allocation14 + $0xa8] sm:$0xff]
    %v755 = vld [vmem:[#allocation14 + $0xb0] sm:$0xff]
    %v756 = vld [vmem:[#allocation14 + $0xb8] sm:$0xff]
    %v757 = vld [vmem:[#allocation14 + $0xc0] sm:$0xff]
    %v758 = vld [vmem:[#allocation14 + $0xc8] sm:$0xff]
    %v759 = vld [vmem:[#allocation14 + $0xd0] sm:$0xff]
    %v760 = vld [vmem:[#allocation14 + $0xd8] sm:$0xff]
    %v761 = vld [vmem:[#allocation14 + $0xe0] sm:$0xff]
    %v762 = vld [vmem:[#allocation14 + $0xe8] sm:$0xff]
    %v763 = vld [vmem:[#allocation14 + $0xf0] sm:$0xff]
    %v764 = vld [vmem:[#allocation14 + $0xf8] sm:$0xff]
    %v765 = vld [vmem:[#allocation14 + $0x100] sm:$0xff]
    %v766 = vld [vmem:[#allocation14 + $0x108] sm:$0xff]
    %v767 = vld [vmem:[#allocation14 + $0x110] sm:$0xff]
    %v768 = vld [vmem:[#allocation14 + $0x118] sm:$0xff]
    %v769 = vld [vmem:[#allocation14 + $0x120] sm:$0xff]
    %v770 = vld [vmem:[#allocation14 + $0x128] sm:$0xff]
    %v771 = vld [vmem:[#allocation14 + $0x130] sm:$0xff]
    %v772 = vld [vmem:[#allocation14 + $0x138] sm:$0xff]
    %v773 = vld [vmem:[#allocation14 + $0x140] sm:$0xff]
    %v774 = vld [vmem:[#allocation14 + $0x148] sm:$0xff]
    %v775 = vld [vmem:[#allocation14 + $0x150] sm:$0xff]
    %v776 = vld [vmem:[#allocation14 + $0x158] sm:$0xff]
    %v777 = vld [vmem:[#allocation14 + $0x160] sm:$0xff]
    %v778 = vld [vmem:[#allocation14 + $0x168] sm:$0xff]
    %v779 = vld [vmem:[#allocation14 + $0x170] sm:$0xff]
    %v780 = vld [vmem:[#allocation14 + $0x178] sm:$0xff]
    %v781 = vld [vmem:[%s13] sm:$0x7]
    %v783 = vlaneseq
    %v784 = vshrl.u32 %v783, 7
    %v785 = vsub.s32 0, %v784
    %v786 = vrot.slane %v781, %v785
    %v787 = vlaneseq
    %v788 = vshrl.u32 %v787, 7
    %v789 = vsub.s32 1, %v788
    %v790 = vrot.slane %v781, %v789
    %v791 = vlaneseq
    %v792 = vshrl.u32 %v791, 7
    %v793 = vsub.s32 2, %v792
    %v794 = vrot.slane %v781, %v793
    %798 = vmatprep.subr.mxu0 %v734
    %799 = vmatpush1.msra.mxu0 %v733
    %800 = vmatprep.subr.mxu0 %v737
    %801 = vmatpush1.msra.mxu0 %v736
    %802 = vmatprep.subr.mxu0 %v740
    %803 = vmatpush1.msra.mxu0 %v739
    %804 = vmatprep.subr.mxu0 %v743
    %805 = vmatpush1.msra.mxu0 %v742
    %806 = vmatprep.subr.mxu0 %v746
    %807 = vmatpush1.msra.mxu0 %v745
    %808 = vmatprep.subr.mxu0 %v749
    %809 = vmatpush1.msra.mxu0 %v748
    %810 = vmatprep.subr.mxu0 %v752
    %811 = vmatpush1.msra.mxu0 %v751
    %812 = vmatprep.subr.mxu0 %v755
    %813 = vmatpush1.msra.mxu0 %v754
    %814 = vmatprep.subr.mxu0 %v758
    %815 = vmatpush1.msra.mxu0 %v757
    %816 = vmatprep.subr.mxu0 %v761
    %817 = vmatpush1.msra.mxu0 %v760
    %818 = vmatprep.subr.mxu0 %v764
    %819 = vmatpush1.msra.mxu0 %v763
    %820 = vmatprep.subr.mxu0 %v767
    %821 = vmatpush1.msra.mxu0 %v766
    %822 = vmatprep.subr.mxu0 %v770
    %823 = vmatpush1.msra.mxu0 %v769
    %824 = vmatprep.subr.mxu0 %v773
    %825 = vmatpush1.msra.mxu0 %v772
    %826 = vmatprep.subr.mxu0 %v776
    %827 = vmatpush1.msra.mxu0 %v775
    %828 = vmatprep.subr.mxu0 %v779
    %829 = vmatpush1.msra.mxu0 %v778
    %830 = vmatprep.subr.mxu0 0.0
    %831 = vmatpush1.msra.mxu0 0.0
    %832 = vmatprep.subr.mxu0 0.0
    %833 = vmatpush1.msra.mxu0 0.0
    %834 = vmatprep.subr.mxu0 0.0
    %835 = vmatpush1.msra.mxu0 0.0
    %836 = vmatprep.subr.mxu0 0.0
    %837 = vmatpush1.msra.mxu0 0.0
    %838 = vmatprep.subr.mxu0 0.0
    %839 = vmatpush1.msra.mxu0 0.0
    %840 = vmatprep.subr.mxu0 0.0
    %841 = vmatpush1.msra.mxu0 0.0
    %842 = vmatprep.subr.mxu0 0.0
    %843 = vmatpush1.msra.mxu0 0.0
    %844 = vmatprep.subr.mxu0 0.0
    %845 = vmatpush1.msra.mxu0 0.0
    %846 = vmatprep.subr.mxu0 0.0
    %847 = vmatpush1.msra.mxu0 0.0
    %848 = vmatprep.subr.mxu0 0.0
    %849 = vmatpush1.msra.mxu0 0.0
    %850 = vmatprep.subr.mxu0 0.0
    %851 = vmatpush1.msra.mxu0 0.0
    %852 = vmatprep.subr.mxu0 0.0
    %853 = vmatpush1.msra.mxu0 0.0
    %854 = vmatprep.subr.mxu0 0.0
    %855 = vmatpush1.msra.mxu0 0.0
    %856 = vmatprep.subr.mxu0 0.0
    %857 = vmatpush1.msra.mxu0 0.0
    %858 = vmatprep.subr.mxu0 0.0
    %859 = vmatpush1.msra.mxu0 0.0
    %860 = vmatprep.subr.mxu0 0.0
    %861 = vmatpush1.msra.mxu0 0.0
    %862 = vmatprep.mubr.f32.mxu0 0.0
    %863 = vmatmul.mubr.f32.gmra.mrb[0].mxu0 %v732
    %v864 = vpop.f32.mrb[0].mxu0
    %v865 = vadd.f32 %v786, %v864
    %v866 = vpop.f32.mrb[0].mxu0
    %v867 = vadd.f32 %v790, %v866
    %868 = vdwg.mxu0
    %869 = vmatprep.subr.mxu0 0.0
    %870 = vmatpush1.msra.mxu0 %v735
    %871 = vmatprep.subr.mxu0 0.0
    %872 = vmatpush1.msra.mxu0 %v738
    %873 = vmatprep.subr.mxu0 0.0
    %874 = vmatpush1.msra.mxu0 %v741
    %875 = vmatprep.subr.mxu0 0.0
    %876 = vmatpush1.msra.mxu0 %v744
    %877 = vmatprep.subr.mxu0 0.0
    %878 = vmatpush1.msra.mxu0 %v747
    %879 = vmatprep.subr.mxu0 0.0
    %880 = vmatpush1.msra.mxu0 %v750
    %881 = vmatprep.subr.mxu0 0.0
    %882 = vmatpush1.msra.mxu0 %v753
    %883 = vmatprep.subr.mxu0 0.0
    %884 = vmatpush1.msra.mxu0 %v756
    %885 = vmatprep.subr.mxu0 0.0
    %886 = vmatpush1.msra.mxu0 %v759
    %887 = vmatprep.subr.mxu0 0.0
    %888 = vmatpush1.msra.mxu0 %v762
    %889 = vmatprep.subr.mxu0 0.0
    %890 = vmatpush1.msra.mxu0 %v765
    %891 = vmatprep.subr.mxu0 0.0
    %892 = vmatpush1.msra.mxu0 %v768
    %893 = vmatprep.subr.mxu0 0.0
    %894 = vmatpush1.msra.mxu0 %v771
    %895 = vmatprep.subr.mxu0 0.0
    %896 = vmatpush1.msra.mxu0 %v774
    %897 = vmatprep.subr.mxu0 0.0
    %898 = vmatpush1.msra.mxu0 %v777
    %899 = vmatprep.subr.mxu0 0.0
    %900 = vmatpush1.msra.mxu0 %v780
    %901 = vmatprep.subr.mxu0 0.0
    %902 = vmatpush1.msra.mxu0 0.0
    %903 = vmatprep.subr.mxu0 0.0
    %904 = vmatpush1.msra.mxu0 0.0
    %905 = vmatprep.subr.mxu0 0.0
    %906 = vmatpush1.msra.mxu0 0.0
    %907 = vmatprep.subr.mxu0 0.0
    %908 = vmatpush1.msra.mxu0 0.0
    %909 = vmatprep.subr.mxu0 0.0
    %910 = vmatpush1.msra.mxu0 0.0
    %911 = vmatprep.subr.mxu0 0.0
    %912 = vmatpush1.msra.mxu0 0.0
    %913 = vmatprep.subr.mxu0 0.0
    %914 = vmatpush1.msra.mxu0 0.0
    %915 = vmatprep.subr.mxu0 0.0
    %916 = vmatpush1.msra.mxu0 0.0
    %917 = vmatprep.subr.mxu0 0.0
    %918 = vmatpush1.msra.mxu0 0.0
    %919 = vmatprep.subr.mxu0 0.0
    %920 = vmatpush1.msra.mxu0 0.0
    %921 = vmatprep.subr.mxu0 0.0
    %922 = vmatpush1.msra.mxu0 0.0
    %923 = vmatprep.subr.mxu0 0.0
    %924 = vmatpush1.msra.mxu0 0.0
    %925 = vmatprep.subr.mxu0 0.0
    %926 = vmatpush1.msra.mxu0 0.0
    %927 = vmatprep.subr.mxu0 0.0
    %928 = vmatpush1.msra.mxu0 0.0
    %929 = vmatprep.subr.mxu0 0.0
    %930 = vmatpush1.msra.mxu0 0.0
    %931 = vmatprep.subr.mxu0 0.0
    %932 = vmatpush1.msra.mxu0 0.0
    %933 = vmatprep.mubr.f32.mxu0 0.0
    %934 = vmatmul.mubr.f32.gmra.mrb[0].mxu0 %v732
    %v935 = vpop.f32.mrb[0].mxu0
    %v936 = vadd.f32 %v794, %v935
    %v937 = vpop.f32.mrb[0].mxu0
    %938 = vdwg.mxu0
    %v939 = vmul.f32 %v865, 1.442695
    %v940 = vpow.pop %v939
    %v941 = vmax.f32 %v940, 1e-05
    %v942 = vmin.f32 %v941, 1000000.0
    %943 = vst [vmem:[#allocation20] sm:$0xff] %v942
    %v944 = vmax.f32 %v867, 0.0
    %vm945 = vcmp.ne.f32.partialorder %v867, %v867
    %v946 = vadd.f32 %v867, 0.0
    %v947 = vand.u32 2147483647, %v867
    %v948 = vsub.f32 0.0, %v947
    %v949 = vmul.f32 %v948, 1.442695
    %v950 = vpow.pop %v949
    %v951 = vadd.f32 %v950, 1.0
    %v952 = vlog2.pop %v951
    %v953 = vmul.f32 %v952, 0.6931472
    %v954 = vmul.f32 -0.5, %v950
    %v955 = vadd.f32 %v954, 1.0
    %v956 = vmul.f32 %v955, %v950
    %v957 = vand.u32 2147483647, %v950
    %vm958 = vcmp.lt.f32.partialorder %v957, 0.0004427343
    %v959 = vsel %vm958, %v956, %v953
    %v960 = vadd.f32 %v944, %v959
    %v961 = vsel %vm945, %v946, %v960
    %v962 = vmax.f32 %v961, 0.0001
    %v963 = vmin.f32 %v962, 10000.0
    %964 = vst [vmem:[#allocation21] sm:$0xff] %v963
    %v965 = vxor.u32 %v936, 2147483648
    %v966 = vmul.f32 %v965, 1.442695
    %v967 = vpow.pop %v966
    %v968 = vadd.f32 %v967, 1.0
    %v969 = vrcp.pop %v968
    %v970 = vmul.f32 1.0, %v969
    %971 = vst [vmem:[#allocation23] sm:$0xff] %v970
    %972 = vst [vmem:[#allocation17] sm:$0xff] %v542
    %v973 = vmul.f32 %v542, %v542
    %974 = vadd.xlane.f32.xlu0 %v973
    %v975 = vpop.xlane.xlu0 %974
    %v976 = vld [vmem:[#allocation16] sm:$0xff]
    %v977 = vld [vmem:[#allocation16 + $0x8] sm:$0xff]
    %v978 = vld [vmem:[#allocation16 + $0x10] sm:$0xff]
    %v979 = vld [vmem:[#allocation16 + $0x18] sm:$0xff]
    %v980 = vld [vmem:[#allocation16 + $0x20] sm:$0xff]
    %v981 = vld [vmem:[#allocation16 + $0x28] sm:$0xff]
    %v982 = vld [vmem:[#allocation16 + $0x30] sm:$0xff]
    %v983 = vld [vmem:[#allocation16 + $0x38] sm:$0xff]
    %v984 = vld [vmem:[#allocation16 + $0x40] sm:$0xff]
    %v985 = vld [vmem:[#allocation16 + $0x48] sm:$0xff]
    %v986 = vld [vmem:[#allocation16 + $0x50] sm:$0xff]
    %v987 = vld [vmem:[#allocation16 + $0x58] sm:$0xff]
    %v988 = vld [vmem:[#allocation16 + $0x60] sm:$0xff]
    %v989 = vld [vmem:[#allocation16 + $0x68] sm:$0xff]
    %v990 = vld [vmem:[#allocation16 + $0x70] sm:$0xff]
    %v991 = vld [vmem:[#allocation16 + $0x78] sm:$0xff]
    %992 = vmatprep.subr.mxu0 0.0
    %993 = vmatpush1.msra.mxu0 %v976
    %994 = vmatprep.subr.mxu0 0.0
    %995 = vmatpush1.msra.mxu0 %v977
    %996 = vmatprep.subr.mxu0 0.0
    %997 = vmatpush1.msra.mxu0 %v978
    %998 = vmatprep.subr.mxu0 0.0
    %999 = vmatpush1.msra.mxu0 %v979
    %1000 = vmatprep.subr.mxu0 0.0
    %1001 = vmatpush1.msra.mxu0 %v980
    %1002 = vmatprep.subr.mxu0 0.0
    %1003 = vmatpush1.msra.mxu0 %v981
    %1004 = vmatprep.subr.mxu0 0.0
    %1005 = vmatpush1.msra.mxu0 %v982
    %1006 = vmatprep.subr.mxu0 0.0
    %1007 = vmatpush1.msra.mxu0 %v983
    %1008 = vmatprep.subr.mxu0 0.0
    %1009 = vmatpush1.msra.mxu0 %v984
    %1010 = vmatprep.subr.mxu0 0.0
    %1011 = vmatpush1.msra.mxu0 %v985
    %1012 = vmatprep.subr.mxu0 0.0
    %1013 = vmatpush1.msra.mxu0 %v986
    %1014 = vmatprep.subr.mxu0 0.0
    %1015 = vmatpush1.msra.mxu0 %v987
    %1016 = vmatprep.subr.mxu0 0.0
    %1017 = vmatpush1.msra.mxu0 %v988
    %1018 = vmatprep.subr.mxu0 0.0
    %1019 = vmatpush1.msra.mxu0 %v989
    %1020 = vmatprep.subr.mxu0 0.0
    %1021 = vmatpush1.msra.mxu0 %v990
    %1022 = vmatprep.subr.mxu0 0.0
    %1023 = vmatpush1.msra.mxu0 %v991
    %1024 = vmatprep.subr.mxu0 0.0
    %1025 = vmatpush1.msra.mxu0 0.0
    %1026 = vmatprep.subr.mxu0 0.0
    %1027 = vmatpush1.msra.mxu0 0.0
    %1028 = vmatprep.subr.mxu0 0.0
    %1029 = vmatpush1.msra.mxu0 0.0
    %1030 = vmatprep.subr.mxu0 0.0
    %1031 = vmatpush1.msra.mxu0 0.0
    %1032 = vmatprep.subr.mxu0 0.0
    %1033 = vmatpush1.msra.mxu0 0.0
    %1034 = vmatprep.subr.mxu0 0.0
    %1035 = vmatpush1.msra.mxu0 0.0
    %1036 = vmatprep.subr.mxu0 0.0
    %1037 = vmatpush1.msra.mxu0 0.0
    %1038 = vmatprep.subr.mxu0 0.0
    %1039 = vmatpush1.msra.mxu0 0.0
    %1040 = vmatprep.subr.mxu0 0.0
    %1041 = vmatpush1.msra.mxu0 0.0
    %1042 = vmatprep.subr.mxu0 0.0
    %1043 = vmatpush1.msra.mxu0 0.0
    %1044 = vmatprep.subr.mxu0 0.0
    %1045 = vmatpush1.msra.mxu0 0.0
    %1046 = vmatprep.subr.mxu0 0.0
    %1047 = vmatpush1.msra.mxu0 0.0
    %1048 = vmatprep.subr.mxu0 0.0
    %1049 = vmatpush1.msra.mxu0 0.0
    %1050 = vmatprep.subr.mxu0 0.0
    %1051 = vmatpush1.msra.mxu0 0.0
    %1052 = vmatprep.subr.mxu0 0.0
    %1053 = vmatpush1.msra.mxu0 0.0
    %1054 = vmatprep.subr.mxu0 0.0
    %1055 = vmatpush1.msra.mxu0 0.0
    %1056 = vmatprep.mubr.f32.mxu0 0.0
    %1057 = vmatmul.mubr.f32.gmra.mrb[0].mxu0 %v542
    %v1058 = vpop.f32.mrb[0].mxu0
    %v1059 = vadd.f32 0.0, %v1058
    %v1060 = vpop.f32.mrb[0].mxu0
    %1061 = vdwg.mxu0
    %v1062 = vld [vmem:[%s15] sm:$0x1]
    %v1064 = vlaneseq
    %v1065 = vshrl.u32 %v1064, 7
    %v1066 = vsub.s32 0, %v1065
    %v1067 = vrot.slane %v1062, %v1066
    %v1069 = vadd.f32 %v975, %v1067
    %v1070 = vmul.f32 %v1059, 2.0
    %v1071 = vsub.f32 %v1069, %v1070
    %v1072 = vmax.f32 %v1071, 0.0
    %v1073 = vadd.f32 %v1072, 1.0
    %v1074 = vrcp.pop %v1073
    %1075 = vadd.xlane.f32.xlu0 %v1074
    %v1076 = vpop.xlane.xlu0 %1075
    %v1077 = vrcp.pop %v1076
    %v1078 = vmul.f32 %v1074, %v1077
    %1079 = vst [vmem:[#allocation18] sm:$0xff] %v1078
    // Predicated region
    $region102: #{tpu_custom_call.1} parent=1 // pred_check
      _
    $region103: #{tpu_custom_call.1} parent=1 // pred_check_branch
      %1081 = sbr.rel (0) target = $region105
    $region104: #{tpu_custom_call.1} parent=1 // pred_region
      %s1083 = ssub.s32 128, 128
      %1084 = vsyncadd [#allocation4], %s1083
      %s1086 = sshll.u32 [#allocation17], 4
      %s1087 = int_to_ptr.vmem [resolvable:$true] %s1086
      %1089 = dma.vmem_to_hbm [thread:$0]  %s1087, 128, %s16, [#allocation4]
    $region105: #{tpu_custom_call.1} parent=1 // pred_fallthru
      _
    // Predicated region
    $region106: #{tpu_custom_call.1} parent=1 // pred_check
      _
    $region107: #{tpu_custom_call.1} parent=1 // pred_check_branch
      %1091 = sbr.rel (0) target = $region109
    $region108: #{tpu_custom_call.1} parent=1 // pred_region
      %s1093 = ssub.s32 128, 128
      %1094 = vsyncadd [#allocation19], %s1093
      %s1096 = sshll.u32 [#allocation18], 4
      %s1097 = int_to_ptr.vmem [resolvable:$true] %s1096
      %1099 = dma.vmem_to_hbm [thread:$0]  %s1097, 128, %s17, [#allocation19]
    $region109: #{tpu_custom_call.1} parent=1 // pred_fallthru
      _
    // Predicated region
    $region110: #{tpu_custom_call.1} parent=1 // pred_check
      _
    $region111: #{tpu_custom_call.1} parent=1 // pred_check_branch
      %1101 = sbr.rel (0) target = $region113
    $region112: #{tpu_custom_call.1} parent=1 // pred_region
      %s1103 = ssub.s32 128, 128
      %1104 = vsyncadd [#allocation19], %s1103
      %s1106 = sshll.u32 [#allocation20], 4
      %s1107 = int_to_ptr.vmem [resolvable:$true] %s1106
      %1109 = dma.vmem_to_hbm [thread:$0]  %s1107, 128, %s18, [#allocation19]
    $region113: #{tpu_custom_call.1} parent=1 // pred_fallthru
      _
    // Predicated region
    $region114: #{tpu_custom_call.1} parent=1 // pred_check
      _
    $region115: #{tpu_custom_call.1} parent=1 // pred_check_branch
      %1111 = sbr.rel (0) target = $region117
    $region116: #{tpu_custom_call.1} parent=1 // pred_region
      %s1113 = ssub.s32 128, 128
      %1114 = vsyncadd [#allocation22], %s1113
      %s1116 = sshll.u32 [#allocation21], 4
      %s1117 = int_to_ptr.vmem [resolvable:$true] %s1116
      %1119 = dma.vmem_to_hbm [thread:$0]  %s1117, 128, %s19, [#allocation22]
    $region117: #{tpu_custom_call.1} parent=1 // pred_fallthru
      _
    // Predicated region
    $region118: #{tpu_custom_call.1} parent=1 // pred_check
      _
    $region119: #{tpu_custom_call.1} parent=1 // pred_check_branch
      %1121 = sbr.rel (0) target = $region121
    $region120: #{tpu_custom_call.1} parent=1 // pred_region
      %s1123 = ssub.s32 128, 128
      %1124 = vsyncadd [#allocation22], %s1123
      %s1126 = sshll.u32 [#allocation23], 4
      %s1127 = int_to_ptr.vmem [resolvable:$true] %s1126
      %1129 = dma.vmem_to_hbm [thread:$0]  %s1127, 128, %s20, [#allocation22]
    $region121: #{tpu_custom_call.1} parent=1 // pred_fallthru
      _
    // Predicated region
    $region122: #{tpu_custom_call.1} parent=1 // pred_check
      _
    $region123: #{tpu_custom_call.1} parent=1 // pred_check_branch
      %1131 = sbr.rel (0) target = $region125
    $region124: #{tpu_custom_call.1} parent=1 // pred_region
      %1132 = dma.done [#allocation4], 128
    $region125: #{tpu_custom_call.1} parent=1 // pred_fallthru
      _
    // Predicated region
    $region126: #{tpu_custom_call.1} parent=1 // pred_check
      _
    $region127: #{tpu_custom_call.1} parent=1 // pred_check_branch
      %1134 = sbr.rel (0) target = $region129
    $region128: #{tpu_custom_call.1} parent=1 // pred_region
      %1135 = dma.done [#allocation19], 128
    $region129: #{tpu_custom_call.1} parent=1 // pred_fallthru
      _
    // Predicated region
    $region130: #{tpu_custom_call.1} parent=1 // pred_check
      _
    $region131: #{tpu_custom_call.1} parent=1 // pred_check_branch
      %1137 = sbr.rel (0) target = $region133
    $region132: #{tpu_custom_call.1} parent=1 // pred_region
      %1138 = dma.done [#allocation19], 128
    $region133: #{tpu_custom_call.1} parent=1 // pred_fallthru
      _
    // Predicated region
    $region134: #{tpu_custom_call.1} parent=1 // pred_check
      _
    $region135: #{tpu_custom_call.1} parent=1 // pred_check_branch
      %1140 = sbr.rel (0) target = $region137
    $region136: #{tpu_custom_call.1} parent=1 // pred_region
      %1141 = dma.done [#allocation22], 128
    $region137: #{tpu_custom_call.1} parent=1 // pred_fallthru
      _
    // Predicated region
    $region138: #{tpu_custom_call.1} parent=1 // pred_check
      _
    $region139: #{tpu_custom_call.1} parent=1 // pred_check_branch
      %1143 = sbr.rel (0) target = $region141
    $region140: #{tpu_custom_call.1} parent=1 // pred_region
      %1144 = dma.done [#allocation22], 128
    $region141: #{tpu_custom_call.1} parent=1 // pred_fallthru
      _
    %1145 = vsyncpa [#allocation3], 1
    %1146 = vsyncpa [#allocation6], 1
    %1147 = vsyncpa [#allocation9], 1
    %1148 = vsyncpa [#allocation12], 1
    %1149 = vsyncpa [#allocation15], 1
    %1150 = vsyncpa [#allocation4], 1
    %1151 = vsyncpa [#allocation19], 1
    %1152 = vsyncpa [#allocation22], 1

</llo_original>
